<compile_context>
chip_gen: v7x
topology: tpu7x:2x2x1
jax: 0.10.0
libtpu: 0.0.40
codegen_flags: <defaults>
</compile_context>

<pallas_src>
import functools

import jax
import jax.numpy as jnp
from jax import lax
from jax.experimental import pallas as pl
from jax.experimental.pallas import tpu as pltpu


def _round_up(x, m):
    return ((x + m - 1) // m) * m


def _textrnn_kernel(T, BB, H,
                    x_ref, wih_ref, whh_ref, b_ref,
                    fc1w_ref, fc1b_ref, fc2w_ref, fc2b_ref,
                    out_ref, xw_ref):
    # x_ref:   (T*BB, E)   bf16, time-major rows for this batch block
    # wih_ref: (E, 4H) bf16   whh_ref: (H, 4H) bf16   b_ref: (1, 4H) f32
    # fc1w_ref:(H, 128) bf16  fc1b_ref:(1, 128) f32
    # fc2w_ref:(128, Cp) f32  fc2b_ref:(1, Cp) f32   (class dim lane-padded)
    # out_ref: (BB, Cp) f32
    # xw_ref:  (T*BB, 4H) f32 scratch holding the hoisted input projection.

    # ---- input projection, hoisted out of the recurrence (one bf16 matmul) ----
    xw_ref[...] = (jnp.dot(x_ref[...], wih_ref[...],
                           preferred_element_type=jnp.float32)
                   + b_ref[...])

    # Loop-invariant recurrent weight (bf16), loaded once before the loop.
    whh = whh_ref[...]                                     # (H, 4H)

    h0 = jnp.zeros((BB, H), jnp.float32)
    c0 = jnp.zeros((BB, H), jnp.float32)

    def step(t, carry):
        h, c = carry
        start = pl.multiple_of(t * BB, BB)                 # sublane-aligned
        xt = xw_ref[pl.ds(start, BB), :]                   # (BB, 4H) f32
        # Single-pass bf16 MXU op on the serial chain; f32 accumulate.
        gates = xt + jnp.dot(h.astype(jnp.bfloat16), whh,
                             preferred_element_type=jnp.float32)
        # Full-vreg transcendentals (EUP slot), then static lane slices.
        sig = jax.nn.sigmoid(gates)                        # (BB, 4H)
        th = jnp.tanh(gates)                               # (BB, 4H)
        # PyTorch LSTM gate order: i, f, g, o.  i_g and the carried c/h live
        # at lane offset 0, so only f/g/o need lane realignment (3 rotates —
        # the minimum for this op structure, see header comment).
        i_g = sig[:, 0 * H:1 * H]
        f_g = sig[:, 1 * H:2 * H]
        g_g = th[:, 2 * H:3 * H]
        o_g = sig[:, 3 * H:4 * H]
        c_new = f_g * c + i_g * g_g
        h_new = o_g * jnp.tanh(c_new)
        return h_new, c_new

    # Static trip count -> fully unrolled: state stays register-resident and
    # the scheduler can overlap step t+1's MXU push with step t's gate math.
    h_last, _ = lax.fori_loop(0, T, step, (h0, c0), unroll=True)

    # ---- fc1 + log_softmax (dim=1), bf16 matmul / f32 math ----
    z1 = jnp.dot(h_last.astype(jnp.bfloat16), fc1w_ref[...],
                 preferred_element_type=jnp.float32) + fc1b_ref[...]
    z1 = z1 - jnp.max(z1, axis=-1, keepdims=True)
    ls1 = z1 - jnp.log(jnp.sum(jnp.exp(z1), axis=-1, keepdims=True))

    # ---- fc2 + log_softmax (dim=1), kept f32 (one-shot epilogue; keeps the
    # -1e30 pad sentinel and the ~|5| log-prob magnitudes accurate) ----
    z2 = jnp.dot(ls1, fc2w_ref[...],
                 preferred_element_type=jnp.float32) + fc2b_ref[...]
    z2 = z2 - jnp.max(z2, axis=-1, keepdims=True)
    ls2 = z2 - jnp.log(jnp.sum(jnp.exp(z2), axis=-1, keepdims=True))

    out_ref[...] = ls2                                     # lane-dense store


def prepare_params(params):
    """One-time (outside the per-call path) weight casts and class padding."""
    C = params["fc2_w"].shape[1]
    C_pad = max(128, _round_up(C, 128))
    # Padded class columns: weight 0, bias -1e30 (kept in f32!) so exp()
    # underflows to exactly 0 in the log_softmax denominator.
    fc2_w = jnp.pad(params["fc2_w"], ((0, 0), (0, C_pad - C)))
    fc2_b = jnp.pad(params["fc2_b"], ((0, 0), (0, C_pad - C)),
                    constant_values=-1e30)
    return dict(
        embed_bf16=params["embed"].astype(jnp.bfloat16),
        w_ih=params["w_ih"].astype(jnp.bfloat16),
        w_hh=params["w_hh"].astype(jnp.bfloat16),
        bias=params["bias"].astype(jnp.float32),
        fc1_w=params["fc1_w"].astype(jnp.bfloat16),
        fc1_b=params["fc1_b"].astype(jnp.float32),
        fc2_w=fc2_w.astype(jnp.float32),
        fc2_b=fc2_b.astype(jnp.float32),
    )


@functools.partial(jax.jit, static_argnames=("class_num",))
def textrnn_forward(x_idx, kp, *, class_num):
    """x_idx: (B0, T0) int token ids.  Returns (B, class_num) log-probs,
    where B = total_tokens // 20 (matches x.view(-1, 20, E))."""
    T = 20
    embed = kp["embed_bf16"]
    E = embed.shape[1]
    H = kp["w_hh"].shape[0]
    C_pad = kp["fc2_w"].shape[1]

    assert x_idx.size % T == 0, "view(-1, 20, E) needs total tokens % 20 == 0"
    ids = x_idx.astype(jnp.int32).reshape(-1, T)           # (B, T)
    B = ids.shape[0]

    # Per-generation batch block size (v5e/v6e: 128 MiB VMEM -> bigger blocks;
    # v7x: 64 MiB).  ~12.5 KB of VMEM per batch row (xw scratch dominates).
    try:
        vmem_cap = pltpu.get_tpu_info().vmem_capacity_bytes
    except Exception:  # pragma: no cover - conservative fallback
        vmem_cap = 64 * 1024 * 1024
    big_vmem = vmem_cap >= 96 * 1024 * 1024
    bb_cap = 2048 if big_vmem else 1024
    BB = min(bb_cap, _round_up(B, 16))                     # 16: bf16 sublanes
    nb = pl.cdiv(B, BB)
    B_tot = nb * BB

    # All layout work happens on the tiny int32 ids and fuses into the gather:
    # pad rows with padding_idx=1 (zero embedding row), reorder so ONE gather
    # from the bf16 table yields block-major, time-major (nb*T*BB, E) rows.
    ids = jnp.pad(ids, ((0, B_tot - B), (0, 0)), constant_values=1)
    ids_blk = ids.reshape(nb, BB, T).transpose(0, 2, 1).reshape(-1)
    x_blocks = embed[ids_blk]                              # (nb*T*BB, E) bf16

    kernel = functools.partial(_textrnn_kernel, T, BB, H)

    def full_spec(arr):
        nd = arr.ndim
        return pl.BlockSpec(arr.shape, lambda b, _nd=nd: (0,) * _nd)

    out = pl.pallas_call(
        kernel,
        grid=(nb,),
        out_shape=jax.ShapeDtypeStruct((B_tot, C_pad), jnp.float32),
        in_specs=[
            pl.BlockSpec((T * BB, E), lambda b: (b, 0)),   # per-block tokens
            full_spec(kp["w_ih"]), full_spec(kp["w_hh"]), full_spec(kp["bias"]),
            full_spec(kp["fc1_w"]), full_spec(kp["fc1_b"]),
            full_spec(kp["fc2_w"]), full_spec(kp["fc2_b"]),
        ],
        out_specs=pl.BlockSpec((BB, C_pad), lambda b: (b, 0)),
        scratch_shapes=[
            pltpu.VMEM((T * BB, 4 * H), jnp.float32),      # hoisted x@W_ih + b
        ],
        compiler_params=pltpu.CompilerParams(
            dimension_semantics=("parallel",),             # batch blocks split
            vmem_limit_bytes=(96 if big_vmem else 40) * 1024 * 1024,
        ),
    )(x_blocks, kp["w_ih"], kp["w_hh"], kp["bias"],
      kp["fc1_w"], kp["fc1_b"], kp["fc2_w"], kp["fc2_b"])

    return out[:B, :class_num]


def textrnn_reference(x_idx, params):
    """Pure-JAX f32 reference mirroring the PyTorch forward."""
    emb = params["embed"][x_idx]
    emb = emb.reshape(-1, 20, params["embed"].shape[1])
    B = emb.shape[0]
    H = params["w_hh"].shape[0]

    def cell(carry, x_t):
        h, c = carry
        gates = x_t @ params["w_ih"] + h @ params["w_hh"] + params["bias"][0]
        i_g = jax.nn.sigmoid(gates[:, 0 * H:1 * H])
        f_g = jax.nn.sigmoid(gates[:, 1 * H:2 * H])
        g_g = jnp.tanh(gates[:, 2 * H:3 * H])
        o_g = jax.nn.sigmoid(gates[:, 3 * H:4 * H])
        c = f_g * c + i_g * g_g
        h = o_g * jnp.tanh(c)
        return (h, c), h

    h0 = jnp.zeros((B, H), jnp.float32)
    (h, _), _ = lax.scan(cell, (h0, h0), jnp.transpose(emb, (1, 0, 2)))
    z1 = h @ params["fc1_w"] + params["fc1_b"][0]
    ls1 = jax.nn.log_softmax(z1, axis=1)
    z2 = ls1 @ params["fc2_w"] + params["fc2_b"][0]
    return jax.nn.log_softmax(z2, axis=1)


def init_params(key, vocab_size, embed_dim, hidden_size, class_num):
    ks = jax.random.split(key, 8)
    scale = 0.1
    embed = scale * jax.random.normal(ks[0], (vocab_size, embed_dim), jnp.float32)
    embed = embed.at[1].set(0.0)  # padding_idx=1 row is zero

    # LSTM weights stored transposed (in_dim, 4H), PyTorch gate order i,f,g,o.
    w_ih = scale * jax.random.normal(ks[1], (embed_dim, 4 * hidden_size), jnp.float32)
    w_hh = scale * jax.random.normal(ks[2], (hidden_size, 4 * hidden_size), jnp.float32)
    bias = scale * jax.random.normal(ks[3], (1, 4 * hidden_size), jnp.float32)  # b_ih+b_hh

    fc1_w = scale * jax.random.normal(ks[4], (hidden_size, 128), jnp.float32)
    fc1_b = scale * jax.random.normal(ks[5], (1, 128), jnp.float32)
    fc2_w = scale * jax.random.normal(ks[6], (128, class_num), jnp.float32)
    fc2_b = scale * jax.random.normal(ks[7], (1, class_num), jnp.float32)

    return dict(embed=embed, w_ih=w_ih, w_hh=w_hh, bias=bias,
                fc1_w=fc1_w, fc1_b=fc1_b, fc2_w=fc2_w, fc2_b=fc2_b)


if __name__ == "__main__":
    key = jax.random.PRNGKey(0)

    vocab_size = 50
    embed_dim = 16
    hidden_size = 32
    class_num = 4
    batch = 2
    seq_len = 20   # forward hard-codes view(-1, 20, embed_dim)

    pkey, xkey = jax.random.split(key)
    params = init_params(pkey, vocab_size, embed_dim, hidden_size, class_num)
    kparams = prepare_params(params)   # one-time: casts + class padding
    x_idx = jax.random.randint(xkey, (batch, seq_len), 0, vocab_size, jnp.int32)

    out = jax.block_until_ready(textrnn_forward(x_idx, kparams, class_num=class_num))
    ref = jax.block_until_ready(textrnn_reference(x_idx, params))

    assert out.shape == (batch, class_num)
    # bf16 MXU operands on the recurrence/projection/fc1 -> relaxed tolerance.
    assert jnp.allclose(out, ref, atol=1e-2, rtol=1e-2), (out, ref)

    print("KERNEL_OK")
</pallas_src>

<mosaic_0001>
module attributes {stable_mosaic.version = 11 : i64} {
  func.func @_textrnn_kernel(%arg0: i32, %arg1: memref<320x16xbf16, #tpu.memory_space<vmem>>, %arg2: memref<16x128xbf16, #tpu.memory_space<vmem>>, %arg3: memref<32x128xbf16, #tpu.memory_space<vmem>>, %arg4: memref<1x128xf32, #tpu.memory_space<vmem>>, %arg5: memref<32x128xbf16, #tpu.memory_space<vmem>>, %arg6: memref<1x128xf32, #tpu.memory_space<vmem>>, %arg7: memref<128x128xf32, #tpu.memory_space<vmem>>, %arg8: memref<1x128xf32, #tpu.memory_space<vmem>>, %arg9: memref<16x128xf32, #tpu.memory_space<vmem>>, %arg10: memref<320x128xf32, #tpu.memory_space<vmem>>) attributes {dimension_semantics = [#tpu.dimension_semantics<parallel>], iteration_bounds = array<i64: 1>, scalar_prefetch = 0 : i64, scratch_operands = 1 : i64, tpu.core_type = #tpu.core_type<tc>, window_params = [{transform_indices = @transform_0, window_bounds = array<i64: 320, 16>}, {pipeline_mode = #tpu.pipeline_mode<synchronous>, transform_indices = @transform_1, window_bounds = array<i64: 16, 128>}, {pipeline_mode = #tpu.pipeline_mode<synchronous>, transform_indices = @transform_2, window_bounds = array<i64: 32, 128>}, {pipeline_mode = #tpu.pipeline_mode<synchronous>, transform_indices = @transform_3, window_bounds = array<i64: 1, 128>}, {pipeline_mode = #tpu.pipeline_mode<synchronous>, transform_indices = @transform_4, window_bounds = array<i64: 32, 128>}, {pipeline_mode = #tpu.pipeline_mode<synchronous>, transform_indices = @transform_5, window_bounds = array<i64: 1, 128>}, {pipeline_mode = #tpu.pipeline_mode<synchronous>, transform_indices = @transform_6, window_bounds = array<i64: 128, 128>}, {pipeline_mode = #tpu.pipeline_mode<synchronous>, transform_indices = @transform_7, window_bounds = array<i64: 1, 128>}, {transform_indices = @transform_8, window_bounds = array<i64: 16, 128>}]} {
    %c0 = arith.constant 0 : index
    %c0_0 = arith.constant 0 : index
    %0 = vector.load %arg1[%c0, %c0_0] : memref<320x16xbf16, #tpu.memory_space<vmem>>, vector<320x16xbf16>
    %c0_1 = arith.constant 0 : index
    %c0_2 = arith.constant 0 : index
    %1 = vector.load %arg2[%c0_1, %c0_2] : memref<16x128xbf16, #tpu.memory_space<vmem>>, vector<16x128xbf16>
    %cst = arith.constant dense<0.000000e+00> : vector<320x128xf32>
    %2 = tpu.matmul %0, %1, %cst {dimension_numbers = #tpu.dot_dimension_numbers<[1], [0], [0], [1], [0, 0, 1, 1], [], []>} : vector<320x16xbf16>, vector<16x128xbf16>, vector<320x128xf32> -> vector<320x128xf32>
    %c0_3 = arith.constant 0 : index
    %c0_4 = arith.constant 0 : index
    %3 = vector.load %arg4[%c0_3, %c0_4] : memref<1x128xf32, #tpu.memory_space<vmem>>, vector<1x128xf32>
    %4 = vector.broadcast %3 : vector<1x128xf32> to vector<320x128xf32>
    %5 = arith.addf %2, %4 : vector<320x128xf32>
    %c0_5 = arith.constant 0 : index
    %c0_6 = arith.constant 0 : index
    %6 = vector.load %arg10[%c0_5, %c0_6] : memref<320x128xf32, #tpu.memory_space<vmem>>, vector<320x128xf32>
    tpu.vector_store %arg10[%c0_5, %c0_6], %5 {strides = array<i32>} : memref<320x128xf32, #tpu.memory_space<vmem>>, vector<320x128xf32>,
    %c0_7 = arith.constant 0 : index
    %c0_8 = arith.constant 0 : index
    %7 = vector.load %arg3[%c0_7, %c0_8] : memref<32x128xbf16, #tpu.memory_space<vmem>>, vector<32x128xbf16>
    %cst_9 = arith.constant 0.000000e+00 : f32
    %8 = vector.broadcast %cst_9 : f32 to vector<16x32xf32>
    %cst_10 = arith.constant 0.000000e+00 : f32
    %9 = vector.broadcast %cst_10 : f32 to vector<16x32xf32>
    %c0_i32 = arith.constant 0 : i32
    %c16_i32 = arith.constant 16 : i32
    %10 = arith.muli %c0_i32, %c16_i32 : i32
    %11 = tpu.assume_multiple %10, 16 : i32
    %12 = arith.index_cast %11 : i32 to index
    %c0_11 = arith.constant 0 : index
    %13 = vector.load %arg10[%12, %c0_11] : memref<320x128xf32, #tpu.memory_space<vmem>>, vector<16x128xf32>
    %14 = arith.truncf %8 : vector<16x32xf32> to vector<16x32xbf16>
    %cst_12 = arith.constant dense<0.000000e+00> : vector<16x128xf32>
    %15 = tpu.matmul %14, %7, %cst_12 {dimension_numbers = #tpu.dot_dimension_numbers<[1], [0], [0], [1], [0, 0, 1, 1], [], []>} : vector<16x32xbf16>, vector<32x128xbf16>, vector<16x128xf32> -> vector<16x128xf32>
    %16 = arith.addf %13, %15 : vector<16x128xf32>
    %17 = arith.negf %16 : vector<16x128xf32>
    %18 = math.exp %17 : vector<16x128xf32>
    %cst_13 = arith.constant 1.000000e+00 : f32
    %19 = vector.broadcast %cst_13 : f32 to vector<16x128xf32>
    %20 = arith.addf %19, %18 : vector<16x128xf32>
    %21 = arith.divf %19, %20 : vector<16x128xf32>
    %22 = math.tanh %16 : vector<16x128xf32>
    %23 = vector.extract_strided_slice %21 {offsets = [0, 0], sizes = [16, 32], strides = [1, 1]} : vector<16x128xf32> to vector<16x32xf32>
    %24 = vector.extract_strided_slice %21 {offsets = [0, 32], sizes = [16, 32], strides = [1, 1]} : vector<16x128xf32> to vector<16x32xf32>
    %25 = vector.extract_strided_slice %22 {offsets = [0, 64], sizes = [16, 32], strides = [1, 1]} : vector<16x128xf32> to vector<16x32xf32>
    %26 = vector.extract_strided_slice %21 {offsets = [0, 96], sizes = [16, 32], strides = [1, 1]} : vector<16x128xf32> to vector<16x32xf32>
    %27 = arith.mulf %24, %9 : vector<16x32xf32>
    %28 = arith.mulf %23, %25 : vector<16x32xf32>
    %29 = arith.addf %27, %28 : vector<16x32xf32>
    %30 = math.tanh %29 : vector<16x32xf32>
    %31 = arith.mulf %26, %30 : vector<16x32xf32>
    %c1_i32 = arith.constant 1 : i32
    %c16_i32_14 = arith.constant 16 : i32
    %32 = arith.muli %c1_i32, %c16_i32_14 : i32
    %33 = tpu.assume_multiple %32, 16 : i32
    %34 = arith.index_cast %33 : i32 to index
    %c0_15 = arith.constant 0 : index
    %35 = vector.load %arg10[%34, %c0_15] : memref<320x128xf32, #tpu.memory_space<vmem>>, vector<16x128xf32>
    %36 = arith.truncf %31 : vector<16x32xf32> to vector<16x32xbf16>
    %cst_16 = arith.constant dense<0.000000e+00> : vector<16x128xf32>
    %37 = tpu.matmul %36, %7, %cst_16 {dimension_numbers = #tpu.dot_dimension_numbers<[1], [0], [0], [1], [0, 0, 1, 1], [], []>} : vector<16x32xbf16>, vector<32x128xbf16>, vector<16x128xf32> -> vector<16x128xf32>
    %38 = arith.addf %35, %37 : vector<16x128xf32>
    %39 = arith.negf %38 : vector<16x128xf32>
    %40 = math.exp %39 : vector<16x128xf32>
    %cst_17 = arith.constant 1.000000e+00 : f32
    %41 = vector.broadcast %cst_17 : f32 to vector<16x128xf32>
    %42 = arith.addf %41, %40 : vector<16x128xf32>
    %43 = arith.divf %41, %42 : vector<16x128xf32>
    %44 = math.tanh %38 : vector<16x128xf32>
    %45 = vector.extract_strided_slice %43 {offsets = [0, 0], sizes = [16, 32], strides = [1, 1]} : vector<16x128xf32> to vector<16x32xf32>
    %46 = vector.extract_strided_slice %43 {offsets = [0, 32], sizes = [16, 32], strides = [1, 1]} : vector<16x128xf32> to vector<16x32xf32>
    %47 = vector.extract_strided_slice %44 {offsets = [0, 64], sizes = [16, 32], strides = [1, 1]} : vector<16x128xf32> to vector<16x32xf32>
    %48 = vector.extract_strided_slice %43 {offsets = [0, 96], sizes = [16, 32], strides = [1, 1]} : vector<16x128xf32> to vector<16x32xf32>
    %49 = arith.mulf %46, %29 : vector<16x32xf32>
    %50 = arith.mulf %45, %47 : vector<16x32xf32>
    %51 = arith.addf %49, %50 : vector<16x32xf32>
    %52 = math.tanh %51 : vector<16x32xf32>
    %53 = arith.mulf %48, %52 : vector<16x32xf32>
    %c2_i32 = arith.constant 2 : i32
    %c16_i32_18 = arith.constant 16 : i32
    %54 = arith.muli %c2_i32, %c16_i32_18 : i32
    %55 = tpu.assume_multiple %54, 16 : i32
    %56 = arith.index_cast %55 : i32 to index
    %c0_19 = arith.constant 0 : index
    %57 = vector.load %arg10[%56, %c0_19] : memref<320x128xf32, #tpu.memory_space<vmem>>, vector<16x128xf32>
    %58 = arith.truncf %53 : vector<16x32xf32> to vector<16x32xbf16>
    %cst_20 = arith.constant dense<0.000000e+00> : vector<16x128xf32>
    %59 = tpu.matmul %58, %7, %cst_20 {dimension_numbers = #tpu.dot_dimension_numbers<[1], [0], [0], [1], [0, 0, 1, 1], [], []>} : vector<16x32xbf16>, vector<32x128xbf16>, vector<16x128xf32> -> vector<16x128xf32>
    %60 = arith.addf %57, %59 : vector<16x128xf32>
    %61 = arith.negf %60 : vector<16x128xf32>
    %62 = math.exp %61 : vector<16x128xf32>
    %cst_21 = arith.constant 1.000000e+00 : f32
    %63 = vector.broadcast %cst_21 : f32 to vector<16x128xf32>
    %64 = arith.addf %63, %62 : vector<16x128xf32>
    %65 = arith.divf %63, %64 : vector<16x128xf32>
    %66 = math.tanh %60 : vector<16x128xf32>
    %67 = vector.extract_strided_slice %65 {offsets = [0, 0], sizes = [16, 32], strides = [1, 1]} : vector<16x128xf32> to vector<16x32xf32>
    %68 = vector.extract_strided_slice %65 {offsets = [0, 32], sizes = [16, 32], strides = [1, 1]} : vector<16x128xf32> to vector<16x32xf32>
    %69 = vector.extract_strided_slice %66 {offsets = [0, 64], sizes = [16, 32], strides = [1, 1]} : vector<16x128xf32> to vector<16x32xf32>
    %70 = vector.extract_strided_slice %65 {offsets = [0, 96], sizes = [16, 32], strides = [1, 1]} : vector<16x128xf32> to vector<16x32xf32>
    %71 = arith.mulf %68, %51 : vector<16x32xf32>
    %72 = arith.mulf %67, %69 : vector<16x32xf32>
    %73 = arith.addf %71, %72 : vector<16x32xf32>
    %74 = math.tanh %73 : vector<16x32xf32>
    %75 = arith.mulf %70, %74 : vector<16x32xf32>
    %c3_i32 = arith.constant 3 : i32
    %c16_i32_22 = arith.constant 16 : i32
    %76 = arith.muli %c3_i32, %c16_i32_22 : i32
    %77 = tpu.assume_multiple %76, 16 : i32
    %78 = arith.index_cast %77 : i32 to index
    %c0_23 = arith.constant 0 : index
    %79 = vector.load %arg10[%78, %c0_23] : memref<320x128xf32, #tpu.memory_space<vmem>>, vector<16x128xf32>
    %80 = arith.truncf %75 : vector<16x32xf32> to vector<16x32xbf16>
    %cst_24 = arith.constant dense<0.000000e+00> : vector<16x128xf32>
    %81 = tpu.matmul %80, %7, %cst_24 {dimension_numbers = #tpu.dot_dimension_numbers<[1], [0], [0], [1], [0, 0, 1, 1], [], []>} : vector<16x32xbf16>, vector<32x128xbf16>, vector<16x128xf32> -> vector<16x128xf32>
    %82 = arith.addf %79, %81 : vector<16x128xf32>
    %83 = arith.negf %82 : vector<16x128xf32>
    %84 = math.exp %83 : vector<16x128xf32>
    %cst_25 = arith.constant 1.000000e+00 : f32
    %85 = vector.broadcast %cst_25 : f32 to vector<16x128xf32>
    %86 = arith.addf %85, %84 : vector<16x128xf32>
    %87 = arith.divf %85, %86 : vector<16x128xf32>
    %88 = math.tanh %82 : vector<16x128xf32>
    %89 = vector.extract_strided_slice %87 {offsets = [0, 0], sizes = [16, 32], strides = [1, 1]} : vector<16x128xf32> to vector<16x32xf32>
    %90 = vector.extract_strided_slice %87 {offsets = [0, 32], sizes = [16, 32], strides = [1, 1]} : vector<16x128xf32> to vector<16x32xf32>
    %91 = vector.extract_strided_slice %88 {offsets = [0, 64], sizes = [16, 32], strides = [1, 1]} : vector<16x128xf32> to vector<16x32xf32>
    %92 = vector.extract_strided_slice %87 {offsets = [0, 96], sizes = [16, 32], strides = [1, 1]} : vector<16x128xf32> to vector<16x32xf32>
    %93 = arith.mulf %90, %73 : vector<16x32xf32>
    %94 = arith.mulf %89, %91 : vector<16x32xf32>
    %95 = arith.addf %93, %94 : vector<16x32xf32>
    %96 = math.tanh %95 : vector<16x32xf32>
    %97 = arith.mulf %92, %96 : vector<16x32xf32>
    %c4_i32 = arith.constant 4 : i32
    %c16_i32_26 = arith.constant 16 : i32
    %98 = arith.muli %c4_i32, %c16_i32_26 : i32
    %99 = tpu.assume_multiple %98, 16 : i32
    %100 = arith.index_cast %99 : i32 to index
    %c0_27 = arith.constant 0 : index
    %101 = vector.load %arg10[%100, %c0_27] : memref<320x128xf32, #tpu.memory_space<vmem>>, vector<16x128xf32>
    %102 = arith.truncf %97 : vector<16x32xf32> to vector<16x32xbf16>
    %cst_28 = arith.constant dense<0.000000e+00> : vector<16x128xf32>
    %103 = tpu.matmul %102, %7, %cst_28 {dimension_numbers = #tpu.dot_dimension_numbers<[1], [0], [0], [1], [0, 0, 1, 1], [], []>} : vector<16x32xbf16>, vector<32x128xbf16>, vector<16x128xf32> -> vector<16x128xf32>
    %104 = arith.addf %101, %103 : vector<16x128xf32>
    %105 = arith.negf %104 : vector<16x128xf32>
    %106 = math.exp %105 : vector<16x128xf32>
    %cst_29 = arith.constant 1.000000e+00 : f32
    %107 = vector.broadcast %cst_29 : f32 to vector<16x128xf32>
    %108 = arith.addf %107, %106 : vector<16x128xf32>
    %109 = arith.divf %107, %108 : vector<16x128xf32>
    %110 = math.tanh %104 : vector<16x128xf32>
    %111 = vector.extract_strided_slice %109 {offsets = [0, 0], sizes = [16, 32], strides = [1, 1]} : vector<16x128xf32> to vector<16x32xf32>
    %112 = vector.extract_strided_slice %109 {offsets = [0, 32], sizes = [16, 32], strides = [1, 1]} : vector<16x128xf32> to vector<16x32xf32>
    %113 = vector.extract_strided_slice %110 {offsets = [0, 64], sizes = [16, 32], strides = [1, 1]} : vector<16x128xf32> to vector<16x32xf32>
    %114 = vector.extract_strided_slice %109 {offsets = [0, 96], sizes = [16, 32], strides = [1, 1]} : vector<16x128xf32> to vector<16x32xf32>
    %115 = arith.mulf %112, %95 : vector<16x32xf32>
    %116 = arith.mulf %111, %113 : vector<16x32xf32>
    %117 = arith.addf %115, %116 : vector<16x32xf32>
    %118 = math.tanh %117 : vector<16x32xf32>
    %119 = arith.mulf %114, %118 : vector<16x32xf32>
    %c5_i32 = arith.constant 5 : i32
    %c16_i32_30 = arith.constant 16 : i32
    %120 = arith.muli %c5_i32, %c16_i32_30 : i32
    %121 = tpu.assume_multiple %120, 16 : i32
    %122 = arith.index_cast %121 : i32 to index
    %c0_31 = arith.constant 0 : index
    %123 = vector.load %arg10[%122, %c0_31] : memref<320x128xf32, #tpu.memory_space<vmem>>, vector<16x128xf32>
    %124 = arith.truncf %119 : vector<16x32xf32> to vector<16x32xbf16>
    %cst_32 = arith.constant dense<0.000000e+00> : vector<16x128xf32>
    %125 = tpu.matmul %124, %7, %cst_32 {dimension_numbers = #tpu.dot_dimension_numbers<[1], [0], [0], [1], [0, 0, 1, 1], [], []>} : vector<16x32xbf16>, vector<32x128xbf16>, vector<16x128xf32> -> vector<16x128xf32>
    %126 = arith.addf %123, %125 : vector<16x128xf32>
    %127 = arith.negf %126 : vector<16x128xf32>
    %128 = math.exp %127 : vector<16x128xf32>
    %cst_33 = arith.constant 1.000000e+00 : f32
    %129 = vector.broadcast %cst_33 : f32 to vector<16x128xf32>
    %130 = arith.addf %129, %128 : vector<16x128xf32>
    %131 = arith.divf %129, %130 : vector<16x128xf32>
    %132 = math.tanh %126 : vector<16x128xf32>
    %133 = vector.extract_strided_slice %131 {offsets = [0, 0], sizes = [16, 32], strides = [1, 1]} : vector<16x128xf32> to vector<16x32xf32>
    %134 = vector.extract_strided_slice %131 {offsets = [0, 32], sizes = [16, 32], strides = [1, 1]} : vector<16x128xf32> to vector<16x32xf32>
    %135 = vector.extract_strided_slice %132 {offsets = [0, 64], sizes = [16, 32], strides = [1, 1]} : vector<16x128xf32> to vector<16x32xf32>
    %136 = vector.extract_strided_slice %131 {offsets = [0, 96], sizes = [16, 32], strides = [1, 1]} : vector<16x128xf32> to vector<16x32xf32>
    %137 = arith.mulf %134, %117 : vector<16x32xf32>
    %138 = arith.mulf %133, %135 : vector<16x32xf32>
    %139 = arith.addf %137, %138 : vector<16x32xf32>
    %140 = math.tanh %139 : vector<16x32xf32>
    %141 = arith.mulf %136, %140 : vector<16x32xf32>
    %c6_i32 = arith.constant 6 : i32
    %c16_i32_34 = arith.constant 16 : i32
    %142 = arith.muli %c6_i32, %c16_i32_34 : i32
    %143 = tpu.assume_multiple %142, 16 : i32
    %144 = arith.index_cast %143 : i32 to index
    %c0_35 = arith.constant 0 : index
    %145 = vector.load %arg10[%144, %c0_35] : memref<320x128xf32, #tpu.memory_space<vmem>>, vector<16x128xf32>
    %146 = arith.truncf %141 : vector<16x32xf32> to vector<16x32xbf16>
    %cst_36 = arith.constant dense<0.000000e+00> : vector<16x128xf32>
    %147 = tpu.matmul %146, %7, %cst_36 {dimension_numbers = #tpu.dot_dimension_numbers<[1], [0], [0], [1], [0, 0, 1, 1], [], []>} : vector<16x32xbf16>, vector<32x128xbf16>, vector<16x128xf32> -> vector<16x128xf32>
    %148 = arith.addf %145, %147 : vector<16x128xf32>
    %149 = arith.negf %148 : vector<16x128xf32>
    %150 = math.exp %149 : vector<16x128xf32>
    %cst_37 = arith.constant 1.000000e+00 : f32
    %151 = vector.broadcast %cst_37 : f32 to vector<16x128xf32>
    %152 = arith.addf %151, %150 : vector<16x128xf32>
    %153 = arith.divf %151, %152 : vector<16x128xf32>
    %154 = math.tanh %148 : vector<16x128xf32>
    %155 = vector.extract_strided_slice %153 {offsets = [0, 0], sizes = [16, 32], strides = [1, 1]} : vector<16x128xf32> to vector<16x32xf32>
    %156 = vector.extract_strided_slice %153 {offsets = [0, 32], sizes = [16, 32], strides = [1, 1]} : vector<16x128xf32> to vector<16x32xf32>
    %157 = vector.extract_strided_slice %154 {offsets = [0, 64], sizes = [16, 32], strides = [1, 1]} : vector<16x128xf32> to vector<16x32xf32>
    %158 = vector.extract_strided_slice %153 {offsets = [0, 96], sizes = [16, 32], strides = [1, 1]} : vector<16x128xf32> to vector<16x32xf32>
    %159 = arith.mulf %156, %139 : vector<16x32xf32>
    %160 = arith.mulf %155, %157 : vector<16x32xf32>
    %161 = arith.addf %159, %160 : vector<16x32xf32>
    %162 = math.tanh %161 : vector<16x32xf32>
    %163 = arith.mulf %158, %162 : vector<16x32xf32>
    %c7_i32 = arith.constant 7 : i32
    %c16_i32_38 = arith.constant 16 : i32
    %164 = arith.muli %c7_i32, %c16_i32_38 : i32
    %165 = tpu.assume_multiple %164, 16 : i32
    %166 = arith.index_cast %165 : i32 to index
    %c0_39 = arith.constant 0 : index
    %167 = vector.load %arg10[%166, %c0_39] : memref<320x128xf32, #tpu.memory_space<vmem>>, vector<16x128xf32>
    %168 = arith.truncf %163 : vector<16x32xf32> to vector<16x32xbf16>
    %cst_40 = arith.constant dense<0.000000e+00> : vector<16x128xf32>
    %169 = tpu.matmul %168, %7, %cst_40 {dimension_numbers = #tpu.dot_dimension_numbers<[1], [0], [0], [1], [0, 0, 1, 1], [], []>} : vector<16x32xbf16>, vector<32x128xbf16>, vector<16x128xf32> -> vector<16x128xf32>
    %170 = arith.addf %167, %169 : vector<16x128xf32>
    %171 = arith.negf %170 : vector<16x128xf32>
    %172 = math.exp %171 : vector<16x128xf32>
    %cst_41 = arith.constant 1.000000e+00 : f32
    %173 = vector.broadcast %cst_41 : f32 to vector<16x128xf32>
    %174 = arith.addf %173, %172 : vector<16x128xf32>
    %175 = arith.divf %173, %174 : vector<16x128xf32>
    %176 = math.tanh %170 : vector<16x128xf32>
    %177 = vector.extract_strided_slice %175 {offsets = [0, 0], sizes = [16, 32], strides = [1, 1]} : vector<16x128xf32> to vector<16x32xf32>
    %178 = vector.extract_strided_slice %175 {offsets = [0, 32], sizes = [16, 32], strides = [1, 1]} : vector<16x128xf32> to vector<16x32xf32>
    %179 = vector.extract_strided_slice %176 {offsets = [0, 64], sizes = [16, 32], strides = [1, 1]} : vector<16x128xf32> to vector<16x32xf32>
    %180 = vector.extract_strided_slice %175 {offsets = [0, 96], sizes = [16, 32], strides = [1, 1]} : vector<16x128xf32> to vector<16x32xf32>
    %181 = arith.mulf %178, %161 : vector<16x32xf32>
    %182 = arith.mulf %177, %179 : vector<16x32xf32>
    %183 = arith.addf %181, %182 : vector<16x32xf32>
    %184 = math.tanh %183 : vector<16x32xf32>
    %185 = arith.mulf %180, %184 : vector<16x32xf32>
    %c8_i32 = arith.constant 8 : i32
    %c16_i32_42 = arith.constant 16 : i32
    %186 = arith.muli %c8_i32, %c16_i32_42 : i32
    %187 = tpu.assume_multiple %186, 16 : i32
    %188 = arith.index_cast %187 : i32 to index
    %c0_43 = arith.constant 0 : index
    %189 = vector.load %arg10[%188, %c0_43] : memref<320x128xf32, #tpu.memory_space<vmem>>, vector<16x128xf32>
    %190 = arith.truncf %185 : vector<16x32xf32> to vector<16x32xbf16>
    %cst_44 = arith.constant dense<0.000000e+00> : vector<16x128xf32>
    %191 = tpu.matmul %190, %7, %cst_44 {dimension_numbers = #tpu.dot_dimension_numbers<[1], [0], [0], [1], [0, 0, 1, 1], [], []>} : vector<16x32xbf16>, vector<32x128xbf16>, vector<16x128xf32> -> vector<16x128xf32>
    %192 = arith.addf %189, %191 : vector<16x128xf32>
    %193 = arith.negf %192 : vector<16x128xf32>
    %194 = math.exp %193 : vector<16x128xf32>
    %cst_45 = arith.constant 1.000000e+00 : f32
    %195 = vector.broadcast %cst_45 : f32 to vector<16x128xf32>
    %196 = arith.addf %195, %194 : vector<16x128xf32>
    %197 = arith.divf %195, %196 : vector<16x128xf32>
    %198 = math.tanh %192 : vector<16x128xf32>
    %199 = vector.extract_strided_slice %197 {offsets = [0, 0], sizes = [16, 32], strides = [1, 1]} : vector<16x128xf32> to vector<16x32xf32>
    %200 = vector.extract_strided_slice %197 {offsets = [0, 32], sizes = [16, 32], strides = [1, 1]} : vector<16x128xf32> to vector<16x32xf32>
    %201 = vector.extract_strided_slice %198 {offsets = [0, 64], sizes = [16, 32], strides = [1, 1]} : vector<16x128xf32> to vector<16x32xf32>
    %202 = vector.extract_strided_slice %197 {offsets = [0, 96], sizes = [16, 32], strides = [1, 1]} : vector<16x128xf32> to vector<16x32xf32>
    %203 = arith.mulf %200, %183 : vector<16x32xf32>
    %204 = arith.mulf %199, %201 : vector<16x32xf32>
    %205 = arith.addf %203, %204 : vector<16x32xf32>
    %206 = math.tanh %205 : vector<16x32xf32>
    %207 = arith.mulf %202, %206 : vector<16x32xf32>
    %c9_i32 = arith.constant 9 : i32
    %c16_i32_46 = arith.constant 16 : i32
    %208 = arith.muli %c9_i32, %c16_i32_46 : i32
    %209 = tpu.assume_multiple %208, 16 : i32
    %210 = arith.index_cast %209 : i32 to index
    %c0_47 = arith.constant 0 : index
    %211 = vector.load %arg10[%210, %c0_47] : memref<320x128xf32, #tpu.memory_space<vmem>>, vector<16x128xf32>
    %212 = arith.truncf %207 : vector<16x32xf32> to vector<16x32xbf16>
    %cst_48 = arith.constant dense<0.000000e+00> : vector<16x128xf32>
    %213 = tpu.matmul %212, %7, %cst_48 {dimension_numbers = #tpu.dot_dimension_numbers<[1], [0], [0], [1], [0, 0, 1, 1], [], []>} : vector<16x32xbf16>, vector<32x128xbf16>, vector<16x128xf32> -> vector<16x128xf32>
    %214 = arith.addf %211, %213 : vector<16x128xf32>
    %215 = arith.negf %214 : vector<16x128xf32>
    %216 = math.exp %215 : vector<16x128xf32>
    %cst_49 = arith.constant 1.000000e+00 : f32
    %217 = vector.broadcast %cst_49 : f32 to vector<16x128xf32>
    %218 = arith.addf %217, %216 : vector<16x128xf32>
    %219 = arith.divf %217, %218 : vector<16x128xf32>
    %220 = math.tanh %214 : vector<16x128xf32>
    %221 = vector.extract_strided_slice %219 {offsets = [0, 0], sizes = [16, 32], strides = [1, 1]} : vector<16x128xf32> to vector<16x32xf32>
    %222 = vector.extract_strided_slice %219 {offsets = [0, 32], sizes = [16, 32], strides = [1, 1]} : vector<16x128xf32> to vector<16x32xf32>
    %223 = vector.extract_strided_slice %220 {offsets = [0, 64], sizes = [16, 32], strides = [1, 1]} : vector<16x128xf32> to vector<16x32xf32>
    %224 = vector.extract_strided_slice %219 {offsets = [0, 96], sizes = [16, 32], strides = [1, 1]} : vector<16x128xf32> to vector<16x32xf32>
    %225 = arith.mulf %222, %205 : vector<16x32xf32>
    %226 = arith.mulf %221, %223 : vector<16x32xf32>
    %227 = arith.addf %225, %226 : vector<16x32xf32>
    %228 = math.tanh %227 : vector<16x32xf32>
    %229 = arith.mulf %224, %228 : vector<16x32xf32>
    %c10_i32 = arith.constant 10 : i32
    %c16_i32_50 = arith.constant 16 : i32
    %230 = arith.muli %c10_i32, %c16_i32_50 : i32
    %231 = tpu.assume_multiple %230, 16 : i32
    %232 = arith.index_cast %231 : i32 to index
    %c0_51 = arith.constant 0 : index
    %233 = vector.load %arg10[%232, %c0_51] : memref<320x128xf32, #tpu.memory_space<vmem>>, vector<16x128xf32>
    %234 = arith.truncf %229 : vector<16x32xf32> to vector<16x32xbf16>
    %cst_52 = arith.constant dense<0.000000e+00> : vector<16x128xf32>
    %235 = tpu.matmul %234, %7, %cst_52 {dimension_numbers = #tpu.dot_dimension_numbers<[1], [0], [0], [1], [0, 0, 1, 1], [], []>} : vector<16x32xbf16>, vector<32x128xbf16>, vector<16x128xf32> -> vector<16x128xf32>
    %236 = arith.addf %233, %235 : vector<16x128xf32>
    %237 = arith.negf %236 : vector<16x128xf32>
    %238 = math.exp %237 : vector<16x128xf32>
    %cst_53 = arith.constant 1.000000e+00 : f32
    %239 = vector.broadcast %cst_53 : f32 to vector<16x128xf32>
    %240 = arith.addf %239, %238 : vector<16x128xf32>
    %241 = arith.divf %239, %240 : vector<16x128xf32>
    %242 = math.tanh %236 : vector<16x128xf32>
    %243 = vector.extract_strided_slice %241 {offsets = [0, 0], sizes = [16, 32], strides = [1, 1]} : vector<16x128xf32> to vector<16x32xf32>
    %244 = vector.extract_strided_slice %241 {offsets = [0, 32], sizes = [16, 32], strides = [1, 1]} : vector<16x128xf32> to vector<16x32xf32>
    %245 = vector.extract_strided_slice %242 {offsets = [0, 64], sizes = [16, 32], strides = [1, 1]} : vector<16x128xf32> to vector<16x32xf32>
    %246 = vector.extract_strided_slice %241 {offsets = [0, 96], sizes = [16, 32], strides = [1, 1]} : vector<16x128xf32> to vector<16x32xf32>
    %247 = arith.mulf %244, %227 : vector<16x32xf32>
    %248 = arith.mulf %243, %245 : vector<16x32xf32>
    %249 = arith.addf %247, %248 : vector<16x32xf32>
    %250 = math.tanh %249 : vector<16x32xf32>
    %251 = arith.mulf %246, %250 : vector<16x32xf32>
    %c11_i32 = arith.constant 11 : i32
    %c16_i32_54 = arith.constant 16 : i32
    %252 = arith.muli %c11_i32, %c16_i32_54 : i32
    %253 = tpu.assume_multiple %252, 16 : i32
    %254 = arith.index_cast %253 : i32 to index
    %c0_55 = arith.constant 0 : index
    %255 = vector.load %arg10[%254, %c0_55] : memref<320x128xf32, #tpu.memory_space<vmem>>, vector<16x128xf32>
    %256 = arith.truncf %251 : vector<16x32xf32> to vector<16x32xbf16>
    %cst_56 = arith.constant dense<0.000000e+00> : vector<16x128xf32>
    %257 = tpu.matmul %256, %7, %cst_56 {dimension_numbers = #tpu.dot_dimension_numbers<[1], [0], [0], [1], [0, 0, 1, 1], [], []>} : vector<16x32xbf16>, vector<32x128xbf16>, vector<16x128xf32> -> vector<16x128xf32>
    %258 = arith.addf %255, %257 : vector<16x128xf32>
    %259 = arith.negf %258 : vector<16x128xf32>
    %260 = math.exp %259 : vector<16x128xf32>
    %cst_57 = arith.constant 1.000000e+00 : f32
    %261 = vector.broadcast %cst_57 : f32 to vector<16x128xf32>
    %262 = arith.addf %261, %260 : vector<16x128xf32>
    %263 = arith.divf %261, %262 : vector<16x128xf32>
    %264 = math.tanh %258 : vector<16x128xf32>
    %265 = vector.extract_strided_slice %263 {offsets = [0, 0], sizes = [16, 32], strides = [1, 1]} : vector<16x128xf32> to vector<16x32xf32>
    %266 = vector.extract_strided_slice %263 {offsets = [0, 32], sizes = [16, 32], strides = [1, 1]} : vector<16x128xf32> to vector<16x32xf32>
    %267 = vector.extract_strided_slice %264 {offsets = [0, 64], sizes = [16, 32], strides = [1, 1]} : vector<16x128xf32> to vector<16x32xf32>
    %268 = vector.extract_strided_slice %263 {offsets = [0, 96], sizes = [16, 32], strides = [1, 1]} : vector<16x128xf32> to vector<16x32xf32>
    %269 = arith.mulf %266, %249 : vector<16x32xf32>
    %270 = arith.mulf %265, %267 : vector<16x32xf32>
    %271 = arith.addf %269, %270 : vector<16x32xf32>
    %272 = math.tanh %271 : vector<16x32xf32>
    %273 = arith.mulf %268, %272 : vector<16x32xf32>
    %c12_i32 = arith.constant 12 : i32
    %c16_i32_58 = arith.constant 16 : i32
    %274 = arith.muli %c12_i32, %c16_i32_58 : i32
    %275 = tpu.assume_multiple %274, 16 : i32
    %276 = arith.index_cast %275 : i32 to index
    %c0_59 = arith.constant 0 : index
    %277 = vector.load %arg10[%276, %c0_59] : memref<320x128xf32, #tpu.memory_space<vmem>>, vector<16x128xf32>
    %278 = arith.truncf %273 : vector<16x32xf32> to vector<16x32xbf16>
    %cst_60 = arith.constant dense<0.000000e+00> : vector<16x128xf32>
    %279 = tpu.matmul %278, %7, %cst_60 {dimension_numbers = #tpu.dot_dimension_numbers<[1], [0], [0], [1], [0, 0, 1, 1], [], []>} : vector<16x32xbf16>, vector<32x128xbf16>, vector<16x128xf32> -> vector<16x128xf32>
    %280 = arith.addf %277, %279 : vector<16x128xf32>
    %281 = arith.negf %280 : vector<16x128xf32>
    %282 = math.exp %281 : vector<16x128xf32>
    %cst_61 = arith.constant 1.000000e+00 : f32
    %283 = vector.broadcast %cst_61 : f32 to vector<16x128xf32>
    %284 = arith.addf %283, %282 : vector<16x128xf32>
    %285 = arith.divf %283, %284 : vector<16x128xf32>
    %286 = math.tanh %280 : vector<16x128xf32>
    %287 = vector.extract_strided_slice %285 {offsets = [0, 0], sizes = [16, 32], strides = [1, 1]} : vector<16x128xf32> to vector<16x32xf32>
    %288 = vector.extract_strided_slice %285 {offsets = [0, 32], sizes = [16, 32], strides = [1, 1]} : vector<16x128xf32> to vector<16x32xf32>
    %289 = vector.extract_strided_slice %286 {offsets = [0, 64], sizes = [16, 32], strides = [1, 1]} : vector<16x128xf32> to vector<16x32xf32>
    %290 = vector.extract_strided_slice %285 {offsets = [0, 96], sizes = [16, 32], strides = [1, 1]} : vector<16x128xf32> to vector<16x32xf32>
    %291 = arith.mulf %288, %271 : vector<16x32xf32>
    %292 = arith.mulf %287, %289 : vector<16x32xf32>
    %293 = arith.addf %291, %292 : vector<16x32xf32>
    %294 = math.tanh %293 : vector<16x32xf32>
    %295 = arith.mulf %290, %294 : vector<16x32xf32>
    %c13_i32 = arith.constant 13 : i32
    %c16_i32_62 = arith.constant 16 : i32
    %296 = arith.muli %c13_i32, %c16_i32_62 : i32
    %297 = tpu.assume_multiple %296, 16 : i32
    %298 = arith.index_cast %297 : i32 to index
    %c0_63 = arith.constant 0 : index
    %299 = vector.load %arg10[%298, %c0_63] : memref<320x128xf32, #tpu.memory_space<vmem>>, vector<16x128xf32>
    %300 = arith.truncf %295 : vector<16x32xf32> to vector<16x32xbf16>
    %cst_64 = arith.constant dense<0.000000e+00> : vector<16x128xf32>
    %301 = tpu.matmul %300, %7, %cst_64 {dimension_numbers = #tpu.dot_dimension_numbers<[1], [0], [0], [1], [0, 0, 1, 1], [], []>} : vector<16x32xbf16>, vector<32x128xbf16>, vector<16x128xf32> -> vector<16x128xf32>
    %302 = arith.addf %299, %301 : vector<16x128xf32>
    %303 = arith.negf %302 : vector<16x128xf32>
    %304 = math.exp %303 : vector<16x128xf32>
    %cst_65 = arith.constant 1.000000e+00 : f32
    %305 = vector.broadcast %cst_65 : f32 to vector<16x128xf32>
    %306 = arith.addf %305, %304 : vector<16x128xf32>
    %307 = arith.divf %305, %306 : vector<16x128xf32>
    %308 = math.tanh %302 : vector<16x128xf32>
    %309 = vector.extract_strided_slice %307 {offsets = [0, 0], sizes = [16, 32], strides = [1, 1]} : vector<16x128xf32> to vector<16x32xf32>
    %310 = vector.extract_strided_slice %307 {offsets = [0, 32], sizes = [16, 32], strides = [1, 1]} : vector<16x128xf32> to vector<16x32xf32>
    %311 = vector.extract_strided_slice %308 {offsets = [0, 64], sizes = [16, 32], strides = [1, 1]} : vector<16x128xf32> to vector<16x32xf32>
    %312 = vector.extract_strided_slice %307 {offsets = [0, 96], sizes = [16, 32], strides = [1, 1]} : vector<16x128xf32> to vector<16x32xf32>
    %313 = arith.mulf %310, %293 : vector<16x32xf32>
    %314 = arith.mulf %309, %311 : vector<16x32xf32>
    %315 = arith.addf %313, %314 : vector<16x32xf32>
    %316 = math.tanh %315 : vector<16x32xf32>
    %317 = arith.mulf %312, %316 : vector<16x32xf32>
    %c14_i32 = arith.constant 14 : i32
    %c16_i32_66 = arith.constant 16 : i32
    %318 = arith.muli %c14_i32, %c16_i32_66 : i32
    %319 = tpu.assume_multiple %318, 16 : i32
    %320 = arith.index_cast %319 : i32 to index
    %c0_67 = arith.constant 0 : index
    %321 = vector.load %arg10[%320, %c0_67] : memref<320x128xf32, #tpu.memory_space<vmem>>, vector<16x128xf32>
    %322 = arith.truncf %317 : vector<16x32xf32> to vector<16x32xbf16>
    %cst_68 = arith.constant dense<0.000000e+00> : vector<16x128xf32>
    %323 = tpu.matmul %322, %7, %cst_68 {dimension_numbers = #tpu.dot_dimension_numbers<[1], [0], [0], [1], [0, 0, 1, 1], [], []>} : vector<16x32xbf16>, vector<32x128xbf16>, vector<16x128xf32> -> vector<16x128xf32>
    %324 = arith.addf %321, %323 : vector<16x128xf32>
    %325 = arith.negf %324 : vector<16x128xf32>
    %326 = math.exp %325 : vector<16x128xf32>
    %cst_69 = arith.constant 1.000000e+00 : f32
    %327 = vector.broadcast %cst_69 : f32 to vector<16x128xf32>
    %328 = arith.addf %327, %326 : vector<16x128xf32>
    %329 = arith.divf %327, %328 : vector<16x128xf32>
    %330 = math.tanh %324 : vector<16x128xf32>
    %331 = vector.extract_strided_slice %329 {offsets = [0, 0], sizes = [16, 32], strides = [1, 1]} : vector<16x128xf32> to vector<16x32xf32>
    %332 = vector.extract_strided_slice %329 {offsets = [0, 32], sizes = [16, 32], strides = [1, 1]} : vector<16x128xf32> to vector<16x32xf32>
    %333 = vector.extract_strided_slice %330 {offsets = [0, 64], sizes = [16, 32], strides = [1, 1]} : vector<16x128xf32> to vector<16x32xf32>
    %334 = vector.extract_strided_slice %329 {offsets = [0, 96], sizes = [16, 32], strides = [1, 1]} : vector<16x128xf32> to vector<16x32xf32>
    %335 = arith.mulf %332, %315 : vector<16x32xf32>
    %336 = arith.mulf %331, %333 : vector<16x32xf32>
    %337 = arith.addf %335, %336 : vector<16x32xf32>
    %338 = math.tanh %337 : vector<16x32xf32>
    %339 = arith.mulf %334, %338 : vector<16x32xf32>
    %c15_i32 = arith.constant 15 : i32
    %c16_i32_70 = arith.constant 16 : i32
    %340 = arith.muli %c15_i32, %c16_i32_70 : i32
    %341 = tpu.assume_multiple %340, 16 : i32
    %342 = arith.index_cast %341 : i32 to index
    %c0_71 = arith.constant 0 : index
    %343 = vector.load %arg10[%342, %c0_71] : memref<320x128xf32, #tpu.memory_space<vmem>>, vector<16x128xf32>
    %344 = arith.truncf %339 : vector<16x32xf32> to vector<16x32xbf16>
    %cst_72 = arith.constant dense<0.000000e+00> : vector<16x128xf32>
    %345 = tpu.matmul %344, %7, %cst_72 {dimension_numbers = #tpu.dot_dimension_numbers<[1], [0], [0], [1], [0, 0, 1, 1], [], []>} : vector<16x32xbf16>, vector<32x128xbf16>, vector<16x128xf32> -> vector<16x128xf32>
    %346 = arith.addf %343, %345 : vector<16x128xf32>
    %347 = arith.negf %346 : vector<16x128xf32>
    %348 = math.exp %347 : vector<16x128xf32>
    %cst_73 = arith.constant 1.000000e+00 : f32
    %349 = vector.broadcast %cst_73 : f32 to vector<16x128xf32>
    %350 = arith.addf %349, %348 : vector<16x128xf32>
    %351 = arith.divf %349, %350 : vector<16x128xf32>
    %352 = math.tanh %346 : vector<16x128xf32>
    %353 = vector.extract_strided_slice %351 {offsets = [0, 0], sizes = [16, 32], strides = [1, 1]} : vector<16x128xf32> to vector<16x32xf32>
    %354 = vector.extract_strided_slice %351 {offsets = [0, 32], sizes = [16, 32], strides = [1, 1]} : vector<16x128xf32> to vector<16x32xf32>
    %355 = vector.extract_strided_slice %352 {offsets = [0, 64], sizes = [16, 32], strides = [1, 1]} : vector<16x128xf32> to vector<16x32xf32>
    %356 = vector.extract_strided_slice %351 {offsets = [0, 96], sizes = [16, 32], strides = [1, 1]} : vector<16x128xf32> to vector<16x32xf32>
    %357 = arith.mulf %354, %337 : vector<16x32xf32>
    %358 = arith.mulf %353, %355 : vector<16x32xf32>
    %359 = arith.addf %357, %358 : vector<16x32xf32>
    %360 = math.tanh %359 : vector<16x32xf32>
    %361 = arith.mulf %356, %360 : vector<16x32xf32>
    %c16_i32_74 = arith.constant 16 : i32
    %c16_i32_75 = arith.constant 16 : i32
    %362 = arith.muli %c16_i32_74, %c16_i32_75 : i32
    %363 = tpu.assume_multiple %362, 16 : i32
    %364 = arith.index_cast %363 : i32 to index
    %c0_76 = arith.constant 0 : index
    %365 = vector.load %arg10[%364, %c0_76] : memref<320x128xf32, #tpu.memory_space<vmem>>, vector<16x128xf32>
    %366 = arith.truncf %361 : vector<16x32xf32> to vector<16x32xbf16>
    %cst_77 = arith.constant dense<0.000000e+00> : vector<16x128xf32>
    %367 = tpu.matmul %366, %7, %cst_77 {dimension_numbers = #tpu.dot_dimension_numbers<[1], [0], [0], [1], [0, 0, 1, 1], [], []>} : vector<16x32xbf16>, vector<32x128xbf16>, vector<16x128xf32> -> vector<16x128xf32>
    %368 = arith.addf %365, %367 : vector<16x128xf32>
    %369 = arith.negf %368 : vector<16x128xf32>
    %370 = math.exp %369 : vector<16x128xf32>
    %cst_78 = arith.constant 1.000000e+00 : f32
    %371 = vector.broadcast %cst_78 : f32 to vector<16x128xf32>
    %372 = arith.addf %371, %370 : vector<16x128xf32>
    %373 = arith.divf %371, %372 : vector<16x128xf32>
    %374 = math.tanh %368 : vector<16x128xf32>
    %375 = vector.extract_strided_slice %373 {offsets = [0, 0], sizes = [16, 32], strides = [1, 1]} : vector<16x128xf32> to vector<16x32xf32>
    %376 = vector.extract_strided_slice %373 {offsets = [0, 32], sizes = [16, 32], strides = [1, 1]} : vector<16x128xf32> to vector<16x32xf32>
    %377 = vector.extract_strided_slice %374 {offsets = [0, 64], sizes = [16, 32], strides = [1, 1]} : vector<16x128xf32> to vector<16x32xf32>
    %378 = vector.extract_strided_slice %373 {offsets = [0, 96], sizes = [16, 32], strides = [1, 1]} : vector<16x128xf32> to vector<16x32xf32>
    %379 = arith.mulf %376, %359 : vector<16x32xf32>
    %380 = arith.mulf %375, %377 : vector<16x32xf32>
    %381 = arith.addf %379, %380 : vector<16x32xf32>
    %382 = math.tanh %381 : vector<16x32xf32>
    %383 = arith.mulf %378, %382 : vector<16x32xf32>
    %c17_i32 = arith.constant 17 : i32
    %c16_i32_79 = arith.constant 16 : i32
    %384 = arith.muli %c17_i32, %c16_i32_79 : i32
    %385 = tpu.assume_multiple %384, 16 : i32
    %386 = arith.index_cast %385 : i32 to index
    %c0_80 = arith.constant 0 : index
    %387 = vector.load %arg10[%386, %c0_80] : memref<320x128xf32, #tpu.memory_space<vmem>>, vector<16x128xf32>
    %388 = arith.truncf %383 : vector<16x32xf32> to vector<16x32xbf16>
    %cst_81 = arith.constant dense<0.000000e+00> : vector<16x128xf32>
    %389 = tpu.matmul %388, %7, %cst_81 {dimension_numbers = #tpu.dot_dimension_numbers<[1], [0], [0], [1], [0, 0, 1, 1], [], []>} : vector<16x32xbf16>, vector<32x128xbf16>, vector<16x128xf32> -> vector<16x128xf32>
    %390 = arith.addf %387, %389 : vector<16x128xf32>
    %391 = arith.negf %390 : vector<16x128xf32>
    %392 = math.exp %391 : vector<16x128xf32>
    %cst_82 = arith.constant 1.000000e+00 : f32
    %393 = vector.broadcast %cst_82 : f32 to vector<16x128xf32>
    %394 = arith.addf %393, %392 : vector<16x128xf32>
    %395 = arith.divf %393, %394 : vector<16x128xf32>
    %396 = math.tanh %390 : vector<16x128xf32>
    %397 = vector.extract_strided_slice %395 {offsets = [0, 0], sizes = [16, 32], strides = [1, 1]} : vector<16x128xf32> to vector<16x32xf32>
    %398 = vector.extract_strided_slice %395 {offsets = [0, 32], sizes = [16, 32], strides = [1, 1]} : vector<16x128xf32> to vector<16x32xf32>
    %399 = vector.extract_strided_slice %396 {offsets = [0, 64], sizes = [16, 32], strides = [1, 1]} : vector<16x128xf32> to vector<16x32xf32>
    %400 = vector.extract_strided_slice %395 {offsets = [0, 96], sizes = [16, 32], strides = [1, 1]} : vector<16x128xf32> to vector<16x32xf32>
    %401 = arith.mulf %398, %381 : vector<16x32xf32>
    %402 = arith.mulf %397, %399 : vector<16x32xf32>
    %403 = arith.addf %401, %402 : vector<16x32xf32>
    %404 = math.tanh %403 : vector<16x32xf32>
    %405 = arith.mulf %400, %404 : vector<16x32xf32>
    %c18_i32 = arith.constant 18 : i32
    %c16_i32_83 = arith.constant 16 : i32
    %406 = arith.muli %c18_i32, %c16_i32_83 : i32
    %407 = tpu.assume_multiple %406, 16 : i32
    %408 = arith.index_cast %407 : i32 to index
    %c0_84 = arith.constant 0 : index
    %409 = vector.load %arg10[%408, %c0_84] : memref<320x128xf32, #tpu.memory_space<vmem>>, vector<16x128xf32>
    %410 = arith.truncf %405 : vector<16x32xf32> to vector<16x32xbf16>
    %cst_85 = arith.constant dense<0.000000e+00> : vector<16x128xf32>
    %411 = tpu.matmul %410, %7, %cst_85 {dimension_numbers = #tpu.dot_dimension_numbers<[1], [0], [0], [1], [0, 0, 1, 1], [], []>} : vector<16x32xbf16>, vector<32x128xbf16>, vector<16x128xf32> -> vector<16x128xf32>
    %412 = arith.addf %409, %411 : vector<16x128xf32>
    %413 = arith.negf %412 : vector<16x128xf32>
    %414 = math.exp %413 : vector<16x128xf32>
    %cst_86 = arith.constant 1.000000e+00 : f32
    %415 = vector.broadcast %cst_86 : f32 to vector<16x128xf32>
    %416 = arith.addf %415, %414 : vector<16x128xf32>
    %417 = arith.divf %415, %416 : vector<16x128xf32>
    %418 = math.tanh %412 : vector<16x128xf32>
    %419 = vector.extract_strided_slice %417 {offsets = [0, 0], sizes = [16, 32], strides = [1, 1]} : vector<16x128xf32> to vector<16x32xf32>
    %420 = vector.extract_strided_slice %417 {offsets = [0, 32], sizes = [16, 32], strides = [1, 1]} : vector<16x128xf32> to vector<16x32xf32>
    %421 = vector.extract_strided_slice %418 {offsets = [0, 64], sizes = [16, 32], strides = [1, 1]} : vector<16x128xf32> to vector<16x32xf32>
    %422 = vector.extract_strided_slice %417 {offsets = [0, 96], sizes = [16, 32], strides = [1, 1]} : vector<16x128xf32> to vector<16x32xf32>
    %423 = arith.mulf %420, %403 : vector<16x32xf32>
    %424 = arith.mulf %419, %421 : vector<16x32xf32>
    %425 = arith.addf %423, %424 : vector<16x32xf32>
    %426 = math.tanh %425 : vector<16x32xf32>
    %427 = arith.mulf %422, %426 : vector<16x32xf32>
    %c19_i32 = arith.constant 19 : i32
    %c16_i32_87 = arith.constant 16 : i32
    %428 = arith.muli %c19_i32, %c16_i32_87 : i32
    %429 = tpu.assume_multiple %428, 16 : i32
    %430 = arith.index_cast %429 : i32 to index
    %c0_88 = arith.constant 0 : index
    %431 = vector.load %arg10[%430, %c0_88] : memref<320x128xf32, #tpu.memory_space<vmem>>, vector<16x128xf32>
    %432 = arith.truncf %427 : vector<16x32xf32> to vector<16x32xbf16>
    %cst_89 = arith.constant dense<0.000000e+00> : vector<16x128xf32>
    %433 = tpu.matmul %432, %7, %cst_89 {dimension_numbers = #tpu.dot_dimension_numbers<[1], [0], [0], [1], [0, 0, 1, 1], [], []>} : vector<16x32xbf16>, vector<32x128xbf16>, vector<16x128xf32> -> vector<16x128xf32>
    %434 = arith.addf %431, %433 : vector<16x128xf32>
    %435 = arith.negf %434 : vector<16x128xf32>
    %436 = math.exp %435 : vector<16x128xf32>
    %cst_90 = arith.constant 1.000000e+00 : f32
    %437 = vector.broadcast %cst_90 : f32 to vector<16x128xf32>
    %438 = arith.addf %437, %436 : vector<16x128xf32>
    %439 = arith.divf %437, %438 : vector<16x128xf32>
    %440 = math.tanh %434 : vector<16x128xf32>
    %441 = vector.extract_strided_slice %439 {offsets = [0, 0], sizes = [16, 32], strides = [1, 1]} : vector<16x128xf32> to vector<16x32xf32>
    %442 = vector.extract_strided_slice %439 {offsets = [0, 32], sizes = [16, 32], strides = [1, 1]} : vector<16x128xf32> to vector<16x32xf32>
    %443 = vector.extract_strided_slice %440 {offsets = [0, 64], sizes = [16, 32], strides = [1, 1]} : vector<16x128xf32> to vector<16x32xf32>
    %444 = vector.extract_strided_slice %439 {offsets = [0, 96], sizes = [16, 32], strides = [1, 1]} : vector<16x128xf32> to vector<16x32xf32>
    %445 = arith.mulf %442, %425 : vector<16x32xf32>
    %446 = arith.mulf %441, %443 : vector<16x32xf32>
    %447 = arith.addf %445, %446 : vector<16x32xf32>
    %448 = math.tanh %447 : vector<16x32xf32>
    %449 = arith.mulf %444, %448 : vector<16x32xf32>
    %c20_i32 = arith.constant 20 : i32
    %450 = arith.truncf %449 : vector<16x32xf32> to vector<16x32xbf16>
    %c0_91 = arith.constant 0 : index
    %c0_92 = arith.constant 0 : index
    %451 = vector.load %arg5[%c0_91, %c0_92] : memref<32x128xbf16, #tpu.memory_space<vmem>>, vector<32x128xbf16>
    %cst_93 = arith.constant dense<0.000000e+00> : vector<16x128xf32>
    %452 = tpu.matmul %450, %451, %cst_93 {dimension_numbers = #tpu.dot_dimension_numbers<[1], [0], [0], [1], [0, 0, 1, 1], [], []>} : vector<16x32xbf16>, vector<32x128xbf16>, vector<16x128xf32> -> vector<16x128xf32>
    %c0_94 = arith.constant 0 : index
    %c0_95 = arith.constant 0 : index
    %453 = vector.load %arg6[%c0_94, %c0_95] : memref<1x128xf32, #tpu.memory_space<vmem>>, vector<1x128xf32>
    %454 = vector.broadcast %453 : vector<1x128xf32> to vector<16x128xf32>
    %455 = arith.addf %452, %454 : vector<16x128xf32>
    %cst_96 = arith.constant dense<0xFF800000> : vector<16xf32>
    %456 = vector.multi_reduction <maximumf>, %455, %cst_96 [1] : vector<16x128xf32> to vector<16xf32>
    %457 = vector.shape_cast %456 : vector<16xf32> to vector<16x1xf32>
    %458 = vector.broadcast %457 : vector<16x1xf32> to vector<16x128xf32>
    %459 = arith.subf %455, %458 : vector<16x128xf32>
    %460 = math.exp %459 : vector<16x128xf32>
    %cst_97 = arith.constant dense<0.000000e+00> : vector<16xf32>
    %461 = vector.multi_reduction <add>, %460, %cst_97 [1] : vector<16x128xf32> to vector<16xf32>
    %462 = vector.shape_cast %461 : vector<16xf32> to vector<16x1xf32>
    %463 = math.log %462 : vector<16x1xf32>
    %464 = vector.broadcast %463 : vector<16x1xf32> to vector<16x128xf32>
    %465 = arith.subf %459, %464 : vector<16x128xf32>
    %c0_98 = arith.constant 0 : index
    %c0_99 = arith.constant 0 : index
    %466 = vector.load %arg7[%c0_98, %c0_99] : memref<128x128xf32, #tpu.memory_space<vmem>>, vector<128x128xf32>
    %cst_100 = arith.constant dense<0.000000e+00> : vector<16x128xf32>
    %467 = tpu.matmul %465, %466, %cst_100 {dimension_numbers = #tpu.dot_dimension_numbers<[1], [0], [0], [1], [0, 0, 1, 1], [], []>} : vector<16x128xf32>, vector<128x128xf32>, vector<16x128xf32> -> vector<16x128xf32>
    %c0_101 = arith.constant 0 : index
    %c0_102 = arith.constant 0 : index
    %468 = vector.load %arg8[%c0_101, %c0_102] : memref<1x128xf32, #tpu.memory_space<vmem>>, vector<1x128xf32>
    %469 = vector.broadcast %468 : vector<1x128xf32> to vector<16x128xf32>
    %470 = arith.addf %467, %469 : vector<16x128xf32>
    %cst_103 = arith.constant dense<0xFF800000> : vector<16xf32>
    %471 = vector.multi_reduction <maximumf>, %470, %cst_103 [1] : vector<16x128xf32> to vector<16xf32>
    %472 = vector.shape_cast %471 : vector<16xf32> to vector<16x1xf32>
    %473 = vector.broadcast %472 : vector<16x1xf32> to vector<16x128xf32>
    %474 = arith.subf %470, %473 : vector<16x128xf32>
    %475 = math.exp %474 : vector<16x128xf32>
    %cst_104 = arith.constant dense<0.000000e+00> : vector<16xf32>
    %476 = vector.multi_reduction <add>, %475, %cst_104 [1] : vector<16x128xf32> to vector<16xf32>
    %477 = vector.shape_cast %476 : vector<16xf32> to vector<16x1xf32>
    %478 = math.log %477 : vector<16x1xf32>
    %479 = vector.broadcast %478 : vector<16x1xf32> to vector<16x128xf32>
    %480 = arith.subf %474, %479 : vector<16x128xf32>
    %c0_105 = arith.constant 0 : index
    %c0_106 = arith.constant 0 : index
    %481 = vector.load %arg9[%c0_105, %c0_106] : memref<16x128xf32, #tpu.memory_space<vmem>>, vector<16x128xf32>
    tpu.vector_store %arg9[%c0_105, %c0_106], %480 {strides = array<i32>} : memref<16x128xf32, #tpu.memory_space<vmem>>, vector<16x128xf32>,
    return
  }
  func.func @transform_0(%arg0: i32) -> (i32, i32) {
    %c0_i32 = arith.constant 0 : i32
    %c0_i32_0 = arith.constant 0 : i32
    return %arg0, %c0_i32 : i32, i32
  }
  func.func @transform_1(%arg0: i32) -> (i32, i32) {
    %c0_i32 = arith.constant 0 : i32
    %c0_i32_0 = arith.constant 0 : i32
    %c0_i32_1 = arith.constant 0 : i32
    return %c0_i32, %c0_i32_0 : i32, i32
  }
  func.func @transform_2(%arg0: i32) -> (i32, i32) {
    %c0_i32 = arith.constant 0 : i32
    %c0_i32_0 = arith.constant 0 : i32
    %c0_i32_1 = arith.constant 0 : i32
    return %c0_i32, %c0_i32_0 : i32, i32
  }
  func.func @transform_3(%arg0: i32) -> (i32, i32) {
    %c0_i32 = arith.constant 0 : i32
    %c0_i32_0 = arith.constant 0 : i32
    %c0_i32_1 = arith.constant 0 : i32
    return %c0_i32, %c0_i32_0 : i32, i32
  }
  func.func @transform_4(%arg0: i32) -> (i32, i32) {
    %c0_i32 = arith.constant 0 : i32
    %c0_i32_0 = arith.constant 0 : i32
    %c0_i32_1 = arith.constant 0 : i32
    return %c0_i32, %c0_i32_0 : i32, i32
  }
  func.func @transform_5(%arg0: i32) -> (i32, i32) {
    %c0_i32 = arith.constant 0 : i32
    %c0_i32_0 = arith.constant 0 : i32
    %c0_i32_1 = arith.constant 0 : i32
    return %c0_i32, %c0_i32_0 : i32, i32
  }
  func.func @transform_6(%arg0: i32) -> (i32, i32) {
    %c0_i32 = arith.constant 0 : i32
    %c0_i32_0 = arith.constant 0 : i32
    %c0_i32_1 = arith.constant 0 : i32
    return %c0_i32, %c0_i32_0 : i32, i32
  }
  func.func @transform_7(%arg0: i32) -> (i32, i32) {
    %c0_i32 = arith.constant 0 : i32
    %c0_i32_0 = arith.constant 0 : i32
    %c0_i32_1 = arith.constant 0 : i32
    return %c0_i32, %c0_i32_0 : i32, i32
  }
  func.func @transform_8(%arg0: i32) -> (i32, i32) {
    %c0_i32 = arith.constant 0 : i32
    %c0_i32_0 = arith.constant 0 : i32
    return %arg0, %c0_i32 : i32, i32
  }
}

</mosaic_0001>

<llo_original>
// kernel: textrnn_forward.1
$region0: #{textrnn_forward.1}
  #allocation0 [shape = 'u32[]', space=smem, size = 0x4, offset = 0x4, fixed_abs, tag = 'smem constant byte address 0x4 - core index']
  #allocation1 [shape = 'u32[144,128]{1,0:T(1,128)}', space=vmem, size = 0x12000, scoped, tag = 'internal scratch']
  #allocation2 [shape = 'f32[320,128]{1,0:T(8,128)}', space=vmem, size = 0x28000, scoped, tag = 'scratch operand']
  %s0 = inlined_call_operand.vmem [shape: bf16[320,16], index: 0, kind: input, shape index: {}]
  %s1 = inlined_call_operand.vmem [shape: bf16[16,128], index: 1, kind: input, shape index: {}]
  %s2 = inlined_call_operand.vmem [shape: bf16[32,128], index: 2, kind: input, shape index: {}]
  %s3 = inlined_call_operand.vmem [shape: f32[1,128], index: 3, kind: input, shape index: {}]
  %s4 = inlined_call_operand.vmem [shape: bf16[32,128], index: 4, kind: input, shape index: {}]
  %s5 = inlined_call_operand.vmem [shape: f32[1,128], index: 5, kind: input, shape index: {}]
  %s6 = inlined_call_operand.vmem [shape: f32[128,128], index: 6, kind: input, shape index: {}]
  %s7 = inlined_call_operand.vmem [shape: f32[1,128], index: 7, kind: input, shape index: {}]
  %s8 = inlined_call_operand.vmem [shape: f32[16,128], index: 8, kind: output, shape index: {}]
  %s9 = sld [smem:[#allocation0]]
  $region42: #{textrnn_forward.1} parent=0
    _
  %s11 = ssub.s32 1, %s9
  %s12 = scalar_select 0, %s11, %s9
  // Predicated region
  $region2: #{textrnn_forward.1} parent=0 // pred_check
    _
  $region3: #{textrnn_forward.1} parent=0 // pred_check_branch
    %14 = sbr.rel (0) target = $region5
  $region4: #{textrnn_forward.1} parent=0 // pred_region
    _
  $region5: #{textrnn_forward.1} parent=0 // pred_fallthru
    _
  // Predicated region
  $region6: #{textrnn_forward.1} parent=0 // pred_check
    _
  $region7: #{textrnn_forward.1} parent=0 // pred_check_branch
    %16 = sbr.rel (0) target = $region9
  $region8: #{textrnn_forward.1} parent=0 // pred_region
    _
  $region9: #{textrnn_forward.1} parent=0 // pred_fallthru
    _
  // Predicated region
  $region10: #{textrnn_forward.1} parent=0 // pred_check
    _
  $region11: #{textrnn_forward.1} parent=0 // pred_check_branch
    %18 = sbr.rel (0) target = $region13
  $region12: #{textrnn_forward.1} parent=0 // pred_region
    _
  $region13: #{textrnn_forward.1} parent=0 // pred_fallthru
    _
  // Predicated region
  $region14: #{textrnn_forward.1} parent=0 // pred_check
    _
  $region15: #{textrnn_forward.1} parent=0 // pred_check_branch
    %20 = sbr.rel (0) target = $region17
  $region16: #{textrnn_forward.1} parent=0 // pred_region
    _
  $region17: #{textrnn_forward.1} parent=0 // pred_fallthru
    _
  // Predicated region
  $region18: #{textrnn_forward.1} parent=0 // pred_check
    _
  $region19: #{textrnn_forward.1} parent=0 // pred_check_branch
    %22 = sbr.rel (0) target = $region21
  $region20: #{textrnn_forward.1} parent=0 // pred_region
    _
  $region21: #{textrnn_forward.1} parent=0 // pred_fallthru
    _
  // Predicated region
  $region22: #{textrnn_forward.1} parent=0 // pred_check
    _
  $region23: #{textrnn_forward.1} parent=0 // pred_check_branch
    %24 = sbr.rel (0) target = $region25
  $region24: #{textrnn_forward.1} parent=0 // pred_region
    _
  $region25: #{textrnn_forward.1} parent=0 // pred_fallthru
    _
  // Predicated region
  $region26: #{textrnn_forward.1} parent=0 // pred_check
    _
  $region27: #{textrnn_forward.1} parent=0 // pred_check_branch
    %26 = sbr.rel (0) target = $region29
  $region28: #{textrnn_forward.1} parent=0 // pred_region
    _
  $region29: #{textrnn_forward.1} parent=0 // pred_fallthru
    _
  // Predicated region
  $region30: #{textrnn_forward.1} parent=0 // pred_check
    _
  $region31: #{textrnn_forward.1} parent=0 // pred_check_branch
    %28 = sbr.rel (0) target = $region33
  $region32: #{textrnn_forward.1} parent=0 // pred_region
    _
  $region33: #{textrnn_forward.1} parent=0 // pred_fallthru
    _
  %v30 = vld [vmem:[%s0] sm:$0xf]
  %v31 = vld [vmem:[%s0 + $0x4] sm:$0xf]
  %v32 = vld [vmem:[%s0 + $0x8] sm:$0xf]
  %v33 = vld [vmem:[%s0 + $0xc] sm:$0xf]
  %v34 = vld [vmem:[%s0 + $0x10] sm:$0xf]
  %v35 = vld [vmem:[%s0 + $0x14] sm:$0xf]
  %v36 = vld [vmem:[%s0 + $0x18] sm:$0xf]
  %v37 = vld [vmem:[%s0 + $0x1c] sm:$0xf]
  %v38 = vld [vmem:[%s0 + $0x20] sm:$0xf]
  %v39 = vld [vmem:[%s0 + $0x24] sm:$0xf]
  %v40 = vld [vmem:[%s0 + $0x28] sm:$0xf]
  %v41 = vld [vmem:[%s0 + $0x2c] sm:$0xf]
  %v42 = vld [vmem:[%s0 + $0x30] sm:$0xf]
  %v43 = vld [vmem:[%s0 + $0x34] sm:$0xf]
  %v44 = vld [vmem:[%s0 + $0x38] sm:$0xf]
  %v45 = vld [vmem:[%s0 + $0x3c] sm:$0xf]
  %v46 = vld [vmem:[%s0 + $0x40] sm:$0xf]
  %v47 = vld [vmem:[%s0 + $0x44] sm:$0xf]
  %v48 = vld [vmem:[%s0 + $0x48] sm:$0xf]
  %v49 = vld [vmem:[%s0 + $0x4c] sm:$0xf]
  %v50 = vld [vmem:[%s0 + $0x50] sm:$0xf]
  %v51 = vld [vmem:[%s0 + $0x54] sm:$0xf]
  %v52 = vld [vmem:[%s0 + $0x58] sm:$0xf]
  %v53 = vld [vmem:[%s0 + $0x5c] sm:$0xf]
  %v54 = vld [vmem:[%s0 + $0x60] sm:$0xf]
  %v55 = vld [vmem:[%s0 + $0x64] sm:$0xf]
  %v56 = vld [vmem:[%s0 + $0x68] sm:$0xf]
  %v57 = vld [vmem:[%s0 + $0x6c] sm:$0xf]
  %v58 = vld [vmem:[%s0 + $0x70] sm:$0xf]
  %v59 = vld [vmem:[%s0 + $0x74] sm:$0xf]
  %v60 = vld [vmem:[%s0 + $0x78] sm:$0xf]
  %v61 = vld [vmem:[%s0 + $0x7c] sm:$0xf]
  %v62 = vld [vmem:[%s0 + $0x80] sm:$0xf]
  %v63 = vld [vmem:[%s0 + $0x84] sm:$0xf]
  %v64 = vld [vmem:[%s0 + $0x88] sm:$0xf]
  %v65 = vld [vmem:[%s0 + $0x8c] sm:$0xf]
  %v66 = vld [vmem:[%s0 + $0x90] sm:$0xf]
  %v67 = vld [vmem:[%s0 + $0x94] sm:$0xf]
  %v68 = vld [vmem:[%s0 + $0x98] sm:$0xf]
  %v69 = vld [vmem:[%s0 + $0x9c] sm:$0xf]
  %v70 = vld [vmem:[%s1] sm:$0xf]
  %v71 = vld [vmem:[%s1 + $0x4] sm:$0xf]
  %v72 = vld [vmem:[%s3] sm:$0x1]
  %v74 = vlaneseq
  %v75 = vshrl.u32 %v74, 7
  %v76 = vsub.s32 0, %v75
  %v77 = vrot.slane %v72, %v76
  %v119 = vunpack.c.l.b16 %v30
  %v120 = vunpack.c.l.b16 %v31
  %v121 = vunpack.c.l.b16 %v32
  %v122 = vunpack.c.l.b16 %v33
  %v123 = vunpack.c.l.b16 %v34
  %v124 = vunpack.c.l.b16 %v35
  %v125 = vunpack.c.l.b16 %v36
  %v126 = vunpack.c.l.b16 %v37
  %v127 = vunpack.c.l.b16 %v38
  %v128 = vunpack.c.l.b16 %v39
  %v129 = vunpack.c.l.b16 %v40
  %v130 = vunpack.c.l.b16 %v41
  %v131 = vunpack.c.l.b16 %v42
  %v132 = vunpack.c.l.b16 %v43
  %v133 = vunpack.c.l.b16 %v44
  %v134 = vunpack.c.l.b16 %v45
  %v135 = vunpack.c.l.b16 %v46
  %v136 = vunpack.c.l.b16 %v47
  %v137 = vunpack.c.l.b16 %v48
  %v138 = vunpack.c.l.b16 %v49
  %v139 = vunpack.c.l.b16 %v50
  %v140 = vunpack.c.l.b16 %v51
  %v141 = vunpack.c.l.b16 %v52
  %v142 = vunpack.c.l.b16 %v53
  %v143 = vunpack.c.l.b16 %v54
  %v144 = vunpack.c.l.b16 %v55
  %v145 = vunpack.c.l.b16 %v56
  %v146 = vunpack.c.l.b16 %v57
  %v147 = vunpack.c.l.b16 %v58
  %v148 = vunpack.c.l.b16 %v59
  %v149 = vunpack.c.l.b16 %v60
  %v150 = vunpack.c.l.b16 %v61
  %v151 = vunpack.c.l.b16 %v62
  %v152 = vunpack.c.l.b16 %v63
  %v153 = vunpack.c.l.b16 %v64
  %v154 = vunpack.c.l.b16 %v65
  %v155 = vunpack.c.l.b16 %v66
  %v156 = vunpack.c.l.b16 %v67
  %v157 = vunpack.c.l.b16 %v68
  %v158 = vunpack.c.l.b16 %v69
  %v159 = vpack.c.b16 %v120, %v119
  %v160 = vpack.c.b16 %v122, %v121
  %v161 = vpack.c.b16 %v124, %v123
  %v162 = vpack.c.b16 %v126, %v125
  %v163 = vpack.c.b16 %v128, %v127
  %v164 = vpack.c.b16 %v130, %v129
  %v165 = vpack.c.b16 %v132, %v131
  %v166 = vpack.c.b16 %v134, %v133
  %v167 = vpack.c.b16 %v136, %v135
  %v168 = vpack.c.b16 %v138, %v137
  %v169 = vpack.c.b16 %v140, %v139
  %v170 = vpack.c.b16 %v142, %v141
  %v171 = vpack.c.b16 %v144, %v143
  %v172 = vpack.c.b16 %v146, %v145
  %v173 = vpack.c.b16 %v148, %v147
  %v174 = vpack.c.b16 %v150, %v149
  %v175 = vpack.c.b16 %v152, %v151
  %v176 = vpack.c.b16 %v154, %v153
  %v177 = vpack.c.b16 %v156, %v155
  %v178 = vpack.c.b16 %v158, %v157
  %v181 = vunpack.c.l.b16 %v70
  %v182 = vunpack.c.l.b16 %v71
  %v183 = vpack.c.b16 %v182, %v181
  %vm185 = vcmask 130048
  %v187 = vsel %vm185, %v159, 0
  %v190 = vsel %vm185, %v160, 0
  %v193 = vsel %vm185, %v161, 0
  %v196 = vsel %vm185, %v162, 0
  %v199 = vsel %vm185, %v163, 0
  %v202 = vsel %vm185, %v164, 0
  %v205 = vsel %vm185, %v165, 0
  %v208 = vsel %vm185, %v166, 0
  %v211 = vsel %vm185, %v167, 0
  %v214 = vsel %vm185, %v168, 0
  %v217 = vsel %vm185, %v169, 0
  %v220 = vsel %vm185, %v170, 0
  %v223 = vsel %vm185, %v171, 0
  %v226 = vsel %vm185, %v172, 0
  %v229 = vsel %vm185, %v173, 0
  %v232 = vsel %vm185, %v174, 0
  %v235 = vsel %vm185, %v175, 0
  %v238 = vsel %vm185, %v176, 0
  %v241 = vsel %vm185, %v177, 0
  %v244 = vsel %vm185, %v178, 0
  %246 = vmatprep.subr.bf16.mxu0 0
  %247 = vmatpush1.bf16.msra.mxu0 %v183
  %248 = vmatprep.subr.bf16.mxu0 0
  %249 = vmatpush1.bf16.msra.mxu0 0
  %250 = vmatprep.subr.bf16.mxu0 0
  %251 = vmatpush1.bf16.msra.mxu0 0
  %252 = vmatprep.subr.bf16.mxu0 0
  %253 = vmatpush1.bf16.msra.mxu0 0
  %254 = vmatprep.subr.bf16.mxu0 0
  %255 = vmatpush1.bf16.msra.mxu0 0
  %256 = vmatprep.subr.bf16.mxu0 0
  %257 = vmatpush1.bf16.msra.mxu0 0
  %258 = vmatprep.subr.bf16.mxu0 0
  %259 = vmatpush1.bf16.msra.mxu0 0
  %260 = vmatprep.subr.bf16.mxu0 0
  %261 = vmatpush1.bf16.msra.mxu0 0
  %262 = vmatprep.subr.bf16.mxu0 0
  %263 = vmatpush1.bf16.msra.mxu0 0
  %264 = vmatprep.subr.bf16.mxu0 0
  %265 = vmatpush1.bf16.msra.mxu0 0
  %266 = vmatprep.subr.bf16.mxu0 0
  %267 = vmatpush1.bf16.msra.mxu0 0
  %268 = vmatprep.subr.bf16.mxu0 0
  %269 = vmatpush1.bf16.msra.mxu0 0
  %270 = vmatprep.subr.bf16.mxu0 0
  %271 = vmatpush1.bf16.msra.mxu0 0
  %272 = vmatprep.subr.bf16.mxu0 0
  %273 = vmatpush1.bf16.msra.mxu0 0
  %274 = vmatprep.subr.bf16.mxu0 0
  %275 = vmatpush1.bf16.msra.mxu0 0
  %276 = vmatprep.subr.bf16.mxu0 0
  %277 = vmatpush1.bf16.msra.mxu0 0
  %278 = vmatprep.mubr.bf16.mxu0 0
  %279 = vmatmul.mubr.bf16.gmra.mrb[0].mxu0 %v187
  %v280 = vpop.f32.mrb[0].mxu0
  %v281 = vadd.f32 %v77, %v280
  %v282 = vpop.f32.mrb[0].mxu0
  %v283 = vpop.f32.mrb[0].mxu0
  %v284 = vadd.f32 %v77, %v283
  %v285 = vpop.f32.mrb[0].mxu0
  %286 = vmatprep.mubr.bf16.mxu0 0
  %287 = vmatmul.mubr.bf16.gmra.mrb[0].mxu0 %v190
  %v288 = vpop.f32.mrb[0].mxu0
  %v289 = vadd.f32 %v77, %v288
  %v290 = vpop.f32.mrb[0].mxu0
  %v291 = vpop.f32.mrb[0].mxu0
  %v292 = vadd.f32 %v77, %v291
  %v293 = vpop.f32.mrb[0].mxu0
  %294 = vmatprep.mubr.bf16.mxu0 0
  %295 = vmatmul.mubr.bf16.gmra.mrb[0].mxu0 %v193
  %v296 = vpop.f32.mrb[0].mxu0
  %v297 = vadd.f32 %v77, %v296
  %v298 = vpop.f32.mrb[0].mxu0
  %v299 = vpop.f32.mrb[0].mxu0
  %v300 = vadd.f32 %v77, %v299
  %v301 = vpop.f32.mrb[0].mxu0
  %302 = vmatprep.mubr.bf16.mxu0 0
  %303 = vmatmul.mubr.bf16.gmra.mrb[0].mxu0 %v196
  %v304 = vpop.f32.mrb[0].mxu0
  %v305 = vadd.f32 %v77, %v304
  %v306 = vpop.f32.mrb[0].mxu0
  %v307 = vpop.f32.mrb[0].mxu0
  %v308 = vadd.f32 %v77, %v307
  %v309 = vpop.f32.mrb[0].mxu0
  %310 = vmatprep.mubr.bf16.mxu0 0
  %311 = vmatmul.mubr.bf16.gmra.mrb[0].mxu0 %v199
  %v312 = vpop.f32.mrb[0].mxu0
  %v313 = vadd.f32 %v77, %v312
  %v314 = vpop.f32.mrb[0].mxu0
  %v315 = vpop.f32.mrb[0].mxu0
  %v316 = vadd.f32 %v77, %v315
  %v317 = vpop.f32.mrb[0].mxu0
  %318 = vmatprep.mubr.bf16.mxu0 0
  %319 = vmatmul.mubr.bf16.gmra.mrb[0].mxu0 %v202
  %v320 = vpop.f32.mrb[0].mxu0
  %v321 = vadd.f32 %v77, %v320
  %v322 = vpop.f32.mrb[0].mxu0
  %v323 = vpop.f32.mrb[0].mxu0
  %v324 = vadd.f32 %v77, %v323
  %v325 = vpop.f32.mrb[0].mxu0
  %326 = vmatprep.mubr.bf16.mxu0 0
  %327 = vmatmul.mubr.bf16.gmra.mrb[0].mxu0 %v205
  %v328 = vpop.f32.mrb[0].mxu0
  %v329 = vadd.f32 %v77, %v328
  %v330 = vpop.f32.mrb[0].mxu0
  %v331 = vpop.f32.mrb[0].mxu0
  %v332 = vadd.f32 %v77, %v331
  %v333 = vpop.f32.mrb[0].mxu0
  %334 = vmatprep.mubr.bf16.mxu0 0
  %335 = vmatmul.mubr.bf16.gmra.mrb[0].mxu0 %v208
  %v336 = vpop.f32.mrb[0].mxu0
  %v337 = vadd.f32 %v77, %v336
  %v338 = vpop.f32.mrb[0].mxu0
  %v339 = vpop.f32.mrb[0].mxu0
  %v340 = vadd.f32 %v77, %v339
  %v341 = vpop.f32.mrb[0].mxu0
  %342 = vmatprep.mubr.bf16.mxu0 0
  %343 = vmatmul.mubr.bf16.gmra.mrb[0].mxu0 %v211
  %v344 = vpop.f32.mrb[0].mxu0
  %v345 = vadd.f32 %v77, %v344
  %v346 = vpop.f32.mrb[0].mxu0
  %v347 = vpop.f32.mrb[0].mxu0
  %v348 = vadd.f32 %v77, %v347
  %v349 = vpop.f32.mrb[0].mxu0
  %350 = vmatprep.mubr.bf16.mxu0 0
  %351 = vmatmul.mubr.bf16.gmra.mrb[0].mxu0 %v214
  %v352 = vpop.f32.mrb[0].mxu0
  %v353 = vadd.f32 %v77, %v352
  %v354 = vpop.f32.mrb[0].mxu0
  %v355 = vpop.f32.mrb[0].mxu0
  %v356 = vadd.f32 %v77, %v355
  %v357 = vpop.f32.mrb[0].mxu0
  %358 = vmatprep.mubr.bf16.mxu0 0
  %359 = vmatmul.mubr.bf16.gmra.mrb[0].mxu0 %v217
  %v360 = vpop.f32.mrb[0].mxu0
  %v361 = vadd.f32 %v77, %v360
  %v362 = vpop.f32.mrb[0].mxu0
  %v363 = vpop.f32.mrb[0].mxu0
  %v364 = vadd.f32 %v77, %v363
  %v365 = vpop.f32.mrb[0].mxu0
  %366 = vmatprep.mubr.bf16.mxu0 0
  %367 = vmatmul.mubr.bf16.gmra.mrb[0].mxu0 %v220
  %v368 = vpop.f32.mrb[0].mxu0
  %v369 = vadd.f32 %v77, %v368
  %v370 = vpop.f32.mrb[0].mxu0
  %v371 = vpop.f32.mrb[0].mxu0
  %v372 = vadd.f32 %v77, %v371
  %v373 = vpop.f32.mrb[0].mxu0
  %374 = vmatprep.mubr.bf16.mxu0 0
  %375 = vmatmul.mubr.bf16.gmra.mrb[0].mxu0 %v223
  %v376 = vpop.f32.mrb[0].mxu0
  %v377 = vadd.f32 %v77, %v376
  %v378 = vpop.f32.mrb[0].mxu0
  %v379 = vpop.f32.mrb[0].mxu0
  %v380 = vadd.f32 %v77, %v379
  %v381 = vpop.f32.mrb[0].mxu0
  %382 = vmatprep.mubr.bf16.mxu0 0
  %383 = vmatmul.mubr.bf16.gmra.mrb[0].mxu0 %v226
  %v384 = vpop.f32.mrb[0].mxu0
  %v385 = vadd.f32 %v77, %v384
  %v386 = vpop.f32.mrb[0].mxu0
  %v387 = vpop.f32.mrb[0].mxu0
  %v388 = vadd.f32 %v77, %v387
  %v389 = vpop.f32.mrb[0].mxu0
  %390 = vmatprep.mubr.bf16.mxu0 0
  %391 = vmatmul.mubr.bf16.gmra.mrb[0].mxu0 %v229
  %v392 = vpop.f32.mrb[0].mxu0
  %v393 = vadd.f32 %v77, %v392
  %v394 = vpop.f32.mrb[0].mxu0
  %v395 = vpop.f32.mrb[0].mxu0
  %v396 = vadd.f32 %v77, %v395
  %v397 = vpop.f32.mrb[0].mxu0
  %398 = vmatprep.mubr.bf16.mxu0 0
  %399 = vmatmul.mubr.bf16.gmra.mrb[0].mxu0 %v232
  %v400 = vpop.f32.mrb[0].mxu0
  %v401 = vadd.f32 %v77, %v400
  %v402 = vpop.f32.mrb[0].mxu0
  %v403 = vpop.f32.mrb[0].mxu0
  %v404 = vadd.f32 %v77, %v403
  %v405 = vpop.f32.mrb[0].mxu0
  %406 = vmatprep.mubr.bf16.mxu0 0
  %407 = vmatmul.mubr.bf16.gmra.mrb[0].mxu0 %v235
  %v408 = vpop.f32.mrb[0].mxu0
  %v409 = vadd.f32 %v77, %v408
  %v410 = vpop.f32.mrb[0].mxu0
  %v411 = vpop.f32.mrb[0].mxu0
  %v412 = vadd.f32 %v77, %v411
  %v413 = vpop.f32.mrb[0].mxu0
  %414 = vmatprep.mubr.bf16.mxu0 0
  %415 = vmatmul.mubr.bf16.gmra.mrb[0].mxu0 %v238
  %v416 = vpop.f32.mrb[0].mxu0
  %v417 = vadd.f32 %v77, %v416
  %v418 = vpop.f32.mrb[0].mxu0
  %v419 = vpop.f32.mrb[0].mxu0
  %v420 = vadd.f32 %v77, %v419
  %v421 = vpop.f32.mrb[0].mxu0
  %422 = vmatprep.mubr.bf16.mxu0 0
  %423 = vmatmul.mubr.bf16.gmra.mrb[0].mxu0 %v241
  %v424 = vpop.f32.mrb[0].mxu0
  %v425 = vadd.f32 %v77, %v424
  %v426 = vpop.f32.mrb[0].mxu0
  %v427 = vpop.f32.mrb[0].mxu0
  %v428 = vadd.f32 %v77, %v427
  %v429 = vpop.f32.mrb[0].mxu0
  %430 = vmatprep.mubr.bf16.mxu0 0
  %431 = vmatmul.mubr.bf16.gmra.mrb[0].mxu0 %v244
  %v432 = vpop.f32.mrb[0].mxu0
  %v433 = vadd.f32 %v77, %v432
  %v434 = vpop.f32.mrb[0].mxu0
  %v435 = vpop.f32.mrb[0].mxu0
  %v436 = vadd.f32 %v77, %v435
  %v437 = vpop.f32.mrb[0].mxu0
  %438 = vdwg.mxu0
  %439 = vst [vmem:[#allocation2] sm:$0xff] %v281
  %440 = vst [vmem:[#allocation2 + $0x8] sm:$0xff] %v284
  %441 = vst [vmem:[#allocation2 + $0x10] sm:$0xff] %v289
  %442 = vst [vmem:[#allocation2 + $0x18] sm:$0xff] %v292
  %443 = vst [vmem:[#allocation2 + $0x20] sm:$0xff] %v297
  %444 = vst [vmem:[#allocation2 + $0x28] sm:$0xff] %v300
  %445 = vst [vmem:[#allocation2 + $0x30] sm:$0xff] %v305
  %446 = vst [vmem:[#allocation2 + $0x38] sm:$0xff] %v308
  %447 = vst [vmem:[#allocation2 + $0x40] sm:$0xff] %v313
  %448 = vst [vmem:[#allocation2 + $0x48] sm:$0xff] %v316
  %449 = vst [vmem:[#allocation2 + $0x50] sm:$0xff] %v321
  %450 = vst [vmem:[#allocation2 + $0x58] sm:$0xff] %v324
  %451 = vst [vmem:[#allocation2 + $0x60] sm:$0xff] %v329
  %452 = vst [vmem:[#allocation2 + $0x68] sm:$0xff] %v332
  %453 = vst [vmem:[#allocation2 + $0x70] sm:$0xff] %v337
  %454 = vst [vmem:[#allocation2 + $0x78] sm:$0xff] %v340
  %455 = vst [vmem:[#allocation2 + $0x80] sm:$0xff] %v345
  %456 = vst [vmem:[#allocation2 + $0x88] sm:$0xff] %v348
  %457 = vst [vmem:[#allocation2 + $0x90] sm:$0xff] %v353
  %458 = vst [vmem:[#allocation2 + $0x98] sm:$0xff] %v356
  %459 = vst [vmem:[#allocation2 + $0xa0] sm:$0xff] %v361
  %460 = vst [vmem:[#allocation2 + $0xa8] sm:$0xff] %v364
  %461 = vst [vmem:[#allocation2 + $0xb0] sm:$0xff] %v369
  %462 = vst [vmem:[#allocation2 + $0xb8] sm:$0xff] %v372
  %463 = vst [vmem:[#allocation2 + $0xc0] sm:$0xff] %v377
  %464 = vst [vmem:[#allocation2 + $0xc8] sm:$0xff] %v380
  %465 = vst [vmem:[#allocation2 + $0xd0] sm:$0xff] %v385
  %466 = vst [vmem:[#allocation2 + $0xd8] sm:$0xff] %v388
  %467 = vst [vmem:[#allocation2 + $0xe0] sm:$0xff] %v393
  %468 = vst [vmem:[#allocation2 + $0xe8] sm:$0xff] %v396
  %469 = vst [vmem:[#allocation2 + $0xf0] sm:$0xff] %v401
  %470 = vst [vmem:[#allocation2 + $0xf8] sm:$0xff] %v404
  %471 = vst [vmem:[#allocation2 + $0x100] sm:$0xff] %v409
  %472 = vst [vmem:[#allocation2 + $0x108] sm:$0xff] %v412
  %473 = vst [vmem:[#allocation2 + $0x110] sm:$0xff] %v417
  %474 = vst [vmem:[#allocation2 + $0x118] sm:$0xff] %v420
  %475 = vst [vmem:[#allocation2 + $0x120] sm:$0xff] %v425
  %476 = vst [vmem:[#allocation2 + $0x128] sm:$0xff] %v428
  %477 = vst [vmem:[#allocation2 + $0x130] sm:$0xff] %v433
  %478 = vst [vmem:[#allocation2 + $0x138] sm:$0xff] %v436
  %v479 = vld [vmem:[%s2] sm:$0xf]
  %v480 = vld [vmem:[%s2 + $0x4] sm:$0xf]
  %v481 = vld [vmem:[%s2 + $0x8] sm:$0xf]
  %v482 = vld [vmem:[%s2 + $0xc] sm:$0xf]
  %v483 = vld [vmem:[#allocation2] sm:$0xff]
  %v484 = vld [vmem:[#allocation2 + $0x8] sm:$0xff]
  %v489 = vunpack.c.l.b16 %v479
  %v490 = vunpack.c.l.b16 %v480
  %v491 = vunpack.c.l.b16 %v481
  %v492 = vunpack.c.l.b16 %v482
  %v493 = vpack.c.b16 %v490, %v489
  %v494 = vpack.c.b16 %v492, %v491
  %vm497 = vcmask 261120
  %v499 = vsel %vm497, 0, 0
  %501 = vmatprep.subr.bf16.mxu0 0
  %502 = vmatpush1.bf16.msra.mxu0 %v493
  %503 = vmatprep.subr.bf16.mxu0 0
  %504 = vmatpush1.bf16.msra.mxu0 %v494
  %505 = vmatprep.subr.bf16.mxu0 0
  %506 = vmatpush1.bf16.msra.mxu0 0
  %507 = vmatprep.subr.bf16.mxu0 0
  %508 = vmatpush1.bf16.msra.mxu0 0
  %509 = vmatprep.subr.bf16.mxu0 0
  %510 = vmatpush1.bf16.msra.mxu0 0
  %511 = vmatprep.subr.bf16.mxu0 0
  %512 = vmatpush1.bf16.msra.mxu0 0
  %513 = vmatprep.subr.bf16.mxu0 0
  %514 = vmatpush1.bf16.msra.mxu0 0
  %515 = vmatprep.subr.bf16.mxu0 0
  %516 = vmatpush1.bf16.msra.mxu0 0
  %517 = vmatprep.subr.bf16.mxu0 0
  %518 = vmatpush1.bf16.msra.mxu0 0
  %519 = vmatprep.subr.bf16.mxu0 0
  %520 = vmatpush1.bf16.msra.mxu0 0
  %521 = vmatprep.subr.bf16.mxu0 0
  %522 = vmatpush1.bf16.msra.mxu0 0
  %523 = vmatprep.subr.bf16.mxu0 0
  %524 = vmatpush1.bf16.msra.mxu0 0
  %525 = vmatprep.subr.bf16.mxu0 0
  %526 = vmatpush1.bf16.msra.mxu0 0
  %527 = vmatprep.subr.bf16.mxu0 0
  %528 = vmatpush1.bf16.msra.mxu0 0
  %529 = vmatprep.subr.bf16.mxu0 0
  %530 = vmatpush1.bf16.msra.mxu0 0
  %531 = vmatprep.subr.bf16.mxu0 0
  %532 = vmatpush1.bf16.msra.mxu0 0
  %533 = vmatprep.mubr.bf16.mxu0 0
  %534 = vmatmul.mubr.bf16.gmra.mrb[0].mxu0 %v499
  %v535 = vpop.f32.mrb[0].mxu0
  %v536 = vadd.f32 0.0, %v535
  %v537 = vpop.f32.mrb[0].mxu0
  %v538 = vpop.f32.mrb[0].mxu0
  %v539 = vadd.f32 0.0, %v538
  %v540 = vpop.f32.mrb[0].mxu0
  %541 = vdwg.mxu0
  %v542 = vadd.f32 %v483, %v536
  %v543 = vadd.f32 %v484, %v539
  %v544 = vxor.u32 %v542, 2147483648
  %v545 = vxor.u32 %v543, 2147483648
  %v546 = vmul.f32 %v544, 1.442695
  %v547 = vpow.pop %v546
  %v548 = vmul.f32 %v545, 1.442695
  %v549 = vpow.pop %v548
  %v550 = vadd.f32 %v547, 1.0
  %v551 = vadd.f32 %v549, 1.0
  %v552 = vrcp.pop %v550
  %v553 = vmul.f32 1.0, %v552
  %v554 = vrcp.pop %v551
  %v555 = vmul.f32 1.0, %v554
  %v556 = vtanh.pop %v542
  %v557 = vtanh.pop %v543
  %v558 = vmul.f32 %v553, 0.0
  %v559 = vmul.f32 %v555, 0.0
  %562 = vrot.lane.b32.xlu0 %v556, 64
  %v563 = vpop.permute.xlu0 %562
  %564 = vrot.lane.b32.xlu0 %v557, 64
  %v565 = vpop.permute.xlu0 %564
  %v568 = vmul.f32 %v553, %v563
  %v569 = vmul.f32 %v555, %v565
  %572 = vrot.lane.b32.xlu0 %v568, 32
  %v573 = vpop.permute.xlu0 %572
  %574 = vrot.lane.b32.xlu0 %v569, 32
  %v575 = vpop.permute.xlu0 %574
  %v578 = vadd.f32 %v558, %v573
  %v579 = vadd.f32 %v559, %v575
  %v580 = vtanh.pop %v578
  %v581 = vtanh.pop %v579
  %584 = vrot.lane.b32.xlu0 %v580, 64
  %v585 = vpop.permute.xlu0 %584
  %586 = vrot.lane.b32.xlu0 %v581, 64
  %v587 = vpop.permute.xlu0 %586
  %v590 = vmul.f32 %v553, %v585
  %v591 = vmul.f32 %v555, %v587
  %s592 = scalar_lea.vmem [#allocation2], 16
  %v593 = vld [vmem:[%s592] sm:$0xff]
  %v594 = vld [vmem:[%s592 + $0x8] sm:$0xff]
  %v595 = vpack.c.bf16 %v591, %v590
  %597 = vrot.lane.b32.xlu0 %v595, 32
  %v598 = vpop.permute.xlu0 %597
  %v600 = vsel %vm497, %v598, 0
  %602 = vmatprep.subr.bf16.mxu0 0
  %603 = vmatpush1.bf16.msra.mxu0 %v493
  %604 = vmatprep.subr.bf16.mxu0 0
  %605 = vmatpush1.bf16.msra.mxu0 %v494
  %606 = vmatprep.subr.bf16.mxu0 0
  %607 = vmatpush1.bf16.msra.mxu0 0
  %608 = vmatprep.subr.bf16.mxu0 0
  %609 = vmatpush1.bf16.msra.mxu0 0
  %610 = vmatprep.subr.bf16.mxu0 0
  %611 = vmatpush1.bf16.msra.mxu0 0
  %612 = vmatprep.subr.bf16.mxu0 0
  %613 = vmatpush1.bf16.msra.mxu0 0
  %614 = vmatprep.subr.bf16.mxu0 0
  %615 = vmatpush1.bf16.msra.mxu0 0
  %616 = vmatprep.subr.bf16.mxu0 0
  %617 = vmatpush1.bf16.msra.mxu0 0
  %618 = vmatprep.subr.bf16.mxu0 0
  %619 = vmatpush1.bf16.msra.mxu0 0
  %620 = vmatprep.subr.bf16.mxu0 0
  %621 = vmatpush1.bf16.msra.mxu0 0
  %622 = vmatprep.subr.bf16.mxu0 0
  %623 = vmatpush1.bf16.msra.mxu0 0
  %624 = vmatprep.subr.bf16.mxu0 0
  %625 = vmatpush1.bf16.msra.mxu0 0
  %626 = vmatprep.subr.bf16.mxu0 0
  %627 = vmatpush1.bf16.msra.mxu0 0
  %628 = vmatprep.subr.bf16.mxu0 0
  %629 = vmatpush1.bf16.msra.mxu0 0
  %630 = vmatprep.subr.bf16.mxu0 0
  %631 = vmatpush1.bf16.msra.mxu0 0
  %632 = vmatprep.subr.bf16.mxu0 0
  %633 = vmatpush1.bf16.msra.mxu0 0
  %634 = vmatprep.mubr.bf16.mxu0 0
  %635 = vmatmul.mubr.bf16.gmra.mrb[0].mxu0 %v600
  %v636 = vpop.f32.mrb[0].mxu0
  %v637 = vadd.f32 0.0, %v636
  %v638 = vpop.f32.mrb[0].mxu0
  %v639 = vpop.f32.mrb[0].mxu0
  %v640 = vadd.f32 0.0, %v639
  %v641 = vpop.f32.mrb[0].mxu0
  %642 = vdwg.mxu0
  %v643 = vadd.f32 %v593, %v637
  %v644 = vadd.f32 %v594, %v640
  %v645 = vxor.u32 %v643, 2147483648
  %v646 = vxor.u32 %v644, 2147483648
  %v647 = vmul.f32 %v645, 1.442695
  %v648 = vpow.pop %v647
  %v649 = vmul.f32 %v646, 1.442695
  %v650 = vpow.pop %v649
  %v651 = vadd.f32 %v648, 1.0
  %v652 = vadd.f32 %v650, 1.0
  %v653 = vrcp.pop %v651
  %v654 = vmul.f32 1.0, %v653
  %v655 = vrcp.pop %v652
  %v656 = vmul.f32 1.0, %v655
  %v657 = vtanh.pop %v643
  %v658 = vtanh.pop %v644
  %v659 = vmul.f32 %v654, %v578
  %v660 = vmul.f32 %v656, %v579
  %663 = vrot.lane.b32.xlu0 %v657, 64
  %v664 = vpop.permute.xlu0 %663
  %665 = vrot.lane.b32.xlu0 %v658, 64
  %v666 = vpop.permute.xlu0 %665
  %v669 = vmul.f32 %v654, %v664
  %v670 = vmul.f32 %v656, %v666
  %673 = vrot.lane.b32.xlu0 %v669, 32
  %v674 = vpop.permute.xlu0 %673
  %675 = vrot.lane.b32.xlu0 %v670, 32
  %v676 = vpop.permute.xlu0 %675
  %v679 = vadd.f32 %v659, %v674
  %v680 = vadd.f32 %v660, %v676
  %v681 = vtanh.pop %v679
  %v682 = vtanh.pop %v680
  %685 = vrot.lane.b32.xlu0 %v681, 64
  %v686 = vpop.permute.xlu0 %685
  %687 = vrot.lane.b32.xlu0 %v682, 64
  %v688 = vpop.permute.xlu0 %687
  %v691 = vmul.f32 %v654, %v686
  %v692 = vmul.f32 %v656, %v688
  %s693 = scalar_lea.vmem [#allocation2], 32
  %v694 = vld [vmem:[%s693] sm:$0xff]
  %v695 = vld [vmem:[%s693 + $0x8] sm:$0xff]
  %v696 = vpack.c.bf16 %v692, %v691
  %698 = vrot.lane.b32.xlu0 %v696, 32
  %v699 = vpop.permute.xlu0 %698
  %v701 = vsel %vm497, %v699, 0
  %703 = vmatprep.subr.bf16.mxu0 0
  %704 = vmatpush1.bf16.msra.mxu0 %v493
  %705 = vmatprep.subr.bf16.mxu0 0
  %706 = vmatpush1.bf16.msra.mxu0 %v494
  %707 = vmatprep.subr.bf16.mxu0 0
  %708 = vmatpush1.bf16.msra.mxu0 0
  %709 = vmatprep.subr.bf16.mxu0 0
  %710 = vmatpush1.bf16.msra.mxu0 0
  %711 = vmatprep.subr.bf16.mxu0 0
  %712 = vmatpush1.bf16.msra.mxu0 0
  %713 = vmatprep.subr.bf16.mxu0 0
  %714 = vmatpush1.bf16.msra.mxu0 0
  %715 = vmatprep.subr.bf16.mxu0 0
  %716 = vmatpush1.bf16.msra.mxu0 0
  %717 = vmatprep.subr.bf16.mxu0 0
  %718 = vmatpush1.bf16.msra.mxu0 0
  %719 = vmatprep.subr.bf16.mxu0 0
  %720 = vmatpush1.bf16.msra.mxu0 0
  %721 = vmatprep.subr.bf16.mxu0 0
  %722 = vmatpush1.bf16.msra.mxu0 0
  %723 = vmatprep.subr.bf16.mxu0 0
  %724 = vmatpush1.bf16.msra.mxu0 0
  %725 = vmatprep.subr.bf16.mxu0 0
  %726 = vmatpush1.bf16.msra.mxu0 0
  %727 = vmatprep.subr.bf16.mxu0 0
  %728 = vmatpush1.bf16.msra.mxu0 0
  %729 = vmatprep.subr.bf16.mxu0 0
  %730 = vmatpush1.bf16.msra.mxu0 0
  %731 = vmatprep.subr.bf16.mxu0 0
  %732 = vmatpush1.bf16.msra.mxu0 0
  %733 = vmatprep.subr.bf16.mxu0 0
  %734 = vmatpush1.bf16.msra.mxu0 0
  %735 = vmatprep.mubr.bf16.mxu0 0
  %736 = vmatmul.mubr.bf16.gmra.mrb[0].mxu0 %v701
  %v737 = vpop.f32.mrb[0].mxu0
  %v738 = vadd.f32 0.0, %v737
  %v739 = vpop.f32.mrb[0].mxu0
  %v740 = vpop.f32.mrb[0].mxu0
  %v741 = vadd.f32 0.0, %v740
  %v742 = vpop.f32.mrb[0].mxu0
  %743 = vdwg.mxu0
  %v744 = vadd.f32 %v694, %v738
  %v745 = vadd.f32 %v695, %v741
  %v746 = vxor.u32 %v744, 2147483648
  %v747 = vxor.u32 %v745, 2147483648
  %v748 = vmul.f32 %v746, 1.442695
  %v749 = vpow.pop %v748
  %v750 = vmul.f32 %v747, 1.442695
  %v751 = vpow.pop %v750
  %v752 = vadd.f32 %v749, 1.0
  %v753 = vadd.f32 %v751, 1.0
  %v754 = vrcp.pop %v752
  %v755 = vmul.f32 1.0, %v754
  %v756 = vrcp.pop %v753
  %v757 = vmul.f32 1.0, %v756
  %v758 = vtanh.pop %v744
  %v759 = vtanh.pop %v745
  %v760 = vmul.f32 %v755, %v679
  %v761 = vmul.f32 %v757, %v680
  %764 = vrot.lane.b32.xlu0 %v758, 64
  %v765 = vpop.permute.xlu0 %764
  %766 = vrot.lane.b32.xlu0 %v759, 64
  %v767 = vpop.permute.xlu0 %766
  %v770 = vmul.f32 %v755, %v765
  %v771 = vmul.f32 %v757, %v767
  %774 = vrot.lane.b32.xlu0 %v770, 32
  %v775 = vpop.permute.xlu0 %774
  %776 = vrot.lane.b32.xlu0 %v771, 32
  %v777 = vpop.permute.xlu0 %776
  %v780 = vadd.f32 %v760, %v775
  %v781 = vadd.f32 %v761, %v777
  %v782 = vtanh.pop %v780
  %v783 = vtanh.pop %v781
  %786 = vrot.lane.b32.xlu0 %v782, 64
  %v787 = vpop.permute.xlu0 %786
  %788 = vrot.lane.b32.xlu0 %v783, 64
  %v789 = vpop.permute.xlu0 %788
  %v792 = vmul.f32 %v755, %v787
  %v793 = vmul.f32 %v757, %v789
  %s794 = scalar_lea.vmem [#allocation2], 48
  %v795 = vld [vmem:[%s794] sm:$0xff]
  %v796 = vld [vmem:[%s794 + $0x8] sm:$0xff]
  %v797 = vpack.c.bf16 %v793, %v792
  %799 = vrot.lane.b32.xlu0 %v797, 32
  %v800 = vpop.permute.xlu0 %799
  %v802 = vsel %vm497, %v800, 0
  %804 = vmatprep.subr.bf16.mxu0 0
  %805 = vmatpush1.bf16.msra.mxu0 %v493
  %806 = vmatprep.subr.bf16.mxu0 0
  %807 = vmatpush1.bf16.msra.mxu0 %v494
  %808 = vmatprep.subr.bf16.mxu0 0
  %809 = vmatpush1.bf16.msra.mxu0 0
  %810 = vmatprep.subr.bf16.mxu0 0
  %811 = vmatpush1.bf16.msra.mxu0 0
  %812 = vmatprep.subr.bf16.mxu0 0
  %813 = vmatpush1.bf16.msra.mxu0 0
  %814 = vmatprep.subr.bf16.mxu0 0
  %815 = vmatpush1.bf16.msra.mxu0 0
  %816 = vmatprep.subr.bf16.mxu0 0
  %817 = vmatpush1.bf16.msra.mxu0 0
  %818 = vmatprep.subr.bf16.mxu0 0
  %819 = vmatpush1.bf16.msra.mxu0 0
  %820 = vmatprep.subr.bf16.mxu0 0
  %821 = vmatpush1.bf16.msra.mxu0 0
  %822 = vmatprep.subr.bf16.mxu0 0
  %823 = vmatpush1.bf16.msra.mxu0 0
  %824 = vmatprep.subr.bf16.mxu0 0
  %825 = vmatpush1.bf16.msra.mxu0 0
  %826 = vmatprep.subr.bf16.mxu0 0
  %827 = vmatpush1.bf16.msra.mxu0 0
  %828 = vmatprep.subr.bf16.mxu0 0
  %829 = vmatpush1.bf16.msra.mxu0 0
  %830 = vmatprep.subr.bf16.mxu0 0
  %831 = vmatpush1.bf16.msra.mxu0 0
  %832 = vmatprep.subr.bf16.mxu0 0
  %833 = vmatpush1.bf16.msra.mxu0 0
  %834 = vmatprep.subr.bf16.mxu0 0
  %835 = vmatpush1.bf16.msra.mxu0 0
  %836 = vmatprep.mubr.bf16.mxu0 0
  %837 = vmatmul.mubr.bf16.gmra.mrb[0].mxu0 %v802
  %v838 = vpop.f32.mrb[0].mxu0
  %v839 = vadd.f32 0.0, %v838
  %v840 = vpop.f32.mrb[0].mxu0
  %v841 = vpop.f32.mrb[0].mxu0
  %v842 = vadd.f32 0.0, %v841
  %v843 = vpop.f32.mrb[0].mxu0
  %844 = vdwg.mxu0
  %v845 = vadd.f32 %v795, %v839
  %v846 = vadd.f32 %v796, %v842
  %v847 = vxor.u32 %v845, 2147483648
  %v848 = vxor.u32 %v846, 2147483648
  %v849 = vmul.f32 %v847, 1.442695
  %v850 = vpow.pop %v849
  %v851 = vmul.f32 %v848, 1.442695
  %v852 = vpow.pop %v851
  %v853 = vadd.f32 %v850, 1.0
  %v854 = vadd.f32 %v852, 1.0
  %v855 = vrcp.pop %v853
  %v856 = vmul.f32 1.0, %v855
  %v857 = vrcp.pop %v854
  %v858 = vmul.f32 1.0, %v857
  %v859 = vtanh.pop %v845
  %v860 = vtanh.pop %v846
  %v861 = vmul.f32 %v856, %v780
  %v862 = vmul.f32 %v858, %v781
  %865 = vrot.lane.b32.xlu0 %v859, 64
  %v866 = vpop.permute.xlu0 %865
  %867 = vrot.lane.b32.xlu0 %v860, 64
  %v868 = vpop.permute.xlu0 %867
  %v871 = vmul.f32 %v856, %v866
  %v872 = vmul.f32 %v858, %v868
  %875 = vrot.lane.b32.xlu0 %v871, 32
  %v876 = vpop.permute.xlu0 %875
  %877 = vrot.lane.b32.xlu0 %v872, 32
  %v878 = vpop.permute.xlu0 %877
  %v881 = vadd.f32 %v861, %v876
  %v882 = vadd.f32 %v862, %v878
  %v883 = vtanh.pop %v881
  %v884 = vtanh.pop %v882
  %887 = vrot.lane.b32.xlu0 %v883, 64
  %v888 = vpop.permute.xlu0 %887
  %889 = vrot.lane.b32.xlu0 %v884, 64
  %v890 = vpop.permute.xlu0 %889
  %v893 = vmul.f32 %v856, %v888
  %v894 = vmul.f32 %v858, %v890
  %s895 = scalar_lea.vmem [#allocation2], 64
  %v896 = vld [vmem:[%s895] sm:$0xff]
  %v897 = vld [vmem:[%s895 + $0x8] sm:$0xff]
  %v898 = vpack.c.bf16 %v894, %v893
  %900 = vrot.lane.b32.xlu0 %v898, 32
  %v901 = vpop.permute.xlu0 %900
  %v903 = vsel %vm497, %v901, 0
  %905 = vmatprep.subr.bf16.mxu0 0
  %906 = vmatpush1.bf16.msra.mxu0 %v493
  %907 = vmatprep.subr.bf16.mxu0 0
  %908 = vmatpush1.bf16.msra.mxu0 %v494
  %909 = vmatprep.subr.bf16.mxu0 0
  %910 = vmatpush1.bf16.msra.mxu0 0
  %911 = vmatprep.subr.bf16.mxu0 0
  %912 = vmatpush1.bf16.msra.mxu0 0
  %913 = vmatprep.subr.bf16.mxu0 0
  %914 = vmatpush1.bf16.msra.mxu0 0
  %915 = vmatprep.subr.bf16.mxu0 0
  %916 = vmatpush1.bf16.msra.mxu0 0
  %917 = vmatprep.subr.bf16.mxu0 0
  %918 = vmatpush1.bf16.msra.mxu0 0
  %919 = vmatprep.subr.bf16.mxu0 0
  %920 = vmatpush1.bf16.msra.mxu0 0
  %921 = vmatprep.subr.bf16.mxu0 0
  %922 = vmatpush1.bf16.msra.mxu0 0
  %923 = vmatprep.subr.bf16.mxu0 0
  %924 = vmatpush1.bf16.msra.mxu0 0
  %925 = vmatprep.subr.bf16.mxu0 0
  %926 = vmatpush1.bf16.msra.mxu0 0
  %927 = vmatprep.subr.bf16.mxu0 0
  %928 = vmatpush1.bf16.msra.mxu0 0
  %929 = vmatprep.subr.bf16.mxu0 0
  %930 = vmatpush1.bf16.msra.mxu0 0
  %931 = vmatprep.subr.bf16.mxu0 0
  %932 = vmatpush1.bf16.msra.mxu0 0
  %933 = vmatprep.subr.bf16.mxu0 0
  %934 = vmatpush1.bf16.msra.mxu0 0
  %935 = vmatprep.subr.bf16.mxu0 0
  %936 = vmatpush1.bf16.msra.mxu0 0
  %937 = vmatprep.mubr.bf16.mxu0 0
  %938 = vmatmul.mubr.bf16.gmra.mrb[0].mxu0 %v903
  %v939 = vpop.f32.mrb[0].mxu0
  %v940 = vadd.f32 0.0, %v939
  %v941 = vpop.f32.mrb[0].mxu0
  %v942 = vpop.f32.mrb[0].mxu0
  %v943 = vadd.f32 0.0, %v942
  %v944 = vpop.f32.mrb[0].mxu0
  %945 = vdwg.mxu0
  %v946 = vadd.f32 %v896, %v940
  %v947 = vadd.f32 %v897, %v943
  %v948 = vxor.u32 %v946, 2147483648
  %v949 = vxor.u32 %v947, 2147483648
  %v950 = vmul.f32 %v948, 1.442695
  %v951 = vpow.pop %v950
  %v952 = vmul.f32 %v949, 1.442695
  %v953 = vpow.pop %v952
  %v954 = vadd.f32 %v951, 1.0
  %v955 = vadd.f32 %v953, 1.0
  %v956 = vrcp.pop %v954
  %v957 = vmul.f32 1.0, %v956
  %v958 = vrcp.pop %v955
  %v959 = vmul.f32 1.0, %v958
  %v960 = vtanh.pop %v946
  %v961 = vtanh.pop %v947
  %v962 = vmul.f32 %v957, %v881
  %v963 = vmul.f32 %v959, %v882
  %966 = vrot.lane.b32.xlu0 %v960, 64
  %v967 = vpop.permute.xlu0 %966
  %968 = vrot.lane.b32.xlu0 %v961, 64
  %v969 = vpop.permute.xlu0 %968
  %v972 = vmul.f32 %v957, %v967
  %v973 = vmul.f32 %v959, %v969
  %976 = vrot.lane.b32.xlu0 %v972, 32
  %v977 = vpop.permute.xlu0 %976
  %978 = vrot.lane.b32.xlu0 %v973, 32
  %v979 = vpop.permute.xlu0 %978
  %v982 = vadd.f32 %v962, %v977
  %v983 = vadd.f32 %v963, %v979
  %v984 = vtanh.pop %v982
  %v985 = vtanh.pop %v983
  %988 = vrot.lane.b32.xlu0 %v984, 64
  %v989 = vpop.permute.xlu0 %988
  %990 = vrot.lane.b32.xlu0 %v985, 64
  %v991 = vpop.permute.xlu0 %990
  %v994 = vmul.f32 %v957, %v989
  %v995 = vmul.f32 %v959, %v991
  %s996 = scalar_lea.vmem [#allocation2], 80
  %v997 = vld [vmem:[%s996] sm:$0xff]
  %v998 = vld [vmem:[%s996 + $0x8] sm:$0xff]
  %v999 = vpack.c.bf16 %v995, %v994
  %1001 = vrot.lane.b32.xlu0 %v999, 32
  %v1002 = vpop.permute.xlu0 %1001
  %v1004 = vsel %vm497, %v1002, 0
  %1006 = vmatprep.subr.bf16.mxu0 0
  %1007 = vmatpush1.bf16.msra.mxu0 %v493
  %1008 = vmatprep.subr.bf16.mxu0 0
  %1009 = vmatpush1.bf16.msra.mxu0 %v494
  %1010 = vmatprep.subr.bf16.mxu0 0
  %1011 = vmatpush1.bf16.msra.mxu0 0
  %1012 = vmatprep.subr.bf16.mxu0 0
  %1013 = vmatpush1.bf16.msra.mxu0 0
  %1014 = vmatprep.subr.bf16.mxu0 0
  %1015 = vmatpush1.bf16.msra.mxu0 0
  %1016 = vmatprep.subr.bf16.mxu0 0
  %1017 = vmatpush1.bf16.msra.mxu0 0
  %1018 = vmatprep.subr.bf16.mxu0 0
  %1019 = vmatpush1.bf16.msra.mxu0 0
  %1020 = vmatprep.subr.bf16.mxu0 0
  %1021 = vmatpush1.bf16.msra.mxu0 0
  %1022 = vmatprep.subr.bf16.mxu0 0
  %1023 = vmatpush1.bf16.msra.mxu0 0
  %1024 = vmatprep.subr.bf16.mxu0 0
  %1025 = vmatpush1.bf16.msra.mxu0 0
  %1026 = vmatprep.subr.bf16.mxu0 0
  %1027 = vmatpush1.bf16.msra.mxu0 0
  %1028 = vmatprep.subr.bf16.mxu0 0
  %1029 = vmatpush1.bf16.msra.mxu0 0
  %1030 = vmatprep.subr.bf16.mxu0 0
  %1031 = vmatpush1.bf16.msra.mxu0 0
  %1032 = vmatprep.subr.bf16.mxu0 0
  %1033 = vmatpush1.bf16.msra.mxu0 0
  %1034 = vmatprep.subr.bf16.mxu0 0
  %1035 = vmatpush1.bf16.msra.mxu0 0
  %1036 = vmatprep.subr.bf16.mxu0 0
  %1037 = vmatpush1.bf16.msra.mxu0 0
  %1038 = vmatprep.mubr.bf16.mxu0 0
  %1039 = vmatmul.mubr.bf16.gmra.mrb[0].mxu0 %v1004
  %v1040 = vpop.f32.mrb[0].mxu0
  %v1041 = vadd.f32 0.0, %v1040
  %v1042 = vpop.f32.mrb[0].mxu0
  %v1043 = vpop.f32.mrb[0].mxu0
  %v1044 = vadd.f32 0.0, %v1043
  %v1045 = vpop.f32.mrb[0].mxu0
  %1046 = vdwg.mxu0
  %v1047 = vadd.f32 %v997, %v1041
  %v1048 = vadd.f32 %v998, %v1044
  %v1049 = vxor.u32 %v1047, 2147483648
  %v1050 = vxor.u32 %v1048, 2147483648
  %v1051 = vmul.f32 %v1049, 1.442695
  %v1052 = vpow.pop %v1051
  %v1053 = vmul.f32 %v1050, 1.442695
  %v1054 = vpow.pop %v1053
  %v1055 = vadd.f32 %v1052, 1.0
  %v1056 = vadd.f32 %v1054, 1.0
  %v1057 = vrcp.pop %v1055
  %v1058 = vmul.f32 1.0, %v1057
  %v1059 = vrcp.pop %v1056
  %v1060 = vmul.f32 1.0, %v1059
  %v1061 = vtanh.pop %v1047
  %v1062 = vtanh.pop %v1048
  %v1063 = vmul.f32 %v1058, %v982
  %v1064 = vmul.f32 %v1060, %v983
  %1067 = vrot.lane.b32.xlu0 %v1061, 64
  %v1068 = vpop.permute.xlu0 %1067
  %1069 = vrot.lane.b32.xlu0 %v1062, 64
  %v1070 = vpop.permute.xlu0 %1069
  %v1073 = vmul.f32 %v1058, %v1068
  %v1074 = vmul.f32 %v1060, %v1070
  %1077 = vrot.lane.b32.xlu0 %v1073, 32
  %v1078 = vpop.permute.xlu0 %1077
  %1079 = vrot.lane.b32.xlu0 %v1074, 32
  %v1080 = vpop.permute.xlu0 %1079
  %v1083 = vadd.f32 %v1063, %v1078
  %v1084 = vadd.f32 %v1064, %v1080
  %v1085 = vtanh.pop %v1083
  %v1086 = vtanh.pop %v1084
  %1089 = vrot.lane.b32.xlu0 %v1085, 64
  %v1090 = vpop.permute.xlu0 %1089
  %1091 = vrot.lane.b32.xlu0 %v1086, 64
  %v1092 = vpop.permute.xlu0 %1091
  %v1095 = vmul.f32 %v1058, %v1090
  %v1096 = vmul.f32 %v1060, %v1092
  %s1097 = scalar_lea.vmem [#allocation2], 96
  %v1098 = vld [vmem:[%s1097] sm:$0xff]
  %v1099 = vld [vmem:[%s1097 + $0x8] sm:$0xff]
  %v1100 = vpack.c.bf16 %v1096, %v1095
  %1102 = vrot.lane.b32.xlu0 %v1100, 32
  %v1103 = vpop.permute.xlu0 %1102
  %v1105 = vsel %vm497, %v1103, 0
  %1107 = vmatprep.subr.bf16.mxu0 0
  %1108 = vmatpush1.bf16.msra.mxu0 %v493
  %1109 = vmatprep.subr.bf16.mxu0 0
  %1110 = vmatpush1.bf16.msra.mxu0 %v494
  %1111 = vmatprep.subr.bf16.mxu0 0
  %1112 = vmatpush1.bf16.msra.mxu0 0
  %1113 = vmatprep.subr.bf16.mxu0 0
  %1114 = vmatpush1.bf16.msra.mxu0 0
  %1115 = vmatprep.subr.bf16.mxu0 0
  %1116 = vmatpush1.bf16.msra.mxu0 0
  %1117 = vmatprep.subr.bf16.mxu0 0
  %1118 = vmatpush1.bf16.msra.mxu0 0
  %1119 = vmatprep.subr.bf16.mxu0 0
  %1120 = vmatpush1.bf16.msra.mxu0 0
  %1121 = vmatprep.subr.bf16.mxu0 0
  %1122 = vmatpush1.bf16.msra.mxu0 0
  %1123 = vmatprep.subr.bf16.mxu0 0
  %1124 = vmatpush1.bf16.msra.mxu0 0
  %1125 = vmatprep.subr.bf16.mxu0 0
  %1126 = vmatpush1.bf16.msra.mxu0 0
  %1127 = vmatprep.subr.bf16.mxu0 0
  %1128 = vmatpush1.bf16.msra.mxu0 0
  %1129 = vmatprep.subr.bf16.mxu0 0
  %1130 = vmatpush1.bf16.msra.mxu0 0
  %1131 = vmatprep.subr.bf16.mxu0 0
  %1132 = vmatpush1.bf16.msra.mxu0 0
  %1133 = vmatprep.subr.bf16.mxu0 0
  %1134 = vmatpush1.bf16.msra.mxu0 0
  %1135 = vmatprep.subr.bf16.mxu0 0
  %1136 = vmatpush1.bf16.msra.mxu0 0
  %1137 = vmatprep.subr.bf16.mxu0 0
  %1138 = vmatpush1.bf16.msra.mxu0 0
  %1139 = vmatprep.mubr.bf16.mxu0 0
  %1140 = vmatmul.mubr.bf16.gmra.mrb[0].mxu0 %v1105
  %v1141 = vpop.f32.mrb[0].mxu0
  %v1142 = vadd.f32 0.0, %v1141
  %v1143 = vpop.f32.mrb[0].mxu0
  %v1144 = vpop.f32.mrb[0].mxu0
  %v1145 = vadd.f32 0.0, %v1144
  %v1146 = vpop.f32.mrb[0].mxu0
  %1147 = vdwg.mxu0
  %v1148 = vadd.f32 %v1098, %v1142
  %v1149 = vadd.f32 %v1099, %v1145
  %v1150 = vxor.u32 %v1148, 2147483648
  %v1151 = vxor.u32 %v1149, 2147483648
  %v1152 = vmul.f32 %v1150, 1.442695
  %v1153 = vpow.pop %v1152
  %v1154 = vmul.f32 %v1151, 1.442695
  %v1155 = vpow.pop %v1154
  %v1156 = vadd.f32 %v1153, 1.0
  %v1157 = vadd.f32 %v1155, 1.0
  %v1158 = vrcp.pop %v1156
  %v1159 = vmul.f32 1.0, %v1158
  %v1160 = vrcp.pop %v1157
  %v1161 = vmul.f32 1.0, %v1160
  %v1162 = vtanh.pop %v1148
  %v1163 = vtanh.pop %v1149
  %v1164 = vmul.f32 %v1159, %v1083
  %v1165 = vmul.f32 %v1161, %v1084
  %1168 = vrot.lane.b32.xlu0 %v1162, 64
  %v1169 = vpop.permute.xlu0 %1168
  %1170 = vrot.lane.b32.xlu0 %v1163, 64
  %v1171 = vpop.permute.xlu0 %1170
  %v1174 = vmul.f32 %v1159, %v1169
  %v1175 = vmul.f32 %v1161, %v1171
  %1178 = vrot.lane.b32.xlu0 %v1174, 32
  %v1179 = vpop.permute.xlu0 %1178
  %1180 = vrot.lane.b32.xlu0 %v1175, 32
  %v1181 = vpop.permute.xlu0 %1180
  %v1184 = vadd.f32 %v1164, %v1179
  %v1185 = vadd.f32 %v1165, %v1181
  %v1186 = vtanh.pop %v1184
  %v1187 = vtanh.pop %v1185
  %1190 = vrot.lane.b32.xlu0 %v1186, 64
  %v1191 = vpop.permute.xlu0 %1190
  %1192 = vrot.lane.b32.xlu0 %v1187, 64
  %v1193 = vpop.permute.xlu0 %1192
  %v1196 = vmul.f32 %v1159, %v1191
  %v1197 = vmul.f32 %v1161, %v1193
  %s1198 = scalar_lea.vmem [#allocation2], 112
  %v1199 = vld [vmem:[%s1198] sm:$0xff]
  %v1200 = vld [vmem:[%s1198 + $0x8] sm:$0xff]
  %v1201 = vpack.c.bf16 %v1197, %v1196
  %1203 = vrot.lane.b32.xlu0 %v1201, 32
  %v1204 = vpop.permute.xlu0 %1203
  %v1206 = vsel %vm497, %v1204, 0
  %1208 = vmatprep.subr.bf16.mxu0 0
  %1209 = vmatpush1.bf16.msra.mxu0 %v493
  %1210 = vmatprep.subr.bf16.mxu0 0
  %1211 = vmatpush1.bf16.msra.mxu0 %v494
  %1212 = vmatprep.subr.bf16.mxu0 0
  %1213 = vmatpush1.bf16.msra.mxu0 0
  %1214 = vmatprep.subr.bf16.mxu0 0
  %1215 = vmatpush1.bf16.msra.mxu0 0
  %1216 = vmatprep.subr.bf16.mxu0 0
  %1217 = vmatpush1.bf16.msra.mxu0 0
  %1218 = vmatprep.subr.bf16.mxu0 0
  %1219 = vmatpush1.bf16.msra.mxu0 0
  %1220 = vmatprep.subr.bf16.mxu0 0
  %1221 = vmatpush1.bf16.msra.mxu0 0
  %1222 = vmatprep.subr.bf16.mxu0 0
  %1223 = vmatpush1.bf16.msra.mxu0 0
  %1224 = vmatprep.subr.bf16.mxu0 0
  %1225 = vmatpush1.bf16.msra.mxu0 0
  %1226 = vmatprep.subr.bf16.mxu0 0
  %1227 = vmatpush1.bf16.msra.mxu0 0
  %1228 = vmatprep.subr.bf16.mxu0 0
  %1229 = vmatpush1.bf16.msra.mxu0 0
  %1230 = vmatprep.subr.bf16.mxu0 0
  %1231 = vmatpush1.bf16.msra.mxu0 0
  %1232 = vmatprep.subr.bf16.mxu0 0
  %1233 = vmatpush1.bf16.msra.mxu0 0
  %1234 = vmatprep.subr.bf16.mxu0 0
  %1235 = vmatpush1.bf16.msra.mxu0 0
  %1236 = vmatprep.subr.bf16.mxu0 0
  %1237 = vmatpush1.bf16.msra.mxu0 0
  %1238 = vmatprep.subr.bf16.mxu0 0
  %1239 = vmatpush1.bf16.msra.mxu0 0
  %1240 = vmatprep.mubr.bf16.mxu0 0
  %1241 = vmatmul.mubr.bf16.gmra.mrb[0].mxu0 %v1206
  %v1242 = vpop.f32.mrb[0].mxu0
  %v1243 = vadd.f32 0.0, %v1242
  %v1244 = vpop.f32.mrb[0].mxu0
  %v1245 = vpop.f32.mrb[0].mxu0
  %v1246 = vadd.f32 0.0, %v1245
  %v1247 = vpop.f32.mrb[0].mxu0
  %1248 = vdwg.mxu0
  %v1249 = vadd.f32 %v1199, %v1243
  %v1250 = vadd.f32 %v1200, %v1246
  %v1251 = vxor.u32 %v1249, 2147483648
  %v1252 = vxor.u32 %v1250, 2147483648
  %v1253 = vmul.f32 %v1251, 1.442695
  %v1254 = vpow.pop %v1253
  %v1255 = vmul.f32 %v1252, 1.442695
  %v1256 = vpow.pop %v1255
  %v1257 = vadd.f32 %v1254, 1.0
  %v1258 = vadd.f32 %v1256, 1.0
  %v1259 = vrcp.pop %v1257
  %v1260 = vmul.f32 1.0, %v1259
  %v1261 = vrcp.pop %v1258
  %v1262 = vmul.f32 1.0, %v1261
  %v1263 = vtanh.pop %v1249
  %v1264 = vtanh.pop %v1250
  %v1265 = vmul.f32 %v1260, %v1184
  %v1266 = vmul.f32 %v1262, %v1185
  %1269 = vrot.lane.b32.xlu0 %v1263, 64
  %v1270 = vpop.permute.xlu0 %1269
  %1271 = vrot.lane.b32.xlu0 %v1264, 64
  %v1272 = vpop.permute.xlu0 %1271
  %v1275 = vmul.f32 %v1260, %v1270
  %v1276 = vmul.f32 %v1262, %v1272
  %1279 = vrot.lane.b32.xlu0 %v1275, 32
  %v1280 = vpop.permute.xlu0 %1279
  %1281 = vrot.lane.b32.xlu0 %v1276, 32
  %v1282 = vpop.permute.xlu0 %1281
  %v1285 = vadd.f32 %v1265, %v1280
  %v1286 = vadd.f32 %v1266, %v1282
  %v1287 = vtanh.pop %v1285
  %v1288 = vtanh.pop %v1286
  %1291 = vrot.lane.b32.xlu0 %v1287, 64
  %v1292 = vpop.permute.xlu0 %1291
  %1293 = vrot.lane.b32.xlu0 %v1288, 64
  %v1294 = vpop.permute.xlu0 %1293
  %v1297 = vmul.f32 %v1260, %v1292
  %v1298 = vmul.f32 %v1262, %v1294
  %s1299 = scalar_lea.vmem [#allocation2], 128
  %v1300 = vld [vmem:[%s1299] sm:$0xff]
  %v1301 = vld [vmem:[%s1299 + $0x8] sm:$0xff]
  %v1302 = vpack.c.bf16 %v1298, %v1297
  %1304 = vrot.lane.b32.xlu0 %v1302, 32
  %v1305 = vpop.permute.xlu0 %1304
  %v1307 = vsel %vm497, %v1305, 0
  %1309 = vmatprep.subr.bf16.mxu0 0
  %1310 = vmatpush1.bf16.msra.mxu0 %v493
  %1311 = vmatprep.subr.bf16.mxu0 0
  %1312 = vmatpush1.bf16.msra.mxu0 %v494
  %1313 = vmatprep.subr.bf16.mxu0 0
  %1314 = vmatpush1.bf16.msra.mxu0 0
  %1315 = vmatprep.subr.bf16.mxu0 0
  %1316 = vmatpush1.bf16.msra.mxu0 0
  %1317 = vmatprep.subr.bf16.mxu0 0
  %1318 = vmatpush1.bf16.msra.mxu0 0
  %1319 = vmatprep.subr.bf16.mxu0 0
  %1320 = vmatpush1.bf16.msra.mxu0 0
  %1321 = vmatprep.subr.bf16.mxu0 0
  %1322 = vmatpush1.bf16.msra.mxu0 0
  %1323 = vmatprep.subr.bf16.mxu0 0
  %1324 = vmatpush1.bf16.msra.mxu0 0
  %1325 = vmatprep.subr.bf16.mxu0 0
  %1326 = vmatpush1.bf16.msra.mxu0 0
  %1327 = vmatprep.subr.bf16.mxu0 0
  %1328 = vmatpush1.bf16.msra.mxu0 0
  %1329 = vmatprep.subr.bf16.mxu0 0
  %1330 = vmatpush1.bf16.msra.mxu0 0
  %1331 = vmatprep.subr.bf16.mxu0 0
  %1332 = vmatpush1.bf16.msra.mxu0 0
  %1333 = vmatprep.subr.bf16.mxu0 0
  %1334 = vmatpush1.bf16.msra.mxu0 0
  %1335 = vmatprep.subr.bf16.mxu0 0
  %1336 = vmatpush1.bf16.msra.mxu0 0
  %1337 = vmatprep.subr.bf16.mxu0 0
  %1338 = vmatpush1.bf16.msra.mxu0 0
  %1339 = vmatprep.subr.bf16.mxu0 0
  %1340 = vmatpush1.bf16.msra.mxu0 0
  %1341 = vmatprep.mubr.bf16.mxu0 0
  %1342 = vmatmul.mubr.bf16.gmra.mrb[0].mxu0 %v1307
  %v1343 = vpop.f32.mrb[0].mxu0
  %v1344 = vadd.f32 0.0, %v1343
  %v1345 = vpop.f32.mrb[0].mxu0
  %v1346 = vpop.f32.mrb[0].mxu0
  %v1347 = vadd.f32 0.0, %v1346
  %v1348 = vpop.f32.mrb[0].mxu0
  %1349 = vdwg.mxu0
  %v1350 = vadd.f32 %v1300, %v1344
  %v1351 = vadd.f32 %v1301, %v1347
  %v1352 = vxor.u32 %v1350, 2147483648
  %v1353 = vxor.u32 %v1351, 2147483648
  %v1354 = vmul.f32 %v1352, 1.442695
  %v1355 = vpow.pop %v1354
  %v1356 = vmul.f32 %v1353, 1.442695
  %v1357 = vpow.pop %v1356
  %v1358 = vadd.f32 %v1355, 1.0
  %v1359 = vadd.f32 %v1357, 1.0
  %v1360 = vrcp.pop %v1358
  %v1361 = vmul.f32 1.0, %v1360
  %v1362 = vrcp.pop %v1359
  %v1363 = vmul.f32 1.0, %v1362
  %v1364 = vtanh.pop %v1350
  %v1365 = vtanh.pop %v1351
  %v1366 = vmul.f32 %v1361, %v1285
  %v1367 = vmul.f32 %v1363, %v1286
  %1370 = vrot.lane.b32.xlu0 %v1364, 64
  %v1371 = vpop.permute.xlu0 %1370
  %1372 = vrot.lane.b32.xlu0 %v1365, 64
  %v1373 = vpop.permute.xlu0 %1372
  %v1376 = vmul.f32 %v1361, %v1371
  %v1377 = vmul.f32 %v1363, %v1373
  %1380 = vrot.lane.b32.xlu0 %v1376, 32
  %v1381 = vpop.permute.xlu0 %1380
  %1382 = vrot.lane.b32.xlu0 %v1377, 32
  %v1383 = vpop.permute.xlu0 %1382
  %v1386 = vadd.f32 %v1366, %v1381
  %v1387 = vadd.f32 %v1367, %v1383
  %v1388 = vtanh.pop %v1386
  %v1389 = vtanh.pop %v1387
  %1392 = vrot.lane.b32.xlu0 %v1388, 64
  %v1393 = vpop.permute.xlu0 %1392
  %1394 = vrot.lane.b32.xlu0 %v1389, 64
  %v1395 = vpop.permute.xlu0 %1394
  %v1398 = vmul.f32 %v1361, %v1393
  %v1399 = vmul.f32 %v1363, %v1395
  %s1400 = scalar_lea.vmem [#allocation2], 144
  %v1401 = vld [vmem:[%s1400] sm:$0xff]
  %v1402 = vld [vmem:[%s1400 + $0x8] sm:$0xff]
  %v1403 = vpack.c.bf16 %v1399, %v1398
  %1405 = vrot.lane.b32.xlu0 %v1403, 32
  %v1406 = vpop.permute.xlu0 %1405
  %v1408 = vsel %vm497, %v1406, 0
  %1410 = vmatprep.subr.bf16.mxu0 0
  %1411 = vmatpush1.bf16.msra.mxu0 %v493
  %1412 = vmatprep.subr.bf16.mxu0 0
  %1413 = vmatpush1.bf16.msra.mxu0 %v494
  %1414 = vmatprep.subr.bf16.mxu0 0
  %1415 = vmatpush1.bf16.msra.mxu0 0
  %1416 = vmatprep.subr.bf16.mxu0 0
  %1417 = vmatpush1.bf16.msra.mxu0 0
  %1418 = vmatprep.subr.bf16.mxu0 0
  %1419 = vmatpush1.bf16.msra.mxu0 0
  %1420 = vmatprep.subr.bf16.mxu0 0
  %1421 = vmatpush1.bf16.msra.mxu0 0
  %1422 = vmatprep.subr.bf16.mxu0 0
  %1423 = vmatpush1.bf16.msra.mxu0 0
  %1424 = vmatprep.subr.bf16.mxu0 0
  %1425 = vmatpush1.bf16.msra.mxu0 0
  %1426 = vmatprep.subr.bf16.mxu0 0
  %1427 = vmatpush1.bf16.msra.mxu0 0
  %1428 = vmatprep.subr.bf16.mxu0 0
  %1429 = vmatpush1.bf16.msra.mxu0 0
  %1430 = vmatprep.subr.bf16.mxu0 0
  %1431 = vmatpush1.bf16.msra.mxu0 0
  %1432 = vmatprep.subr.bf16.mxu0 0
  %1433 = vmatpush1.bf16.msra.mxu0 0
  %1434 = vmatprep.subr.bf16.mxu0 0
  %1435 = vmatpush1.bf16.msra.mxu0 0
  %1436 = vmatprep.subr.bf16.mxu0 0
  %1437 = vmatpush1.bf16.msra.mxu0 0
  %1438 = vmatprep.subr.bf16.mxu0 0
  %1439 = vmatpush1.bf16.msra.mxu0 0
  %1440 = vmatprep.subr.bf16.mxu0 0
  %1441 = vmatpush1.bf16.msra.mxu0 0
  %1442 = vmatprep.mubr.bf16.mxu0 0
  %1443 = vmatmul.mubr.bf16.gmra.mrb[0].mxu0 %v1408
  %v1444 = vpop.f32.mrb[0].mxu0
  %v1445 = vadd.f32 0.0, %v1444
  %v1446 = vpop.f32.mrb[0].mxu0
  %v1447 = vpop.f32.mrb[0].mxu0
  %v1448 = vadd.f32 0.0, %v1447
  %v1449 = vpop.f32.mrb[0].mxu0
  %1450 = vdwg.mxu0
  %v1451 = vadd.f32 %v1401, %v1445
  %v1452 = vadd.f32 %v1402, %v1448
  %v1453 = vxor.u32 %v1451, 2147483648
  %v1454 = vxor.u32 %v1452, 2147483648
  %v1455 = vmul.f32 %v1453, 1.442695
  %v1456 = vpow.pop %v1455
  %v1457 = vmul.f32 %v1454, 1.442695
  %v1458 = vpow.pop %v1457
  %v1459 = vadd.f32 %v1456, 1.0
  %v1460 = vadd.f32 %v1458, 1.0
  %v1461 = vrcp.pop %v1459
  %v1462 = vmul.f32 1.0, %v1461
  %v1463 = vrcp.pop %v1460
  %v1464 = vmul.f32 1.0, %v1463
  %v1465 = vtanh.pop %v1451
  %v1466 = vtanh.pop %v1452
  %v1467 = vmul.f32 %v1462, %v1386
  %v1468 = vmul.f32 %v1464, %v1387
  %1471 = vrot.lane.b32.xlu0 %v1465, 64
  %v1472 = vpop.permute.xlu0 %1471
  %1473 = vrot.lane.b32.xlu0 %v1466, 64
  %v1474 = vpop.permute.xlu0 %1473
  %v1477 = vmul.f32 %v1462, %v1472
  %v1478 = vmul.f32 %v1464, %v1474
  %1481 = vrot.lane.b32.xlu0 %v1477, 32
  %v1482 = vpop.permute.xlu0 %1481
  %1483 = vrot.lane.b32.xlu0 %v1478, 32
  %v1484 = vpop.permute.xlu0 %1483
  %v1487 = vadd.f32 %v1467, %v1482
  %v1488 = vadd.f32 %v1468, %v1484
  %v1489 = vtanh.pop %v1487
  %v1490 = vtanh.pop %v1488
  %1493 = vrot.lane.b32.xlu0 %v1489, 64
  %v1494 = vpop.permute.xlu0 %1493
  %1495 = vrot.lane.b32.xlu0 %v1490, 64
  %v1496 = vpop.permute.xlu0 %1495
  %v1499 = vmul.f32 %v1462, %v1494
  %v1500 = vmul.f32 %v1464, %v1496
  %s1501 = scalar_lea.vmem [#allocation2], 160
  %v1502 = vld [vmem:[%s1501] sm:$0xff]
  %v1503 = vld [vmem:[%s1501 + $0x8] sm:$0xff]
  %v1504 = vpack.c.bf16 %v1500, %v1499
  %1506 = vrot.lane.b32.xlu0 %v1504, 32
  %v1507 = vpop.permute.xlu0 %1506
  %v1509 = vsel %vm497, %v1507, 0
  %1511 = vmatprep.subr.bf16.mxu0 0
  %1512 = vmatpush1.bf16.msra.mxu0 %v493
  %1513 = vmatprep.subr.bf16.mxu0 0
  %1514 = vmatpush1.bf16.msra.mxu0 %v494
  %1515 = vmatprep.subr.bf16.mxu0 0
  %1516 = vmatpush1.bf16.msra.mxu0 0
  %1517 = vmatprep.subr.bf16.mxu0 0
  %1518 = vmatpush1.bf16.msra.mxu0 0
  %1519 = vmatprep.subr.bf16.mxu0 0
  %1520 = vmatpush1.bf16.msra.mxu0 0
  %1521 = vmatprep.subr.bf16.mxu0 0
  %1522 = vmatpush1.bf16.msra.mxu0 0
  %1523 = vmatprep.subr.bf16.mxu0 0
  %1524 = vmatpush1.bf16.msra.mxu0 0
  %1525 = vmatprep.subr.bf16.mxu0 0
  %1526 = vmatpush1.bf16.msra.mxu0 0
  %1527 = vmatprep.subr.bf16.mxu0 0
  %1528 = vmatpush1.bf16.msra.mxu0 0
  %1529 = vmatprep.subr.bf16.mxu0 0
  %1530 = vmatpush1.bf16.msra.mxu0 0
  %1531 = vmatprep.subr.bf16.mxu0 0
  %1532 = vmatpush1.bf16.msra.mxu0 0
  %1533 = vmatprep.subr.bf16.mxu0 0
  %1534 = vmatpush1.bf16.msra.mxu0 0
  %1535 = vmatprep.subr.bf16.mxu0 0
  %1536 = vmatpush1.bf16.msra.mxu0 0
  %1537 = vmatprep.subr.bf16.mxu0 0
  %1538 = vmatpush1.bf16.msra.mxu0 0
  %1539 = vmatprep.subr.bf16.mxu0 0
  %1540 = vmatpush1.bf16.msra.mxu0 0
  %1541 = vmatprep.subr.bf16.mxu0 0
  %1542 = vmatpush1.bf16.msra.mxu0 0
  %1543 = vmatprep.mubr.bf16.mxu0 0
  %1544 = vmatmul.mubr.bf16.gmra.mrb[0].mxu0 %v1509
  %v1545 = vpop.f32.mrb[0].mxu0
  %v1546 = vadd.f32 0.0, %v1545
  %v1547 = vpop.f32.mrb[0].mxu0
  %v1548 = vpop.f32.mrb[0].mxu0
  %v1549 = vadd.f32 0.0, %v1548
  %v1550 = vpop.f32.mrb[0].mxu0
  %1551 = vdwg.mxu0
  %v1552 = vadd.f32 %v1502, %v1546
  %v1553 = vadd.f32 %v1503, %v1549
  %v1554 = vxor.u32 %v1552, 2147483648
  %v1555 = vxor.u32 %v1553, 2147483648
  %v1556 = vmul.f32 %v1554, 1.442695
  %v1557 = vpow.pop %v1556
  %v1558 = vmul.f32 %v1555, 1.442695
  %v1559 = vpow.pop %v1558
  %v1560 = vadd.f32 %v1557, 1.0
  %v1561 = vadd.f32 %v1559, 1.0
  %v1562 = vrcp.pop %v1560
  %v1563 = vmul.f32 1.0, %v1562
  %v1564 = vrcp.pop %v1561
  %v1565 = vmul.f32 1.0, %v1564
  %v1566 = vtanh.pop %v1552
  %v1567 = vtanh.pop %v1553
  %v1568 = vmul.f32 %v1563, %v1487
  %v1569 = vmul.f32 %v1565, %v1488
  %1572 = vrot.lane.b32.xlu0 %v1566, 64
  %v1573 = vpop.permute.xlu0 %1572
  %1574 = vrot.lane.b32.xlu0 %v1567, 64
  %v1575 = vpop.permute.xlu0 %1574
  %v1578 = vmul.f32 %v1563, %v1573
  %v1579 = vmul.f32 %v1565, %v1575
  %1582 = vrot.lane.b32.xlu0 %v1578, 32
  %v1583 = vpop.permute.xlu0 %1582
  %1584 = vrot.lane.b32.xlu0 %v1579, 32
  %v1585 = vpop.permute.xlu0 %1584
  %v1588 = vadd.f32 %v1568, %v1583
  %v1589 = vadd.f32 %v1569, %v1585
  %v1590 = vtanh.pop %v1588
  %v1591 = vtanh.pop %v1589
  %1594 = vrot.lane.b32.xlu0 %v1590, 64
  %v1595 = vpop.permute.xlu0 %1594
  %1596 = vrot.lane.b32.xlu0 %v1591, 64
  %v1597 = vpop.permute.xlu0 %1596
  %v1600 = vmul.f32 %v1563, %v1595
  %v1601 = vmul.f32 %v1565, %v1597
  %s1602 = scalar_lea.vmem [#allocation2], 176
  %v1603 = vld [vmem:[%s1602] sm:$0xff]
  %v1604 = vld [vmem:[%s1602 + $0x8] sm:$0xff]
  %v1605 = vpack.c.bf16 %v1601, %v1600
  %1607 = vrot.lane.b32.xlu0 %v1605, 32
  %v1608 = vpop.permute.xlu0 %1607
  %v1610 = vsel %vm497, %v1608, 0
  %1612 = vmatprep.subr.bf16.mxu0 0
  %1613 = vmatpush1.bf16.msra.mxu0 %v493
  %1614 = vmatprep.subr.bf16.mxu0 0
  %1615 = vmatpush1.bf16.msra.mxu0 %v494
  %1616 = vmatprep.subr.bf16.mxu0 0
  %1617 = vmatpush1.bf16.msra.mxu0 0
  %1618 = vmatprep.subr.bf16.mxu0 0
  %1619 = vmatpush1.bf16.msra.mxu0 0
  %1620 = vmatprep.subr.bf16.mxu0 0
  %1621 = vmatpush1.bf16.msra.mxu0 0
  %1622 = vmatprep.subr.bf16.mxu0 0
  %1623 = vmatpush1.bf16.msra.mxu0 0
  %1624 = vmatprep.subr.bf16.mxu0 0
  %1625 = vmatpush1.bf16.msra.mxu0 0
  %1626 = vmatprep.subr.bf16.mxu0 0
  %1627 = vmatpush1.bf16.msra.mxu0 0
  %1628 = vmatprep.subr.bf16.mxu0 0
  %1629 = vmatpush1.bf16.msra.mxu0 0
  %1630 = vmatprep.subr.bf16.mxu0 0
  %1631 = vmatpush1.bf16.msra.mxu0 0
  %1632 = vmatprep.subr.bf16.mxu0 0
  %1633 = vmatpush1.bf16.msra.mxu0 0
  %1634 = vmatprep.subr.bf16.mxu0 0
  %1635 = vmatpush1.bf16.msra.mxu0 0
  %1636 = vmatprep.subr.bf16.mxu0 0
  %1637 = vmatpush1.bf16.msra.mxu0 0
  %1638 = vmatprep.subr.bf16.mxu0 0
  %1639 = vmatpush1.bf16.msra.mxu0 0
  %1640 = vmatprep.subr.bf16.mxu0 0
  %1641 = vmatpush1.bf16.msra.mxu0 0
  %1642 = vmatprep.subr.bf16.mxu0 0
  %1643 = vmatpush1.bf16.msra.mxu0 0
  %1644 = vmatprep.mubr.bf16.mxu0 0
  %1645 = vmatmul.mubr.bf16.gmra.mrb[0].mxu0 %v1610
  %v1646 = vpop.f32.mrb[0].mxu0
  %v1647 = vadd.f32 0.0, %v1646
  %v1648 = vpop.f32.mrb[0].mxu0
  %v1649 = vpop.f32.mrb[0].mxu0
  %v1650 = vadd.f32 0.0, %v1649
  %v1651 = vpop.f32.mrb[0].mxu0
  %1652 = vdwg.mxu0
  %v1653 = vadd.f32 %v1603, %v1647
  %v1654 = vadd.f32 %v1604, %v1650
  %v1655 = vxor.u32 %v1653, 2147483648
  %v1656 = vxor.u32 %v1654, 2147483648
  %v1657 = vmul.f32 %v1655, 1.442695
  %v1658 = vpow.pop %v1657
  %v1659 = vmul.f32 %v1656, 1.442695
  %v1660 = vpow.pop %v1659
  %v1661 = vadd.f32 %v1658, 1.0
  %v1662 = vadd.f32 %v1660, 1.0
  %v1663 = vrcp.pop %v1661
  %v1664 = vmul.f32 1.0, %v1663
  %v1665 = vrcp.pop %v1662
  %v1666 = vmul.f32 1.0, %v1665
  %v1667 = vtanh.pop %v1653
  %v1668 = vtanh.pop %v1654
  %v1669 = vmul.f32 %v1664, %v1588
  %v1670 = vmul.f32 %v1666, %v1589
  %1673 = vrot.lane.b32.xlu0 %v1667, 64
  %v1674 = vpop.permute.xlu0 %1673
  %1675 = vrot.lane.b32.xlu0 %v1668, 64
  %v1676 = vpop.permute.xlu0 %1675
  %v1679 = vmul.f32 %v1664, %v1674
  %v1680 = vmul.f32 %v1666, %v1676
  %1683 = vrot.lane.b32.xlu0 %v1679, 32
  %v1684 = vpop.permute.xlu0 %1683
  %1685 = vrot.lane.b32.xlu0 %v1680, 32
  %v1686 = vpop.permute.xlu0 %1685
  %v1689 = vadd.f32 %v1669, %v1684
  %v1690 = vadd.f32 %v1670, %v1686
  %v1691 = vtanh.pop %v1689
  %v1692 = vtanh.pop %v1690
  %1695 = vrot.lane.b32.xlu0 %v1691, 64
  %v1696 = vpop.permute.xlu0 %1695
  %1697 = vrot.lane.b32.xlu0 %v1692, 64
  %v1698 = vpop.permute.xlu0 %1697
  %v1701 = vmul.f32 %v1664, %v1696
  %v1702 = vmul.f32 %v1666, %v1698
  %s1703 = scalar_lea.vmem [#allocation2], 192
  %v1704 = vld [vmem:[%s1703] sm:$0xff]
  %v1705 = vld [vmem:[%s1703 + $0x8] sm:$0xff]
  %v1706 = vpack.c.bf16 %v1702, %v1701
  %1708 = vrot.lane.b32.xlu0 %v1706, 32
  %v1709 = vpop.permute.xlu0 %1708
  %v1711 = vsel %vm497, %v1709, 0
  %1713 = vmatprep.subr.bf16.mxu0 0
  %1714 = vmatpush1.bf16.msra.mxu0 %v493
  %1715 = vmatprep.subr.bf16.mxu0 0
  %1716 = vmatpush1.bf16.msra.mxu0 %v494
  %1717 = vmatprep.subr.bf16.mxu0 0
  %1718 = vmatpush1.bf16.msra.mxu0 0
  %1719 = vmatprep.subr.bf16.mxu0 0
  %1720 = vmatpush1.bf16.msra.mxu0 0
  %1721 = vmatprep.subr.bf16.mxu0 0
  %1722 = vmatpush1.bf16.msra.mxu0 0
  %1723 = vmatprep.subr.bf16.mxu0 0
  %1724 = vmatpush1.bf16.msra.mxu0 0
  %1725 = vmatprep.subr.bf16.mxu0 0
  %1726 = vmatpush1.bf16.msra.mxu0 0
  %1727 = vmatprep.subr.bf16.mxu0 0
  %1728 = vmatpush1.bf16.msra.mxu0 0
  %1729 = vmatprep.subr.bf16.mxu0 0
  %1730 = vmatpush1.bf16.msra.mxu0 0
  %1731 = vmatprep.subr.bf16.mxu0 0
  %1732 = vmatpush1.bf16.msra.mxu0 0
  %1733 = vmatprep.subr.bf16.mxu0 0
  %1734 = vmatpush1.bf16.msra.mxu0 0
  %1735 = vmatprep.subr.bf16.mxu0 0
  %1736 = vmatpush1.bf16.msra.mxu0 0
  %1737 = vmatprep.subr.bf16.mxu0 0
  %1738 = vmatpush1.bf16.msra.mxu0 0
  %1739 = vmatprep.subr.bf16.mxu0 0
  %1740 = vmatpush1.bf16.msra.mxu0 0
  %1741 = vmatprep.subr.bf16.mxu0 0
  %1742 = vmatpush1.bf16.msra.mxu0 0
  %1743 = vmatprep.subr.bf16.mxu0 0
  %1744 = vmatpush1.bf16.msra.mxu0 0
  %1745 = vmatprep.mubr.bf16.mxu0 0
  %1746 = vmatmul.mubr.bf16.gmra.mrb[0].mxu0 %v1711
  %v1747 = vpop.f32.mrb[0].mxu0
  %v1748 = vadd.f32 0.0, %v1747
  %v1749 = vpop.f32.mrb[0].mxu0
  %v1750 = vpop.f32.mrb[0].mxu0
  %v1751 = vadd.f32 0.0, %v1750
  %v1752 = vpop.f32.mrb[0].mxu0
  %1753 = vdwg.mxu0
  %v1754 = vadd.f32 %v1704, %v1748
  %v1755 = vadd.f32 %v1705, %v1751
  %v1756 = vxor.u32 %v1754, 2147483648
  %v1757 = vxor.u32 %v1755, 2147483648
  %v1758 = vmul.f32 %v1756, 1.442695
  %v1759 = vpow.pop %v1758
  %v1760 = vmul.f32 %v1757, 1.442695
  %v1761 = vpow.pop %v1760
  %v1762 = vadd.f32 %v1759, 1.0
  %v1763 = vadd.f32 %v1761, 1.0
  %v1764 = vrcp.pop %v1762
  %v1765 = vmul.f32 1.0, %v1764
  %v1766 = vrcp.pop %v1763
  %v1767 = vmul.f32 1.0, %v1766
  %v1768 = vtanh.pop %v1754
  %v1769 = vtanh.pop %v1755
  %v1770 = vmul.f32 %v1765, %v1689
  %v1771 = vmul.f32 %v1767, %v1690
  %1774 = vrot.lane.b32.xlu0 %v1768, 64
  %v1775 = vpop.permute.xlu0 %1774
  %1776 = vrot.lane.b32.xlu0 %v1769, 64
  %v1777 = vpop.permute.xlu0 %1776
  %v1780 = vmul.f32 %v1765, %v1775
  %v1781 = vmul.f32 %v1767, %v1777
  %1784 = vrot.lane.b32.xlu0 %v1780, 32
  %v1785 = vpop.permute.xlu0 %1784
  %1786 = vrot.lane.b32.xlu0 %v1781, 32
  %v1787 = vpop.permute.xlu0 %1786
  %v1790 = vadd.f32 %v1770, %v1785
  %v1791 = vadd.f32 %v1771, %v1787
  %v1792 = vtanh.pop %v1790
  %v1793 = vtanh.pop %v1791
  %1796 = vrot.lane.b32.xlu0 %v1792, 64
  %v1797 = vpop.permute.xlu0 %1796
  %1798 = vrot.lane.b32.xlu0 %v1793, 64
  %v1799 = vpop.permute.xlu0 %1798
  %v1802 = vmul.f32 %v1765, %v1797
  %v1803 = vmul.f32 %v1767, %v1799
  %s1804 = scalar_lea.vmem [#allocation2], 208
  %v1805 = vld [vmem:[%s1804] sm:$0xff]
  %v1806 = vld [vmem:[%s1804 + $0x8] sm:$0xff]
  %v1807 = vpack.c.bf16 %v1803, %v1802
  %1809 = vrot.lane.b32.xlu0 %v1807, 32
  %v1810 = vpop.permute.xlu0 %1809
  %v1812 = vsel %vm497, %v1810, 0
  %1814 = vmatprep.subr.bf16.mxu0 0
  %1815 = vmatpush1.bf16.msra.mxu0 %v493
  %1816 = vmatprep.subr.bf16.mxu0 0
  %1817 = vmatpush1.bf16.msra.mxu0 %v494
  %1818 = vmatprep.subr.bf16.mxu0 0
  %1819 = vmatpush1.bf16.msra.mxu0 0
  %1820 = vmatprep.subr.bf16.mxu0 0
  %1821 = vmatpush1.bf16.msra.mxu0 0
  %1822 = vmatprep.subr.bf16.mxu0 0
  %1823 = vmatpush1.bf16.msra.mxu0 0
  %1824 = vmatprep.subr.bf16.mxu0 0
  %1825 = vmatpush1.bf16.msra.mxu0 0
  %1826 = vmatprep.subr.bf16.mxu0 0
  %1827 = vmatpush1.bf16.msra.mxu0 0
  %1828 = vmatprep.subr.bf16.mxu0 0
  %1829 = vmatpush1.bf16.msra.mxu0 0
  %1830 = vmatprep.subr.bf16.mxu0 0
  %1831 = vmatpush1.bf16.msra.mxu0 0
  %1832 = vmatprep.subr.bf16.mxu0 0
  %1833 = vmatpush1.bf16.msra.mxu0 0
  %1834 = vmatprep.subr.bf16.mxu0 0
  %1835 = vmatpush1.bf16.msra.mxu0 0
  %1836 = vmatprep.subr.bf16.mxu0 0
  %1837 = vmatpush1.bf16.msra.mxu0 0
  %1838 = vmatprep.subr.bf16.mxu0 0
  %1839 = vmatpush1.bf16.msra.mxu0 0
  %1840 = vmatprep.subr.bf16.mxu0 0
  %1841 = vmatpush1.bf16.msra.mxu0 0
  %1842 = vmatprep.subr.bf16.mxu0 0
  %1843 = vmatpush1.bf16.msra.mxu0 0
  %1844 = vmatprep.subr.bf16.mxu0 0
  %1845 = vmatpush1.bf16.msra.mxu0 0
  %1846 = vmatprep.mubr.bf16.mxu0 0
  %1847 = vmatmul.mubr.bf16.gmra.mrb[0].mxu0 %v1812
  %v1848 = vpop.f32.mrb[0].mxu0
  %v1849 = vadd.f32 0.0, %v1848
  %v1850 = vpop.f32.mrb[0].mxu0
  %v1851 = vpop.f32.mrb[0].mxu0
  %v1852 = vadd.f32 0.0, %v1851
  %v1853 = vpop.f32.mrb[0].mxu0
  %1854 = vdwg.mxu0
  %v1855 = vadd.f32 %v1805, %v1849
  %v1856 = vadd.f32 %v1806, %v1852
  %v1857 = vxor.u32 %v1855, 2147483648
  %v1858 = vxor.u32 %v1856, 2147483648
  %v1859 = vmul.f32 %v1857, 1.442695
  %v1860 = vpow.pop %v1859
  %v1861 = vmul.f32 %v1858, 1.442695
  %v1862 = vpow.pop %v1861
  %v1863 = vadd.f32 %v1860, 1.0
  %v1864 = vadd.f32 %v1862, 1.0
  %v1865 = vrcp.pop %v1863
  %v1866 = vmul.f32 1.0, %v1865
  %v1867 = vrcp.pop %v1864
  %v1868 = vmul.f32 1.0, %v1867
  %v1869 = vtanh.pop %v1855
  %v1870 = vtanh.pop %v1856
  %v1871 = vmul.f32 %v1866, %v1790
  %v1872 = vmul.f32 %v1868, %v1791
  %1875 = vrot.lane.b32.xlu0 %v1869, 64
  %v1876 = vpop.permute.xlu0 %1875
  %1877 = vrot.lane.b32.xlu0 %v1870, 64
  %v1878 = vpop.permute.xlu0 %1877
  %v1881 = vmul.f32 %v1866, %v1876
  %v1882 = vmul.f32 %v1868, %v1878
  %1885 = vrot.lane.b32.xlu0 %v1881, 32
  %v1886 = vpop.permute.xlu0 %1885
  %1887 = vrot.lane.b32.xlu0 %v1882, 32
  %v1888 = vpop.permute.xlu0 %1887
  %v1891 = vadd.f32 %v1871, %v1886
  %v1892 = vadd.f32 %v1872, %v1888
  %v1893 = vtanh.pop %v1891
  %v1894 = vtanh.pop %v1892
  %1897 = vrot.lane.b32.xlu0 %v1893, 64
  %v1898 = vpop.permute.xlu0 %1897
  %1899 = vrot.lane.b32.xlu0 %v1894, 64
  %v1900 = vpop.permute.xlu0 %1899
  %v1903 = vmul.f32 %v1866, %v1898
  %v1904 = vmul.f32 %v1868, %v1900
  %s1905 = scalar_lea.vmem [#allocation2], 224
  %v1906 = vld [vmem:[%s1905] sm:$0xff]
  %v1907 = vld [vmem:[%s1905 + $0x8] sm:$0xff]
  %v1908 = vpack.c.bf16 %v1904, %v1903
  %1910 = vrot.lane.b32.xlu0 %v1908, 32
  %v1911 = vpop.permute.xlu0 %1910
  %v1913 = vsel %vm497, %v1911, 0
  %1915 = vmatprep.subr.bf16.mxu0 0
  %1916 = vmatpush1.bf16.msra.mxu0 %v493
  %1917 = vmatprep.subr.bf16.mxu0 0
  %1918 = vmatpush1.bf16.msra.mxu0 %v494
  %1919 = vmatprep.subr.bf16.mxu0 0
  %1920 = vmatpush1.bf16.msra.mxu0 0
  %1921 = vmatprep.subr.bf16.mxu0 0
  %1922 = vmatpush1.bf16.msra.mxu0 0
  %1923 = vmatprep.subr.bf16.mxu0 0
  %1924 = vmatpush1.bf16.msra.mxu0 0
  %1925 = vmatprep.subr.bf16.mxu0 0
  %1926 = vmatpush1.bf16.msra.mxu0 0
  %1927 = vmatprep.subr.bf16.mxu0 0
  %1928 = vmatpush1.bf16.msra.mxu0 0
  %1929 = vmatprep.subr.bf16.mxu0 0
  %1930 = vmatpush1.bf16.msra.mxu0 0
  %1931 = vmatprep.subr.bf16.mxu0 0
  %1932 = vmatpush1.bf16.msra.mxu0 0
  %1933 = vmatprep.subr.bf16.mxu0 0
  %1934 = vmatpush1.bf16.msra.mxu0 0
  %1935 = vmatprep.subr.bf16.mxu0 0
  %1936 = vmatpush1.bf16.msra.mxu0 0
  %1937 = vmatprep.subr.bf16.mxu0 0
  %1938 = vmatpush1.bf16.msra.mxu0 0
  %1939 = vmatprep.subr.bf16.mxu0 0
  %1940 = vmatpush1.bf16.msra.mxu0 0
  %1941 = vmatprep.subr.bf16.mxu0 0
  %1942 = vmatpush1.bf16.msra.mxu0 0
  %1943 = vmatprep.subr.bf16.mxu0 0
  %1944 = vmatpush1.bf16.msra.mxu0 0
  %1945 = vmatprep.subr.bf16.mxu0 0
  %1946 = vmatpush1.bf16.msra.mxu0 0
  %1947 = vmatprep.mubr.bf16.mxu0 0
  %1948 = vmatmul.mubr.bf16.gmra.mrb[0].mxu0 %v1913
  %v1949 = vpop.f32.mrb[0].mxu0
  %v1950 = vadd.f32 0.0, %v1949
  %v1951 = vpop.f32.mrb[0].mxu0
  %v1952 = vpop.f32.mrb[0].mxu0
  %v1953 = vadd.f32 0.0, %v1952
  %v1954 = vpop.f32.mrb[0].mxu0
  %1955 = vdwg.mxu0
  %v1956 = vadd.f32 %v1906, %v1950
  %v1957 = vadd.f32 %v1907, %v1953
  %v1958 = vxor.u32 %v1956, 2147483648
  %v1959 = vxor.u32 %v1957, 2147483648
  %v1960 = vmul.f32 %v1958, 1.442695
  %v1961 = vpow.pop %v1960
  %v1962 = vmul.f32 %v1959, 1.442695
  %v1963 = vpow.pop %v1962
  %v1964 = vadd.f32 %v1961, 1.0
  %v1965 = vadd.f32 %v1963, 1.0
  %v1966 = vrcp.pop %v1964
  %v1967 = vmul.f32 1.0, %v1966
  %v1968 = vrcp.pop %v1965
  %v1969 = vmul.f32 1.0, %v1968
  %v1970 = vtanh.pop %v1956
  %v1971 = vtanh.pop %v1957
  %v1972 = vmul.f32 %v1967, %v1891
  %v1973 = vmul.f32 %v1969, %v1892
  %1976 = vrot.lane.b32.xlu0 %v1970, 64
  %v1977 = vpop.permute.xlu0 %1976
  %1978 = vrot.lane.b32.xlu0 %v1971, 64
  %v1979 = vpop.permute.xlu0 %1978
  %v1982 = vmul.f32 %v1967, %v1977
  %v1983 = vmul.f32 %v1969, %v1979
  %1986 = vrot.lane.b32.xlu0 %v1982, 32
  %v1987 = vpop.permute.xlu0 %1986
  %1988 = vrot.lane.b32.xlu0 %v1983, 32
  %v1989 = vpop.permute.xlu0 %1988
  %v1992 = vadd.f32 %v1972, %v1987
  %v1993 = vadd.f32 %v1973, %v1989
  %v1994 = vtanh.pop %v1992
  %v1995 = vtanh.pop %v1993
  %1998 = vrot.lane.b32.xlu0 %v1994, 64
  %v1999 = vpop.permute.xlu0 %1998
  %2000 = vrot.lane.b32.xlu0 %v1995, 64
  %v2001 = vpop.permute.xlu0 %2000
  %v2004 = vmul.f32 %v1967, %v1999
  %v2005 = vmul.f32 %v1969, %v2001
  %s2006 = scalar_lea.vmem [#allocation2], 240
  %v2007 = vld [vmem:[%s2006] sm:$0xff]
  %v2008 = vld [vmem:[%s2006 + $0x8] sm:$0xff]
  %v2009 = vpack.c.bf16 %v2005, %v2004
  %2011 = vrot.lane.b32.xlu0 %v2009, 32
  %v2012 = vpop.permute.xlu0 %2011
  %v2014 = vsel %vm497, %v2012, 0
  %2016 = vmatprep.subr.bf16.mxu0 0
  %2017 = vmatpush1.bf16.msra.mxu0 %v493
  %2018 = vmatprep.subr.bf16.mxu0 0
  %2019 = vmatpush1.bf16.msra.mxu0 %v494
  %2020 = vmatprep.subr.bf16.mxu0 0
  %2021 = vmatpush1.bf16.msra.mxu0 0
  %2022 = vmatprep.subr.bf16.mxu0 0
  %2023 = vmatpush1.bf16.msra.mxu0 0
  %2024 = vmatprep.subr.bf16.mxu0 0
  %2025 = vmatpush1.bf16.msra.mxu0 0
  %2026 = vmatprep.subr.bf16.mxu0 0
  %2027 = vmatpush1.bf16.msra.mxu0 0
  %2028 = vmatprep.subr.bf16.mxu0 0
  %2029 = vmatpush1.bf16.msra.mxu0 0
  %2030 = vmatprep.subr.bf16.mxu0 0
  %2031 = vmatpush1.bf16.msra.mxu0 0
  %2032 = vmatprep.subr.bf16.mxu0 0
  %2033 = vmatpush1.bf16.msra.mxu0 0
  %2034 = vmatprep.subr.bf16.mxu0 0
  %2035 = vmatpush1.bf16.msra.mxu0 0
  %2036 = vmatprep.subr.bf16.mxu0 0
  %2037 = vmatpush1.bf16.msra.mxu0 0
  %2038 = vmatprep.subr.bf16.mxu0 0
  %2039 = vmatpush1.bf16.msra.mxu0 0
  %2040 = vmatprep.subr.bf16.mxu0 0
  %2041 = vmatpush1.bf16.msra.mxu0 0
  %2042 = vmatprep.subr.bf16.mxu0 0
  %2043 = vmatpush1.bf16.msra.mxu0 0
  %2044 = vmatprep.subr.bf16.mxu0 0
  %2045 = vmatpush1.bf16.msra.mxu0 0
  %2046 = vmatprep.subr.bf16.mxu0 0
  %2047 = vmatpush1.bf16.msra.mxu0 0
  %2048 = vmatprep.mubr.bf16.mxu0 0
  %2049 = vmatmul.mubr.bf16.gmra.mrb[0].mxu0 %v2014
  %v2050 = vpop.f32.mrb[0].mxu0
  %v2051 = vadd.f32 0.0, %v2050
  %v2052 = vpop.f32.mrb[0].mxu0
  %v2053 = vpop.f32.mrb[0].mxu0
  %v2054 = vadd.f32 0.0, %v2053
  %v2055 = vpop.f32.mrb[0].mxu0
  %2056 = vdwg.mxu0
  %v2057 = vadd.f32 %v2007, %v2051
  %v2058 = vadd.f32 %v2008, %v2054
  %v2059 = vxor.u32 %v2057, 2147483648
  %v2060 = vxor.u32 %v2058, 2147483648
  %v2061 = vmul.f32 %v2059, 1.442695
  %v2062 = vpow.pop %v2061
  %v2063 = vmul.f32 %v2060, 1.442695
  %v2064 = vpow.pop %v2063
  %v2065 = vadd.f32 %v2062, 1.0
  %v2066 = vadd.f32 %v2064, 1.0
  %v2067 = vrcp.pop %v2065
  %v2068 = vmul.f32 1.0, %v2067
  %v2069 = vrcp.pop %v2066
  %v2070 = vmul.f32 1.0, %v2069
  %v2071 = vtanh.pop %v2057
  %v2072 = vtanh.pop %v2058
  %v2073 = vmul.f32 %v2068, %v1992
  %v2074 = vmul.f32 %v2070, %v1993
  %2077 = vrot.lane.b32.xlu0 %v2071, 64
  %v2078 = vpop.permute.xlu0 %2077
  %2079 = vrot.lane.b32.xlu0 %v2072, 64
  %v2080 = vpop.permute.xlu0 %2079
  %v2083 = vmul.f32 %v2068, %v2078
  %v2084 = vmul.f32 %v2070, %v2080
  %2087 = vrot.lane.b32.xlu0 %v2083, 32
  %v2088 = vpop.permute.xlu0 %2087
  %2089 = vrot.lane.b32.xlu0 %v2084, 32
  %v2090 = vpop.permute.xlu0 %2089
  %v2093 = vadd.f32 %v2073, %v2088
  %v2094 = vadd.f32 %v2074, %v2090
  %v2095 = vtanh.pop %v2093
  %v2096 = vtanh.pop %v2094
  %2099 = vrot.lane.b32.xlu0 %v2095, 64
  %v2100 = vpop.permute.xlu0 %2099
  %2101 = vrot.lane.b32.xlu0 %v2096, 64
  %v2102 = vpop.permute.xlu0 %2101
  %v2105 = vmul.f32 %v2068, %v2100
  %v2106 = vmul.f32 %v2070, %v2102
  %s2107 = scalar_lea.vmem [#allocation2], 256
  %v2108 = vld [vmem:[%s2107] sm:$0xff]
  %v2109 = vld [vmem:[%s2107 + $0x8] sm:$0xff]
  %v2110 = vpack.c.bf16 %v2106, %v2105
  %2112 = vrot.lane.b32.xlu0 %v2110, 32
  %v2113 = vpop.permute.xlu0 %2112
  %v2115 = vsel %vm497, %v2113, 0
  %2117 = vmatprep.subr.bf16.mxu0 0
  %2118 = vmatpush1.bf16.msra.mxu0 %v493
  %2119 = vmatprep.subr.bf16.mxu0 0
  %2120 = vmatpush1.bf16.msra.mxu0 %v494
  %2121 = vmatprep.subr.bf16.mxu0 0
  %2122 = vmatpush1.bf16.msra.mxu0 0
  %2123 = vmatprep.subr.bf16.mxu0 0
  %2124 = vmatpush1.bf16.msra.mxu0 0
  %2125 = vmatprep.subr.bf16.mxu0 0
  %2126 = vmatpush1.bf16.msra.mxu0 0
  %2127 = vmatprep.subr.bf16.mxu0 0
  %2128 = vmatpush1.bf16.msra.mxu0 0
  %2129 = vmatprep.subr.bf16.mxu0 0
  %2130 = vmatpush1.bf16.msra.mxu0 0
  %2131 = vmatprep.subr.bf16.mxu0 0
  %2132 = vmatpush1.bf16.msra.mxu0 0
  %2133 = vmatprep.subr.bf16.mxu0 0
  %2134 = vmatpush1.bf16.msra.mxu0 0
  %2135 = vmatprep.subr.bf16.mxu0 0
  %2136 = vmatpush1.bf16.msra.mxu0 0
  %2137 = vmatprep.subr.bf16.mxu0 0
  %2138 = vmatpush1.bf16.msra.mxu0 0
  %2139 = vmatprep.subr.bf16.mxu0 0
  %2140 = vmatpush1.bf16.msra.mxu0 0
  %2141 = vmatprep.subr.bf16.mxu0 0
  %2142 = vmatpush1.bf16.msra.mxu0 0
  %2143 = vmatprep.subr.bf16.mxu0 0
  %2144 = vmatpush1.bf16.msra.mxu0 0
  %2145 = vmatprep.subr.bf16.mxu0 0
  %2146 = vmatpush1.bf16.msra.mxu0 0
  %2147 = vmatprep.subr.bf16.mxu0 0
  %2148 = vmatpush1.bf16.msra.mxu0 0
  %2149 = vmatprep.mubr.bf16.mxu0 0
  %2150 = vmatmul.mubr.bf16.gmra.mrb[0].mxu0 %v2115
  %v2151 = vpop.f32.mrb[0].mxu0
  %v2152 = vadd.f32 0.0, %v2151
  %v2153 = vpop.f32.mrb[0].mxu0
  %v2154 = vpop.f32.mrb[0].mxu0
  %v2155 = vadd.f32 0.0, %v2154
  %v2156 = vpop.f32.mrb[0].mxu0
  %2157 = vdwg.mxu0
  %v2158 = vadd.f32 %v2108, %v2152
  %v2159 = vadd.f32 %v2109, %v2155
  %v2160 = vxor.u32 %v2158, 2147483648
  %v2161 = vxor.u32 %v2159, 2147483648
  %v2162 = vmul.f32 %v2160, 1.442695
  %v2163 = vpow.pop %v2162
  %v2164 = vmul.f32 %v2161, 1.442695
  %v2165 = vpow.pop %v2164
  %v2166 = vadd.f32 %v2163, 1.0
  %v2167 = vadd.f32 %v2165, 1.0
  %v2168 = vrcp.pop %v2166
  %v2169 = vmul.f32 1.0, %v2168
  %v2170 = vrcp.pop %v2167
  %v2171 = vmul.f32 1.0, %v2170
  %v2172 = vtanh.pop %v2158
  %v2173 = vtanh.pop %v2159
  %v2174 = vmul.f32 %v2169, %v2093
  %v2175 = vmul.f32 %v2171, %v2094
  %2178 = vrot.lane.b32.xlu0 %v2172, 64
  %v2179 = vpop.permute.xlu0 %2178
  %2180 = vrot.lane.b32.xlu0 %v2173, 64
  %v2181 = vpop.permute.xlu0 %2180
  %v2184 = vmul.f32 %v2169, %v2179
  %v2185 = vmul.f32 %v2171, %v2181
  %2188 = vrot.lane.b32.xlu0 %v2184, 32
  %v2189 = vpop.permute.xlu0 %2188
  %2190 = vrot.lane.b32.xlu0 %v2185, 32
  %v2191 = vpop.permute.xlu0 %2190
  %v2194 = vadd.f32 %v2174, %v2189
  %v2195 = vadd.f32 %v2175, %v2191
  %v2196 = vtanh.pop %v2194
  %v2197 = vtanh.pop %v2195
  %2200 = vrot.lane.b32.xlu0 %v2196, 64
  %v2201 = vpop.permute.xlu0 %2200
  %2202 = vrot.lane.b32.xlu0 %v2197, 64
  %v2203 = vpop.permute.xlu0 %2202
  %v2206 = vmul.f32 %v2169, %v2201
  %v2207 = vmul.f32 %v2171, %v2203
  %s2208 = scalar_lea.vmem [#allocation2], 272
  %v2209 = vld [vmem:[%s2208] sm:$0xff]
  %v2210 = vld [vmem:[%s2208 + $0x8] sm:$0xff]
  %v2211 = vpack.c.bf16 %v2207, %v2206
  %2213 = vrot.lane.b32.xlu0 %v2211, 32
  %v2214 = vpop.permute.xlu0 %2213
  %v2216 = vsel %vm497, %v2214, 0
  %2218 = vmatprep.subr.bf16.mxu0 0
  %2219 = vmatpush1.bf16.msra.mxu0 %v493
  %2220 = vmatprep.subr.bf16.mxu0 0
  %2221 = vmatpush1.bf16.msra.mxu0 %v494
  %2222 = vmatprep.subr.bf16.mxu0 0
  %2223 = vmatpush1.bf16.msra.mxu0 0
  %2224 = vmatprep.subr.bf16.mxu0 0
  %2225 = vmatpush1.bf16.msra.mxu0 0
  %2226 = vmatprep.subr.bf16.mxu0 0
  %2227 = vmatpush1.bf16.msra.mxu0 0
  %2228 = vmatprep.subr.bf16.mxu0 0
  %2229 = vmatpush1.bf16.msra.mxu0 0
  %2230 = vmatprep.subr.bf16.mxu0 0
  %2231 = vmatpush1.bf16.msra.mxu0 0
  %2232 = vmatprep.subr.bf16.mxu0 0
  %2233 = vmatpush1.bf16.msra.mxu0 0
  %2234 = vmatprep.subr.bf16.mxu0 0
  %2235 = vmatpush1.bf16.msra.mxu0 0
  %2236 = vmatprep.subr.bf16.mxu0 0
  %2237 = vmatpush1.bf16.msra.mxu0 0
  %2238 = vmatprep.subr.bf16.mxu0 0
  %2239 = vmatpush1.bf16.msra.mxu0 0
  %2240 = vmatprep.subr.bf16.mxu0 0
  %2241 = vmatpush1.bf16.msra.mxu0 0
  %2242 = vmatprep.subr.bf16.mxu0 0
  %2243 = vmatpush1.bf16.msra.mxu0 0
  %2244 = vmatprep.subr.bf16.mxu0 0
  %2245 = vmatpush1.bf16.msra.mxu0 0
  %2246 = vmatprep.subr.bf16.mxu0 0
  %2247 = vmatpush1.bf16.msra.mxu0 0
  %2248 = vmatprep.subr.bf16.mxu0 0
  %2249 = vmatpush1.bf16.msra.mxu0 0
  %2250 = vmatprep.mubr.bf16.mxu0 0
  %2251 = vmatmul.mubr.bf16.gmra.mrb[0].mxu0 %v2216
  %v2252 = vpop.f32.mrb[0].mxu0
  %v2253 = vadd.f32 0.0, %v2252
  %v2254 = vpop.f32.mrb[0].mxu0
  %v2255 = vpop.f32.mrb[0].mxu0
  %v2256 = vadd.f32 0.0, %v2255
  %v2257 = vpop.f32.mrb[0].mxu0
  %2258 = vdwg.mxu0
  %v2259 = vadd.f32 %v2209, %v2253
  %v2260 = vadd.f32 %v2210, %v2256
  %v2261 = vxor.u32 %v2259, 2147483648
  %v2262 = vxor.u32 %v2260, 2147483648
  %v2263 = vmul.f32 %v2261, 1.442695
  %v2264 = vpow.pop %v2263
  %v2265 = vmul.f32 %v2262, 1.442695
  %v2266 = vpow.pop %v2265
  %v2267 = vadd.f32 %v2264, 1.0
  %v2268 = vadd.f32 %v2266, 1.0
  %v2269 = vrcp.pop %v2267
  %v2270 = vmul.f32 1.0, %v2269
  %v2271 = vrcp.pop %v2268
  %v2272 = vmul.f32 1.0, %v2271
  %v2273 = vtanh.pop %v2259
  %v2274 = vtanh.pop %v2260
  %v2275 = vmul.f32 %v2270, %v2194
  %v2276 = vmul.f32 %v2272, %v2195
  %2279 = vrot.lane.b32.xlu0 %v2273, 64
  %v2280 = vpop.permute.xlu0 %2279
  %2281 = vrot.lane.b32.xlu0 %v2274, 64
  %v2282 = vpop.permute.xlu0 %2281
  %v2285 = vmul.f32 %v2270, %v2280
  %v2286 = vmul.f32 %v2272, %v2282
  %2289 = vrot.lane.b32.xlu0 %v2285, 32
  %v2290 = vpop.permute.xlu0 %2289
  %2291 = vrot.lane.b32.xlu0 %v2286, 32
  %v2292 = vpop.permute.xlu0 %2291
  %v2295 = vadd.f32 %v2275, %v2290
  %v2296 = vadd.f32 %v2276, %v2292
  %v2297 = vtanh.pop %v2295
  %v2298 = vtanh.pop %v2296
  %2301 = vrot.lane.b32.xlu0 %v2297, 64
  %v2302 = vpop.permute.xlu0 %2301
  %2303 = vrot.lane.b32.xlu0 %v2298, 64
  %v2304 = vpop.permute.xlu0 %2303
  %v2307 = vmul.f32 %v2270, %v2302
  %v2308 = vmul.f32 %v2272, %v2304
  %s2309 = scalar_lea.vmem [#allocation2], 288
  %v2310 = vld [vmem:[%s2309] sm:$0xff]
  %v2311 = vld [vmem:[%s2309 + $0x8] sm:$0xff]
  %v2312 = vpack.c.bf16 %v2308, %v2307
  %2314 = vrot.lane.b32.xlu0 %v2312, 32
  %v2315 = vpop.permute.xlu0 %2314
  %v2317 = vsel %vm497, %v2315, 0
  %2319 = vmatprep.subr.bf16.mxu0 0
  %2320 = vmatpush1.bf16.msra.mxu0 %v493
  %2321 = vmatprep.subr.bf16.mxu0 0
  %2322 = vmatpush1.bf16.msra.mxu0 %v494
  %2323 = vmatprep.subr.bf16.mxu0 0
  %2324 = vmatpush1.bf16.msra.mxu0 0
  %2325 = vmatprep.subr.bf16.mxu0 0
  %2326 = vmatpush1.bf16.msra.mxu0 0
  %2327 = vmatprep.subr.bf16.mxu0 0
  %2328 = vmatpush1.bf16.msra.mxu0 0
  %2329 = vmatprep.subr.bf16.mxu0 0
  %2330 = vmatpush1.bf16.msra.mxu0 0
  %2331 = vmatprep.subr.bf16.mxu0 0
  %2332 = vmatpush1.bf16.msra.mxu0 0
  %2333 = vmatprep.subr.bf16.mxu0 0
  %2334 = vmatpush1.bf16.msra.mxu0 0
  %2335 = vmatprep.subr.bf16.mxu0 0
  %2336 = vmatpush1.bf16.msra.mxu0 0
  %2337 = vmatprep.subr.bf16.mxu0 0
  %2338 = vmatpush1.bf16.msra.mxu0 0
  %2339 = vmatprep.subr.bf16.mxu0 0
  %2340 = vmatpush1.bf16.msra.mxu0 0
  %2341 = vmatprep.subr.bf16.mxu0 0
  %2342 = vmatpush1.bf16.msra.mxu0 0
  %2343 = vmatprep.subr.bf16.mxu0 0
  %2344 = vmatpush1.bf16.msra.mxu0 0
  %2345 = vmatprep.subr.bf16.mxu0 0
  %2346 = vmatpush1.bf16.msra.mxu0 0
  %2347 = vmatprep.subr.bf16.mxu0 0
  %2348 = vmatpush1.bf16.msra.mxu0 0
  %2349 = vmatprep.subr.bf16.mxu0 0
  %2350 = vmatpush1.bf16.msra.mxu0 0
  %2351 = vmatprep.mubr.bf16.mxu0 0
  %2352 = vmatmul.mubr.bf16.gmra.mrb[0].mxu0 %v2317
  %v2353 = vpop.f32.mrb[0].mxu0
  %v2354 = vadd.f32 0.0, %v2353
  %v2355 = vpop.f32.mrb[0].mxu0
  %v2356 = vpop.f32.mrb[0].mxu0
  %v2357 = vadd.f32 0.0, %v2356
  %v2358 = vpop.f32.mrb[0].mxu0
  %2359 = vdwg.mxu0
  %v2360 = vadd.f32 %v2310, %v2354
  %v2361 = vadd.f32 %v2311, %v2357
  %v2362 = vxor.u32 %v2360, 2147483648
  %v2363 = vxor.u32 %v2361, 2147483648
  %v2364 = vmul.f32 %v2362, 1.442695
  %v2365 = vpow.pop %v2364
  %v2366 = vmul.f32 %v2363, 1.442695
  %v2367 = vpow.pop %v2366
  %v2368 = vadd.f32 %v2365, 1.0
  %v2369 = vadd.f32 %v2367, 1.0
  %v2370 = vrcp.pop %v2368
  %v2371 = vmul.f32 1.0, %v2370
  %v2372 = vrcp.pop %v2369
  %v2373 = vmul.f32 1.0, %v2372
  %v2374 = vtanh.pop %v2360
  %v2375 = vtanh.pop %v2361
  %v2376 = vmul.f32 %v2371, %v2295
  %v2377 = vmul.f32 %v2373, %v2296
  %2380 = vrot.lane.b32.xlu0 %v2374, 64
  %v2381 = vpop.permute.xlu0 %2380
  %2382 = vrot.lane.b32.xlu0 %v2375, 64
  %v2383 = vpop.permute.xlu0 %2382
  %v2386 = vmul.f32 %v2371, %v2381
  %v2387 = vmul.f32 %v2373, %v2383
  %2390 = vrot.lane.b32.xlu0 %v2386, 32
  %v2391 = vpop.permute.xlu0 %2390
  %2392 = vrot.lane.b32.xlu0 %v2387, 32
  %v2393 = vpop.permute.xlu0 %2392
  %v2396 = vadd.f32 %v2376, %v2391
  %v2397 = vadd.f32 %v2377, %v2393
  %v2398 = vtanh.pop %v2396
  %v2399 = vtanh.pop %v2397
  %2402 = vrot.lane.b32.xlu0 %v2398, 64
  %v2403 = vpop.permute.xlu0 %2402
  %2404 = vrot.lane.b32.xlu0 %v2399, 64
  %v2405 = vpop.permute.xlu0 %2404
  %v2408 = vmul.f32 %v2371, %v2403
  %v2409 = vmul.f32 %v2373, %v2405
  %s2410 = scalar_lea.vmem [#allocation2], 304
  %v2411 = vld [vmem:[%s2410] sm:$0xff]
  %v2412 = vld [vmem:[%s2410 + $0x8] sm:$0xff]
  %v2413 = vpack.c.bf16 %v2409, %v2408
  %2415 = vrot.lane.b32.xlu0 %v2413, 32
  %v2416 = vpop.permute.xlu0 %2415
  %v2418 = vsel %vm497, %v2416, 0
  %2420 = vmatprep.subr.bf16.mxu0 0
  %2421 = vmatpush1.bf16.msra.mxu0 %v493
  %2422 = vmatprep.subr.bf16.mxu0 0
  %2423 = vmatpush1.bf16.msra.mxu0 %v494
  %2424 = vmatprep.subr.bf16.mxu0 0
  %2425 = vmatpush1.bf16.msra.mxu0 0
  %2426 = vmatprep.subr.bf16.mxu0 0
  %2427 = vmatpush1.bf16.msra.mxu0 0
  %2428 = vmatprep.subr.bf16.mxu0 0
  %2429 = vmatpush1.bf16.msra.mxu0 0
  %2430 = vmatprep.subr.bf16.mxu0 0
  %2431 = vmatpush1.bf16.msra.mxu0 0
  %2432 = vmatprep.subr.bf16.mxu0 0
  %2433 = vmatpush1.bf16.msra.mxu0 0
  %2434 = vmatprep.subr.bf16.mxu0 0
  %2435 = vmatpush1.bf16.msra.mxu0 0
  %2436 = vmatprep.subr.bf16.mxu0 0
  %2437 = vmatpush1.bf16.msra.mxu0 0
  %2438 = vmatprep.subr.bf16.mxu0 0
  %2439 = vmatpush1.bf16.msra.mxu0 0
  %2440 = vmatprep.subr.bf16.mxu0 0
  %2441 = vmatpush1.bf16.msra.mxu0 0
  %2442 = vmatprep.subr.bf16.mxu0 0
  %2443 = vmatpush1.bf16.msra.mxu0 0
  %2444 = vmatprep.subr.bf16.mxu0 0
  %2445 = vmatpush1.bf16.msra.mxu0 0
  %2446 = vmatprep.subr.bf16.mxu0 0
  %2447 = vmatpush1.bf16.msra.mxu0 0
  %2448 = vmatprep.subr.bf16.mxu0 0
  %2449 = vmatpush1.bf16.msra.mxu0 0
  %2450 = vmatprep.subr.bf16.mxu0 0
  %2451 = vmatpush1.bf16.msra.mxu0 0
  %2452 = vmatprep.mubr.bf16.mxu0 0
  %2453 = vmatmul.mubr.bf16.gmra.mrb[0].mxu0 %v2418
  %v2454 = vpop.f32.mrb[0].mxu0
  %v2455 = vadd.f32 0.0, %v2454
  %v2456 = vpop.f32.mrb[0].mxu0
  %v2457 = vpop.f32.mrb[0].mxu0
  %v2458 = vadd.f32 0.0, %v2457
  %v2459 = vpop.f32.mrb[0].mxu0
  %2460 = vdwg.mxu0
  %v2461 = vadd.f32 %v2411, %v2455
  %v2462 = vadd.f32 %v2412, %v2458
  %v2463 = vxor.u32 %v2461, 2147483648
  %v2464 = vxor.u32 %v2462, 2147483648
  %v2465 = vmul.f32 %v2463, 1.442695
  %v2466 = vpow.pop %v2465
  %v2467 = vmul.f32 %v2464, 1.442695
  %v2468 = vpow.pop %v2467
  %v2469 = vadd.f32 %v2466, 1.0
  %v2470 = vadd.f32 %v2468, 1.0
  %v2471 = vrcp.pop %v2469
  %v2472 = vmul.f32 1.0, %v2471
  %v2473 = vrcp.pop %v2470
  %v2474 = vmul.f32 1.0, %v2473
  %v2475 = vtanh.pop %v2461
  %v2476 = vtanh.pop %v2462
  %v2477 = vmul.f32 %v2472, %v2396
  %v2478 = vmul.f32 %v2474, %v2397
  %2481 = vrot.lane.b32.xlu0 %v2475, 64
  %v2482 = vpop.permute.xlu0 %2481
  %2483 = vrot.lane.b32.xlu0 %v2476, 64
  %v2484 = vpop.permute.xlu0 %2483
  %v2487 = vmul.f32 %v2472, %v2482
  %v2488 = vmul.f32 %v2474, %v2484
  %2491 = vrot.lane.b32.xlu0 %v2487, 32
  %v2492 = vpop.permute.xlu0 %2491
  %2493 = vrot.lane.b32.xlu0 %v2488, 32
  %v2494 = vpop.permute.xlu0 %2493
  %v2497 = vadd.f32 %v2477, %v2492
  %v2498 = vadd.f32 %v2478, %v2494
  %v2499 = vtanh.pop %v2497
  %v2500 = vtanh.pop %v2498
  %2503 = vrot.lane.b32.xlu0 %v2499, 64
  %v2504 = vpop.permute.xlu0 %2503
  %2505 = vrot.lane.b32.xlu0 %v2500, 64
  %v2506 = vpop.permute.xlu0 %2505
  %v2509 = vmul.f32 %v2472, %v2504
  %v2510 = vmul.f32 %v2474, %v2506
  %v2511 = vpack.c.bf16 %v2510, %v2509
  %v2512 = vld [vmem:[%s4] sm:$0xf]
  %v2513 = vld [vmem:[%s4 + $0x4] sm:$0xf]
  %v2514 = vld [vmem:[%s4 + $0x8] sm:$0xf]
  %v2515 = vld [vmem:[%s4 + $0xc] sm:$0xf]
  %v2516 = vld [vmem:[%s5] sm:$0x1]
  %v2518 = vlaneseq
  %v2519 = vshrl.u32 %v2518, 7
  %v2520 = vsub.s32 0, %v2519
  %v2521 = vrot.slane %v2516, %v2520
  %2524 = vrot.lane.b32.xlu0 %v2511, 32
  %v2525 = vpop.permute.xlu0 %2524
  %v2530 = vunpack.c.l.b16 %v2512
  %v2531 = vunpack.c.l.b16 %v2513
  %v2532 = vunpack.c.l.b16 %v2514
  %v2533 = vunpack.c.l.b16 %v2515
  %v2534 = vpack.c.b16 %v2531, %v2530
  %v2535 = vpack.c.b16 %v2533, %v2532
  %v2539 = vsel %vm497, %v2525, 0
  %2541 = vmatprep.subr.bf16.mxu0 0
  %2542 = vmatpush1.bf16.msra.mxu0 %v2534
  %2543 = vmatprep.subr.bf16.mxu0 0
  %2544 = vmatpush1.bf16.msra.mxu0 %v2535
  %2545 = vmatprep.subr.bf16.mxu0 0
  %2546 = vmatpush1.bf16.msra.mxu0 0
  %2547 = vmatprep.subr.bf16.mxu0 0
  %2548 = vmatpush1.bf16.msra.mxu0 0
  %2549 = vmatprep.subr.bf16.mxu0 0
  %2550 = vmatpush1.bf16.msra.mxu0 0
  %2551 = vmatprep.subr.bf16.mxu0 0
  %2552 = vmatpush1.bf16.msra.mxu0 0
  %2553 = vmatprep.subr.bf16.mxu0 0
  %2554 = vmatpush1.bf16.msra.mxu0 0
  %2555 = vmatprep.subr.bf16.mxu0 0
  %2556 = vmatpush1.bf16.msra.mxu0 0
  %2557 = vmatprep.subr.bf16.mxu0 0
  %2558 = vmatpush1.bf16.msra.mxu0 0
  %2559 = vmatprep.subr.bf16.mxu0 0
  %2560 = vmatpush1.bf16.msra.mxu0 0
  %2561 = vmatprep.subr.bf16.mxu0 0
  %2562 = vmatpush1.bf16.msra.mxu0 0
  %2563 = vmatprep.subr.bf16.mxu0 0
  %2564 = vmatpush1.bf16.msra.mxu0 0
  %2565 = vmatprep.subr.bf16.mxu0 0
  %2566 = vmatpush1.bf16.msra.mxu0 0
  %2567 = vmatprep.subr.bf16.mxu0 0
  %2568 = vmatpush1.bf16.msra.mxu0 0
  %2569 = vmatprep.subr.bf16.mxu0 0
  %2570 = vmatpush1.bf16.msra.mxu0 0
  %2571 = vmatprep.subr.bf16.mxu0 0
  %2572 = vmatpush1.bf16.msra.mxu0 0
  %2573 = vmatprep.mubr.bf16.mxu0 0
  %2574 = vmatmul.mubr.bf16.gmra.mrb[0].mxu0 %v2539
  %v2575 = vpop.f32.mrb[0].mxu0
  %v2576 = vadd.f32 %v2521, %v2575
  %v2577 = vpop.f32.mrb[0].mxu0
  %v2578 = vpop.f32.mrb[0].mxu0
  %v2579 = vadd.f32 %v2521, %v2578
  %v2580 = vpop.f32.mrb[0].mxu0
  %2581 = vdwg.mxu0
  %2582 = vmax.xlane.f32.xlu0 %v2576
  %v2583 = vpop.xlane.xlu0 %2582
  %2584 = vmax.xlane.f32.xlu0 %v2579
  %v2585 = vpop.xlane.xlu0 %2584
  %v2586 = vsub.f32 %v2576, %v2583
  %v2587 = vsub.f32 %v2579, %v2585
  %v2588 = vmul.f32 %v2586, 1.442695
  %v2589 = vpow.pop %v2588
  %v2590 = vmul.f32 %v2587, 1.442695
  %v2591 = vpow.pop %v2590
  %2592 = vadd.xlane.f32.xlu0 %v2589
  %v2593 = vpop.xlane.xlu0 %2592
  %2594 = vadd.xlane.f32.xlu0 %v2591
  %v2595 = vpop.xlane.xlu0 %2594
  %v2596 = vlog2.pop %v2593
  %v2597 = vmul.f32 %v2596, 0.6931472
  %v2598 = vlog2.pop %v2595
  %v2599 = vmul.f32 %v2598, 0.6931472
  %v2600 = vsub.f32 %v2586, %v2597
  %v2601 = vsub.f32 %v2587, %v2599
  %v2602 = vld [vmem:[%s6] sm:$0xff]
  %v2603 = vld [vmem:[%s6 + $0x8] sm:$0xff]
  %v2604 = vld [vmem:[%s6 + $0x10] sm:$0xff]
  %v2605 = vld [vmem:[%s6 + $0x18] sm:$0xff]
  %v2606 = vld [vmem:[%s6 + $0x20] sm:$0xff]
  %v2607 = vld [vmem:[%s6 + $0x28] sm:$0xff]
  %v2608 = vld [vmem:[%s6 + $0x30] sm:$0xff]
  %v2609 = vld [vmem:[%s6 + $0x38] sm:$0xff]
  %v2610 = vld [vmem:[%s6 + $0x40] sm:$0xff]
  %v2611 = vld [vmem:[%s6 + $0x48] sm:$0xff]
  %v2612 = vld [vmem:[%s6 + $0x50] sm:$0xff]
  %v2613 = vld [vmem:[%s6 + $0x58] sm:$0xff]
  %v2614 = vld [vmem:[%s6 + $0x60] sm:$0xff]
  %v2615 = vld [vmem:[%s6 + $0x68] sm:$0xff]
  %v2616 = vld [vmem:[%s6 + $0x70] sm:$0xff]
  %v2617 = vld [vmem:[%s6 + $0x78] sm:$0xff]
  %v2618 = vld [vmem:[%s7] sm:$0x1]
  %v2620 = vlaneseq
  %v2621 = vshrl.u32 %v2620, 7
  %v2622 = vsub.s32 0, %v2621
  %v2623 = vrot.slane %v2618, %v2622
  %2625 = vmatprep.subr.mxu0 0.0
  %2626 = vmatpush1.msra.mxu0 %v2602
  %2627 = vmatprep.subr.mxu0 0.0
  %2628 = vmatpush1.msra.mxu0 %v2603
  %2629 = vmatprep.subr.mxu0 0.0
  %2630 = vmatpush1.msra.mxu0 %v2604
  %2631 = vmatprep.subr.mxu0 0.0
  %2632 = vmatpush1.msra.mxu0 %v2605
  %2633 = vmatprep.subr.mxu0 0.0
  %2634 = vmatpush1.msra.mxu0 %v2606
  %2635 = vmatprep.subr.mxu0 0.0
  %2636 = vmatpush1.msra.mxu0 %v2607
  %2637 = vmatprep.subr.mxu0 0.0
  %2638 = vmatpush1.msra.mxu0 %v2608
  %2639 = vmatprep.subr.mxu0 0.0
  %2640 = vmatpush1.msra.mxu0 %v2609
  %2641 = vmatprep.subr.mxu0 0.0
  %2642 = vmatpush1.msra.mxu0 %v2610
  %2643 = vmatprep.subr.mxu0 0.0
  %2644 = vmatpush1.msra.mxu0 %v2611
  %2645 = vmatprep.subr.mxu0 0.0
  %2646 = vmatpush1.msra.mxu0 %v2612
  %2647 = vmatprep.subr.mxu0 0.0
  %2648 = vmatpush1.msra.mxu0 %v2613
  %2649 = vmatprep.subr.mxu0 0.0
  %2650 = vmatpush1.msra.mxu0 %v2614
  %2651 = vmatprep.subr.mxu0 0.0
  %2652 = vmatpush1.msra.mxu0 %v2615
  %2653 = vmatprep.subr.mxu0 0.0
  %2654 = vmatpush1.msra.mxu0 %v2616
  %2655 = vmatprep.subr.mxu0 0.0
  %2656 = vmatpush1.msra.mxu0 %v2617
  %2657 = vmatprep.subr.mxu0 0.0
  %2658 = vmatpush1.msra.mxu0 0.0
  %2659 = vmatprep.subr.mxu0 0.0
  %2660 = vmatpush1.msra.mxu0 0.0
  %2661 = vmatprep.subr.mxu0 0.0
  %2662 = vmatpush1.msra.mxu0 0.0
  %2663 = vmatprep.subr.mxu0 0.0
  %2664 = vmatpush1.msra.mxu0 0.0
  %2665 = vmatprep.subr.mxu0 0.0
  %2666 = vmatpush1.msra.mxu0 0.0
  %2667 = vmatprep.subr.mxu0 0.0
  %2668 = vmatpush1.msra.mxu0 0.0
  %2669 = vmatprep.subr.mxu0 0.0
  %2670 = vmatpush1.msra.mxu0 0.0
  %2671 = vmatprep.subr.mxu0 0.0
  %2672 = vmatpush1.msra.mxu0 0.0
  %2673 = vmatprep.subr.mxu0 0.0
  %2674 = vmatpush1.msra.mxu0 0.0
  %2675 = vmatprep.subr.mxu0 0.0
  %2676 = vmatpush1.msra.mxu0 0.0
  %2677 = vmatprep.subr.mxu0 0.0
  %2678 = vmatpush1.msra.mxu0 0.0
  %2679 = vmatprep.subr.mxu0 0.0
  %2680 = vmatpush1.msra.mxu0 0.0
  %2681 = vmatprep.subr.mxu0 0.0
  %2682 = vmatpush1.msra.mxu0 0.0
  %2683 = vmatprep.subr.mxu0 0.0
  %2684 = vmatpush1.msra.mxu0 0.0
  %2685 = vmatprep.subr.mxu0 0.0
  %2686 = vmatpush1.msra.mxu0 0.0
  %2687 = vmatprep.subr.mxu0 0.0
  %2688 = vmatpush1.msra.mxu0 0.0
  %2689 = vmatprep.mubr.f32.mxu0 0.0
  %2690 = vmatmul.mubr.f32.gmra.mrb[0].mxu0 %v2600
  %v2691 = vpop.f32.mrb[0].mxu0
  %v2692 = vadd.f32 %v2623, %v2691
  %v2693 = vpop.f32.mrb[0].mxu0
  %2694 = vmatprep.mubr.f32.mxu0 0.0
  %2695 = vmatmul.mubr.f32.gmra.mrb[0].mxu0 %v2601
  %v2696 = vpop.f32.mrb[0].mxu0
  %v2697 = vadd.f32 %v2623, %v2696
  %v2698 = vpop.f32.mrb[0].mxu0
  %2699 = vdwg.mxu0
  %2700 = vmax.xlane.f32.xlu0 %v2692
  %v2701 = vpop.xlane.xlu0 %2700
  %2702 = vmax.xlane.f32.xlu0 %v2697
  %v2703 = vpop.xlane.xlu0 %2702
  %v2704 = vsub.f32 %v2692, %v2701
  %v2705 = vsub.f32 %v2697, %v2703
  %v2706 = vmul.f32 %v2704, 1.442695
  %v2707 = vpow.pop %v2706
  %v2708 = vmul.f32 %v2705, 1.442695
  %v2709 = vpow.pop %v2708
  %2710 = vadd.xlane.f32.xlu0 %v2707
  %v2711 = vpop.xlane.xlu0 %2710
  %2712 = vadd.xlane.f32.xlu0 %v2709
  %v2713 = vpop.xlane.xlu0 %2712
  %v2714 = vlog2.pop %v2711
  %v2715 = vmul.f32 %v2714, 0.6931472
  %v2716 = vlog2.pop %v2713
  %v2717 = vmul.f32 %v2716, 0.6931472
  %v2718 = vsub.f32 %v2704, %v2715
  %v2719 = vsub.f32 %v2705, %v2717
  %2720 = vst [vmem:[%s8] sm:$0xff] %v2718
  %2721 = vst [vmem:[%s8 + $0x8] sm:$0xff] %v2719
  // Predicated region
  $region34: #{textrnn_forward.1} parent=0 // pred_check
    _
  $region35: #{textrnn_forward.1} parent=0 // pred_check_branch
    %2723 = sbr.rel (0) target = $region37
  $region36: #{textrnn_forward.1} parent=0 // pred_region
    _
  $region37: #{textrnn_forward.1} parent=0 // pred_fallthru
    _
  // Predicated region
  $region38: #{textrnn_forward.1} parent=0 // pred_check
    _
  $region39: #{textrnn_forward.1} parent=0 // pred_check_branch
    %2725 = sbr.rel (0) target = $region41
  $region40: #{textrnn_forward.1} parent=0 // pred_region
    _
  $region41: #{textrnn_forward.1} parent=0 // pred_fallthru
    _

</llo_original>
